<compile_context>
chip_gen: v7x
topology: tpu7x:2x2x1
jax: 0.10.0
libtpu: 0.0.40
codegen_flags: <defaults>
</compile_context>

<pallas_src>
import functools

import jax
import jax.numpy as jnp
from jax.experimental import pallas as pl
from jax.experimental.pallas import tpu as pltpu

NEG_INF = -1e9
LN_EPS = 1e-5
# Raise the scoped-VMEM limit (v5e defaults to 16 MiB); stays within v7x's
# 64 MiB physical per-TC budget. Tiles below are sized well under this.
VMEM_LIMIT = 64 * 1024 * 1024


def _pick_tile(m, cap=256):
    """Largest tile <= cap (power-of-two-ish, multiple of 8) dividing m."""
    t = cap
    while t >= 8:
        if m >= t and m % t == 0:
            return t
        t //= 2
    return m


# ----------------------------------------------------------------------------
# Fused multi-head attention + residual + LayerNorm kernel
#   grid = (B, Sq // tq), both axes "parallel"
# ----------------------------------------------------------------------------
def _mha_ln_kernel(*refs, heads, causal, has_pad, fuse_qkv, q_tile, scale, eps):
    if has_pad:
        (xq_ref, xkv_ref, pm_ref, wqkv_ref, bqkv_ref, wo_ref, bo_ref,
         g_ref, bt_ref, o_ref, ctx_ref) = refs
    else:
        (xq_ref, xkv_ref, wqkv_ref, bqkv_ref, wo_ref, bo_ref,
         g_ref, bt_ref, o_ref, ctx_ref) = refs
        pm_ref = None

    xq = xq_ref[0]                                   # [tq, D] (bf16 in, usually)
    xq_f = xq.astype(jnp.float32)                    # residual / LN path
    xq_b = xq.astype(jnp.bfloat16)
    xkv_b = xkv_ref[0].astype(jnp.bfloat16)          # [Sk, D]
    tq, D = xq.shape
    Sk = xkv_b.shape[0]
    dh = D // heads

    # ---- projections (bf16 MXU, f32 accumulate) ----
    if fuse_qkv:
        # self-attention, single q tile: one MXU pass with N = 3D
        qkv = jnp.dot(xkv_b, wqkv_ref[...],
                      preferred_element_type=jnp.float32) + bqkv_ref[...]
        q = qkv[:, :D]
        k = qkv[:, D:2 * D]
        v = qkv[:, 2 * D:]
    else:
        q = jnp.dot(xq_b, wqkv_ref[:, :D],
                    preferred_element_type=jnp.float32) + bqkv_ref[:, :D]
        kv = jnp.dot(xkv_b, wqkv_ref[:, D:],
                     preferred_element_type=jnp.float32) + bqkv_ref[:, D:]
        k = kv[:, :D]
        v = kv[:, D:]

    # cast ONCE before the head loop; fold the softmax scale into q
    q_b = (q * scale).astype(jnp.bfloat16)           # [tq, D]
    k_b = k.astype(jnp.bfloat16)                     # [Sk, D]
    v_b = v.astype(jnp.bfloat16)                     # [Sk, D]

    # ---- combined additive bias (computed once, skipped when known-zero) ----
    bias = None
    if has_pad:
        bias = pm_ref[0]                              # [1, Sk], 0 / NEG_INF
    if causal:
        q_start = pl.program_id(1) * q_tile
        row = jax.lax.broadcasted_iota(jnp.int32, (tq, Sk), 0) + q_start
        col = jax.lax.broadcasted_iota(jnp.int32, (tq, Sk), 1)
        cb = jnp.where(row >= col, 0.0, NEG_INF)
        bias = cb if bias is None else bias + cb

    # ---- per-head attention; context written to a VMEM scratch slab ----
    for h in range(heads):
        qh = q_b[:, h * dh:(h + 1) * dh]
        kh = k_b[:, h * dh:(h + 1) * dh]
        vh = v_b[:, h * dh:(h + 1) * dh]
        # contract the last dims directly (no per-head .T / XLU transpose)
        s = jax.lax.dot_general(qh, kh, (((1,), (1,)), ((), ())),
                                preferred_element_type=jnp.float32)   # [tq, Sk]
        if bias is not None:
            s = s + bias
        s = s - jnp.max(s, axis=-1, keepdims=True)
        p = jnp.exp(s)
        p = p * pl.reciprocal(jnp.sum(p, axis=-1, keepdims=True), approx=True)
        ctx_ref[:, h * dh:(h + 1) * dh] = jnp.dot(
            p.astype(jnp.bfloat16), vh, preferred_element_type=jnp.float32)

    # ---- output projection + residual + LayerNorm epilogue ----
    attn = jnp.dot(ctx_ref[...].astype(jnp.bfloat16), wo_ref[...],
                   preferred_element_type=jnp.float32) + bo_ref[...]
    y = xq_f + attn
    mu = jnp.mean(y, axis=-1, keepdims=True)
    var = jnp.mean(jnp.square(y - mu), axis=-1, keepdims=True)
    yn = (y - mu) * jax.lax.rsqrt(var + eps)
    o_ref[0] = (yn * g_ref[...] + bt_ref[...]).astype(o_ref.dtype)


def mha_block(x_q, x_kv, pad_bias, p, ln_g, ln_b, heads, causal, is_self):
    """x_q: [B, Sq, D], x_kv: [B, Sk, D], pad_bias: [B,1,Sk] or None.

    Returns LN(x_q + MHA(x_q, x_kv)) in bf16.
    """
    B, Sq, D = x_q.shape
    Sk = x_kv.shape[1]
    dh = D // heads
    scale = 1.0 / float(dh) ** 0.5

    tq = _pick_tile(Sq, cap=256)
    nq = Sq // tq
    fuse_qkv = is_self and nq == 1
    has_pad = pad_bias is not None

    kernel = functools.partial(
        _mha_ln_kernel, heads=heads, causal=causal, has_pad=has_pad,
        fuse_qkv=fuse_qkv, q_tile=tq, scale=scale, eps=LN_EPS)

    in_specs = [
        pl.BlockSpec((1, tq, D), lambda b, qi: (b, qi, 0)),   # x_q   (streams)
        pl.BlockSpec((1, Sk, D), lambda b, qi: (b, 0, 0)),    # x_kv  (resident/b)
    ]
    args = [x_q, x_kv]
    if has_pad:
        in_specs.append(pl.BlockSpec((1, 1, Sk), lambda b, qi: (b, 0, 0)))
        args.append(pad_bias)
    in_specs += [
        pl.BlockSpec((D, 3 * D), lambda b, qi: (0, 0)),       # wqkv  (resident)
        pl.BlockSpec((1, 3 * D), lambda b, qi: (0, 0)),       # bqkv
        pl.BlockSpec((D, D), lambda b, qi: (0, 0)),           # wo    (resident)
        pl.BlockSpec((1, D), lambda b, qi: (0, 0)),           # bo
        pl.BlockSpec((1, D), lambda b, qi: (0, 0)),           # ln gamma
        pl.BlockSpec((1, D), lambda b, qi: (0, 0)),           # ln beta
    ]
    args += [p["wqkv"], p["bqkv"], p["wo"], p["bo"], ln_g, ln_b]

    cost = pl.CostEstimate(
        flops=int(2 * B * (Sq * D * D + 2 * Sk * D * D      # q / kv projections
                           + 2 * Sq * Sk * D                # QK^T + PV
                           + Sq * D * D)),                   # out projection
        transcendentals=int(B * (heads * Sq * Sk + Sq)),
        bytes_accessed=int(2 * B * (2 * Sq * D + Sk * D + Sk)   # bf16 acts + bias
                           + 2 * 4 * D * D + 4 * 7 * D))        # weights + vecs

    return pl.pallas_call(
        kernel,
        out_shape=jax.ShapeDtypeStruct((B, Sq, D), jnp.bfloat16),
        grid=(B, nq),
        in_specs=in_specs,
        out_specs=pl.BlockSpec((1, tq, D), lambda b, qi: (b, qi, 0)),
        scratch_shapes=[pltpu.VMEM((tq, D), jnp.float32)],    # head-context slab
        compiler_params=pltpu.CompilerParams(
            dimension_semantics=("parallel", "parallel"),
            vmem_limit_bytes=VMEM_LIMIT),
        cost_estimate=cost,
    )(*args)


# ----------------------------------------------------------------------------
# Fused feed-forward + residual + LayerNorm kernel  (tiled over rows)
# ----------------------------------------------------------------------------
def _ffn_ln_kernel(x_ref, w1_ref, b1_ref, w2_ref, b2_ref, g_ref, bt_ref, o_ref,
                   *, eps):
    x = x_ref[...]                                            # [tm, D] (bf16)
    x_f = x.astype(jnp.float32)
    h = jnp.dot(x.astype(jnp.bfloat16), w1_ref[...],
                preferred_element_type=jnp.float32) + b1_ref[...]
    h = jnp.maximum(h, 0.0)                                   # ReLU
    f = jnp.dot(h.astype(jnp.bfloat16), w2_ref[...],
                preferred_element_type=jnp.float32) + b2_ref[...]
    y = x_f + f                                               # residual
    mu = jnp.mean(y, axis=-1, keepdims=True)
    var = jnp.mean(jnp.square(y - mu), axis=-1, keepdims=True)
    o_ref[...] = ((y - mu) * jax.lax.rsqrt(var + eps) * g_ref[...]
                  + bt_ref[...]).astype(o_ref.dtype)


def ffn_ln(x2d, w1, b1, w2, b2, ln_g, ln_b):
    M, D = x2d.shape
    F = w1.shape[1]
    # cap 256: keeps the f32 [tm, F] hidden activation + resident bf16 weights
    # comfortably inside v7x's 64 MiB VMEM while amortizing grid-step overhead.
    tm = _pick_tile(M, cap=256)

    cost = pl.CostEstimate(
        flops=int(4 * M * D * F),
        transcendentals=int(M),
        bytes_accessed=int(2 * 2 * M * D + 2 * 2 * D * F + 4 * (F + 3 * D)))

    return pl.pallas_call(
        functools.partial(_ffn_ln_kernel, eps=LN_EPS),
        out_shape=jax.ShapeDtypeStruct((M, D), jnp.bfloat16),
        grid=(M // tm,),
        in_specs=[
            pl.BlockSpec((tm, D), lambda i: (i, 0)),          # x (streams)
            pl.BlockSpec((D, F), lambda i: (0, 0)),           # w1 (resident)
            pl.BlockSpec((1, F), lambda i: (0, 0)),
            pl.BlockSpec((F, D), lambda i: (0, 0)),           # w2 (resident)
            pl.BlockSpec((1, D), lambda i: (0, 0)),
            pl.BlockSpec((1, D), lambda i: (0, 0)),           # ln gamma
            pl.BlockSpec((1, D), lambda i: (0, 0)),           # ln beta
        ],
        out_specs=pl.BlockSpec((tm, D), lambda i: (i, 0)),
        compiler_params=pltpu.CompilerParams(
            dimension_semantics=("parallel",),
            vmem_limit_bytes=VMEM_LIMIT),
        cost_estimate=cost,
    )(x2d, w1, b1, w2, b2, ln_g, ln_b)


# ----------------------------------------------------------------------------
# Tiled linear kernel (final output projection, f32 out)
# ----------------------------------------------------------------------------
def _linear_kernel(x_ref, w_ref, b_ref, o_ref):
    o_ref[...] = (jnp.dot(x_ref[...].astype(jnp.bfloat16), w_ref[...],
                          preferred_element_type=jnp.float32)
                  + b_ref[...]).astype(o_ref.dtype)


def linear(x2d, w, b):
    M, K = x2d.shape
    N = w.shape[1]
    tm = _pick_tile(M, cap=256)

    cost = pl.CostEstimate(
        flops=int(2 * M * K * N),
        transcendentals=0,
        bytes_accessed=int(2 * M * K + 2 * K * N + 4 * M * N + 4 * N))

    return pl.pallas_call(
        _linear_kernel,
        out_shape=jax.ShapeDtypeStruct((M, N), jnp.float32),
        grid=(M // tm,),
        in_specs=[
            pl.BlockSpec((tm, K), lambda i: (i, 0)),
            pl.BlockSpec((K, N), lambda i: (0, 0)),
            pl.BlockSpec((1, N), lambda i: (0, 0)),
        ],
        out_specs=pl.BlockSpec((tm, N), lambda i: (i, 0)),
        compiler_params=pltpu.CompilerParams(
            dimension_semantics=("parallel",),
            vmem_limit_bytes=VMEM_LIMIT),
        cost_estimate=cost,
    )(x2d, w, b)


# ----------------------------------------------------------------------------
# Model glue (layer composition) in plain JAX
# ----------------------------------------------------------------------------
def encoder_layer(x, p, heads):
    x = mha_block(x, x, None, p["attn"], p["ln1_g"], p["ln1_b"],
                  heads, causal=False, is_self=True)
    B, S, D = x.shape
    f = ffn_ln(x.reshape(B * S, D), p["ff_w1"], p["ff_b1"], p["ff_w2"],
               p["ff_b2"], p["ln2_g"], p["ln2_b"])
    return f.reshape(B, S, D)


def decoder_layer(x, enc_out, p, heads, src_bias):
    x = mha_block(x, x, None, p["self_attn"], p["ln1_g"], p["ln1_b"],
                  heads, causal=True, is_self=True)
    x = mha_block(x, enc_out, src_bias, p["cross_attn"], p["ln2_g"], p["ln2_b"],
                  heads, causal=False, is_self=False)
    B, S, D = x.shape
    f = ffn_ln(x.reshape(B * S, D), p["ff_w1"], p["ff_b1"], p["ff_w2"],
               p["ff_b2"], p["ln3_g"], p["ln3_b"])
    return f.reshape(B, S, D)


def positional_encoding(max_len, d_model):
    pos = jnp.arange(max_len, dtype=jnp.float32)[:, None]
    i = jnp.arange(0, d_model, 2, dtype=jnp.float32)
    angle = pos / jnp.power(10000.0, i / d_model)
    pe = jnp.zeros((max_len, d_model), jnp.float32)
    pe = pe.at[:, 0::2].set(jnp.sin(angle))
    pe = pe.at[:, 1::2].set(jnp.cos(angle))
    return pe


def transformer_forward(params, src, tgt, num_heads, pad=0.0):
    """src: [B, Ss, D], tgt: [B, St, D] -> [B, St, D] f32."""
    B, Ss, D = src.shape
    St = tgt.shape[1]
    pe = params["pe"]

    # ---- sourceMask: pad positions masked out of decoder cross-attention ----
    src_pad = jnp.all(src == pad, axis=-1)                        # [B, Ss]
    src_bias = jnp.where(src_pad, NEG_INF, 0.0)[:, None, :].astype(jnp.float32)

    # ---- encoder (no mask, per reference forward()); bf16 activations ----
    x_e = (src + pe[:Ss][None]).astype(jnp.bfloat16)
    for lp in params["enc_layers"]:
        x_e = encoder_layer(x_e, lp, num_heads)

    # ---- decoder (causal self-attn built in-kernel + cross-attn pad bias) ----
    x_d = (tgt + pe[:St][None]).astype(jnp.bfloat16)
    for lp in params["dec_layers"]:
        x_d = decoder_layer(x_d, x_e, lp, num_heads, src_bias)

    # ---- final output linear (d_model -> d_model, with bias), f32 ----
    out = linear(x_d.reshape(B * St, D), params["out_w"], params["out_b"])
    return out.reshape(B, St, D)


# ----------------------------------------------------------------------------
# Deterministic parameter initialization (fused QKV weights, pre-cast to bf16)
# ----------------------------------------------------------------------------
def _init_w(key, din, dout):
    return jax.random.normal(key, (din, dout), jnp.float32) * 0.02


def _init_mha(key, d):
    ks = jax.random.split(key, 4)
    wq, wk, wv, wo = (_init_w(k, d, d) for k in ks)
    return {
        "wqkv": jnp.concatenate([wq, wk, wv], axis=1).astype(jnp.bfloat16),
        "bqkv": jnp.zeros((1, 3 * d), jnp.float32),
        "wo": wo.astype(jnp.bfloat16),
        "bo": jnp.zeros((1, d), jnp.float32),
    }


def _init_ffn(key, d, f):
    k1, k2 = jax.random.split(key)
    return {
        "ff_w1": _init_w(k1, d, f).astype(jnp.bfloat16),
        "ff_b1": jnp.zeros((1, f), jnp.float32),
        "ff_w2": _init_w(k2, f, d).astype(jnp.bfloat16),
        "ff_b2": jnp.zeros((1, d), jnp.float32),
    }


def _ln_params(d):
    return jnp.ones((1, d), jnp.float32), jnp.zeros((1, d), jnp.float32)


def init_params(key, d_model, layer_size, d_ff, max_length):
    keys = jax.random.split(key, 2 * layer_size + 1)
    params = {"pe": positional_encoding(max_length, d_model)}

    enc_layers = []
    for l in range(layer_size):
        ka, kf = jax.random.split(keys[l])
        layer = {"attn": _init_mha(ka, d_model)}
        layer.update(_init_ffn(kf, d_model, d_ff))
        layer["ln1_g"], layer["ln1_b"] = _ln_params(d_model)
        layer["ln2_g"], layer["ln2_b"] = _ln_params(d_model)
        enc_layers.append(layer)
    params["enc_layers"] = enc_layers

    dec_layers = []
    for l in range(layer_size):
        ks, kc, kf = jax.random.split(keys[layer_size + l], 3)
        layer = {"self_attn": _init_mha(ks, d_model),
                 "cross_attn": _init_mha(kc, d_model)}
        layer.update(_init_ffn(kf, d_model, d_ff))
        layer["ln1_g"], layer["ln1_b"] = _ln_params(d_model)
        layer["ln2_g"], layer["ln2_b"] = _ln_params(d_model)
        layer["ln3_g"], layer["ln3_b"] = _ln_params(d_model)
        dec_layers.append(layer)
    params["dec_layers"] = dec_layers

    params["out_w"] = _init_w(keys[-1], d_model, d_model).astype(jnp.bfloat16)
    params["out_b"] = jnp.zeros((1, d_model), jnp.float32)
    return params


# ----------------------------------------------------------------------------
if __name__ == "__main__":
    # small shapes: batch=2, seq=8, d_model=32, heads=4, layers=2, d_ff=64
    # TODO(synk): for real deployments pad d_model / d_head / d_ff to >=128
    #             (>=256 on v6e/v7x) so MXU / 128-lane vregs are not mostly idle.
    B, S, D = 2, 8, 32
    HEADS, LAYERS, D_FF, MAX_LEN = 4, 2, 64, 64

    key = jax.random.PRNGKey(0)
    k_p, k_s, k_t = jax.random.split(key, 3)
    params = init_params(k_p, D, LAYERS, D_FF, MAX_LEN)

    src = jax.random.normal(k_s, (B, S, D), jnp.float32)
    tgt = jax.random.normal(k_t, (B, S, D), jnp.float32)
    # simulate padded tail positions in the source batch (pad value == 0)
    src = src.at[0, 6:].set(0.0)
    src = src.at[1, 5:].set(0.0)

    fwd = jax.jit(functools.partial(transformer_forward, num_heads=HEADS, pad=0.0))
    out = fwd(params, src, tgt)
    jax.block_until_ready(out)

    assert out.shape == (B, S, D) and out.dtype == jnp.float32
    assert bool(jnp.all(jnp.isfinite(out)))
    print("KERNEL_OK")
</pallas_src>

<mosaic_0001>
module attributes {stable_mosaic.version = 11 : i64} {
  func.func @_mha_ln_kernel(%arg0: i32, %arg1: i32, %arg2: memref<1x8x32xbf16, #tpu.memory_space<vmem>>, %arg3: memref<1x8x32xbf16, #tpu.memory_space<vmem>>, %arg4: memref<32x96xbf16, #tpu.memory_space<vmem>>, %arg5: memref<1x96xf32, #tpu.memory_space<vmem>>, %arg6: memref<32x32xbf16, #tpu.memory_space<vmem>>, %arg7: memref<1x32xf32, #tpu.memory_space<vmem>>, %arg8: memref<1x32xf32, #tpu.memory_space<vmem>>, %arg9: memref<1x32xf32, #tpu.memory_space<vmem>>, %arg10: memref<1x8x32xbf16, #tpu.memory_space<vmem>>, %arg11: memref<8x32xf32, #tpu.memory_space<vmem>>) attributes {dimension_semantics = [#tpu.dimension_semantics<parallel>, #tpu.dimension_semantics<parallel>], iteration_bounds = array<i64: 2, 1>, scalar_prefetch = 0 : i64, scratch_operands = 1 : i64, tpu.core_type = #tpu.core_type<tc>, window_params = [{transform_indices = @transform_0, window_bounds = array<i64: 1, 8, 32>}, {transform_indices = @transform_1, window_bounds = array<i64: 1, 8, 32>}, {pipeline_mode = #tpu.pipeline_mode<synchronous>, transform_indices = @transform_2, window_bounds = array<i64: 32, 96>}, {pipeline_mode = #tpu.pipeline_mode<synchronous>, transform_indices = @transform_3, window_bounds = array<i64: 1, 96>}, {pipeline_mode = #tpu.pipeline_mode<synchronous>, transform_indices = @transform_4, window_bounds = array<i64: 32, 32>}, {pipeline_mode = #tpu.pipeline_mode<synchronous>, transform_indices = @transform_5, window_bounds = array<i64: 1, 32>}, {pipeline_mode = #tpu.pipeline_mode<synchronous>, transform_indices = @transform_6, window_bounds = array<i64: 1, 32>}, {pipeline_mode = #tpu.pipeline_mode<synchronous>, transform_indices = @transform_7, window_bounds = array<i64: 1, 32>}, {transform_indices = @transform_8, window_bounds = array<i64: 1, 8, 32>}]} {
    %c0 = arith.constant 0 : index
    %c0_0 = arith.constant 0 : index
    %c0_1 = arith.constant 0 : index
    %0 = vector.load %arg2[%c0, %c0_0, %c0_1] : memref<1x8x32xbf16, #tpu.memory_space<vmem>>, vector<1x8x32xbf16>
    %1 = vector.shape_cast %0 : vector<1x8x32xbf16> to vector<8x32xbf16>
    %2 = arith.extf %1 : vector<8x32xbf16> to vector<8x32xf32>
    %c0_2 = arith.constant 0 : index
    %c0_3 = arith.constant 0 : index
    %c0_4 = arith.constant 0 : index
    %3 = vector.load %arg3[%c0_2, %c0_3, %c0_4] : memref<1x8x32xbf16, #tpu.memory_space<vmem>>, vector<1x8x32xbf16>
    %4 = vector.shape_cast %3 : vector<1x8x32xbf16> to vector<8x32xbf16>
    %c0_5 = arith.constant 0 : index
    %c0_6 = arith.constant 0 : index
    %5 = vector.load %arg4[%c0_5, %c0_6] : memref<32x96xbf16, #tpu.memory_space<vmem>>, vector<32x96xbf16>
    %cst = arith.constant dense<0.000000e+00> : vector<8x96xf32>
    %6 = tpu.matmul %4, %5, %cst {dimension_numbers = #tpu.dot_dimension_numbers<[1], [0], [0], [1], [0, 0, 1, 1], [], []>} : vector<8x32xbf16>, vector<32x96xbf16>, vector<8x96xf32> -> vector<8x96xf32>
    %c0_7 = arith.constant 0 : index
    %c0_8 = arith.constant 0 : index
    %7 = vector.load %arg5[%c0_7, %c0_8] : memref<1x96xf32, #tpu.memory_space<vmem>>, vector<1x96xf32>
    %8 = vector.broadcast %7 : vector<1x96xf32> to vector<8x96xf32>
    %9 = arith.addf %6, %8 : vector<8x96xf32>
    %10 = vector.extract_strided_slice %9 {offsets = [0, 0], sizes = [8, 32], strides = [1, 1]} : vector<8x96xf32> to vector<8x32xf32>
    %11 = vector.extract_strided_slice %9 {offsets = [0, 32], sizes = [8, 32], strides = [1, 1]} : vector<8x96xf32> to vector<8x32xf32>
    %12 = vector.extract_strided_slice %9 {offsets = [0, 64], sizes = [8, 32], strides = [1, 1]} : vector<8x96xf32> to vector<8x32xf32>
    %cst_9 = arith.constant 0.353553385 : f32
    %13 = vector.broadcast %cst_9 : f32 to vector<8x32xf32>
    %14 = arith.mulf %10, %13 : vector<8x32xf32>
    %15 = arith.truncf %14 : vector<8x32xf32> to vector<8x32xbf16>
    %16 = arith.truncf %11 : vector<8x32xf32> to vector<8x32xbf16>
    %17 = arith.truncf %12 : vector<8x32xf32> to vector<8x32xbf16>
    %18 = vector.extract_strided_slice %15 {offsets = [0, 0], sizes = [8, 8], strides = [1, 1]} : vector<8x32xbf16> to vector<8x8xbf16>
    %19 = vector.extract_strided_slice %16 {offsets = [0, 0], sizes = [8, 8], strides = [1, 1]} : vector<8x32xbf16> to vector<8x8xbf16>
    %20 = vector.extract_strided_slice %17 {offsets = [0, 0], sizes = [8, 8], strides = [1, 1]} : vector<8x32xbf16> to vector<8x8xbf16>
    %cst_10 = arith.constant dense<0.000000e+00> : vector<8x8xf32>
    %21 = tpu.matmul %18, %19, %cst_10 {dimension_numbers = #tpu.dot_dimension_numbers<[1], [1], [0], [0], [0, 0, 1, 0], [], []>} : vector<8x8xbf16>, vector<8x8xbf16>, vector<8x8xf32> -> vector<8x8xf32>
    %cst_11 = arith.constant dense<0xFF800000> : vector<8xf32>
    %22 = vector.multi_reduction <maximumf>, %21, %cst_11 [1] : vector<8x8xf32> to vector<8xf32>
    %23 = vector.shape_cast %22 : vector<8xf32> to vector<8x1xf32>
    %24 = vector.broadcast %23 : vector<8x1xf32> to vector<8x8xf32>
    %25 = arith.subf %21, %24 : vector<8x8xf32>
    %26 = math.exp %25 : vector<8x8xf32>
    %cst_12 = arith.constant dense<0.000000e+00> : vector<8xf32>
    %27 = vector.multi_reduction <add>, %26, %cst_12 [1] : vector<8x8xf32> to vector<8xf32>
    %28 = vector.shape_cast %27 : vector<8xf32> to vector<8x1xf32>
    %29 = tpu.reciprocal %28 {approx = true} : vector<8x1xf32> -> vector<8x1xf32>
    %30 = vector.broadcast %29 : vector<8x1xf32> to vector<8x8xf32>
    %31 = arith.mulf %26, %30 : vector<8x8xf32>
    %32 = arith.truncf %31 : vector<8x8xf32> to vector<8x8xbf16>
    %cst_13 = arith.constant dense<0.000000e+00> : vector<8x8xf32>
    %33 = tpu.matmul %32, %20, %cst_13 {dimension_numbers = #tpu.dot_dimension_numbers<[1], [0], [0], [1], [0, 0, 1, 1], [], []>} : vector<8x8xbf16>, vector<8x8xbf16>, vector<8x8xf32> -> vector<8x8xf32>
    %c0_14 = arith.constant 0 : index
    %c0_15 = arith.constant 0 : index
    %34 = vector.load %arg11[%c0_14, %c0_15] : memref<8x32xf32, #tpu.memory_space<vmem>>, vector<8x8xf32>
    tpu.vector_store %arg11[%c0_14, %c0_15], %33 {strides = array<i32>} : memref<8x32xf32, #tpu.memory_space<vmem>>, vector<8x8xf32>,
    %35 = vector.extract_strided_slice %15 {offsets = [0, 8], sizes = [8, 8], strides = [1, 1]} : vector<8x32xbf16> to vector<8x8xbf16>
    %36 = vector.extract_strided_slice %16 {offsets = [0, 8], sizes = [8, 8], strides = [1, 1]} : vector<8x32xbf16> to vector<8x8xbf16>
    %37 = vector.extract_strided_slice %17 {offsets = [0, 8], sizes = [8, 8], strides = [1, 1]} : vector<8x32xbf16> to vector<8x8xbf16>
    %cst_16 = arith.constant dense<0.000000e+00> : vector<8x8xf32>
    %38 = tpu.matmul %35, %36, %cst_16 {dimension_numbers = #tpu.dot_dimension_numbers<[1], [1], [0], [0], [0, 0, 1, 0], [], []>} : vector<8x8xbf16>, vector<8x8xbf16>, vector<8x8xf32> -> vector<8x8xf32>
    %cst_17 = arith.constant dense<0xFF800000> : vector<8xf32>
    %39 = vector.multi_reduction <maximumf>, %38, %cst_17 [1] : vector<8x8xf32> to vector<8xf32>
    %40 = vector.shape_cast %39 : vector<8xf32> to vector<8x1xf32>
    %41 = vector.broadcast %40 : vector<8x1xf32> to vector<8x8xf32>
    %42 = arith.subf %38, %41 : vector<8x8xf32>
    %43 = math.exp %42 : vector<8x8xf32>
    %cst_18 = arith.constant dense<0.000000e+00> : vector<8xf32>
    %44 = vector.multi_reduction <add>, %43, %cst_18 [1] : vector<8x8xf32> to vector<8xf32>
    %45 = vector.shape_cast %44 : vector<8xf32> to vector<8x1xf32>
    %46 = tpu.reciprocal %45 {approx = true} : vector<8x1xf32> -> vector<8x1xf32>
    %47 = vector.broadcast %46 : vector<8x1xf32> to vector<8x8xf32>
    %48 = arith.mulf %43, %47 : vector<8x8xf32>
    %49 = arith.truncf %48 : vector<8x8xf32> to vector<8x8xbf16>
    %cst_19 = arith.constant dense<0.000000e+00> : vector<8x8xf32>
    %50 = tpu.matmul %49, %37, %cst_19 {dimension_numbers = #tpu.dot_dimension_numbers<[1], [0], [0], [1], [0, 0, 1, 1], [], []>} : vector<8x8xbf16>, vector<8x8xbf16>, vector<8x8xf32> -> vector<8x8xf32>
    %c0_20 = arith.constant 0 : index
    %c8 = arith.constant 8 : index
    %51 = vector.load %arg11[%c0_20, %c8] : memref<8x32xf32, #tpu.memory_space<vmem>>, vector<8x8xf32>
    tpu.vector_store %arg11[%c0_20, %c8], %50 {strides = array<i32>} : memref<8x32xf32, #tpu.memory_space<vmem>>, vector<8x8xf32>,
    %52 = vector.extract_strided_slice %15 {offsets = [0, 16], sizes = [8, 8], strides = [1, 1]} : vector<8x32xbf16> to vector<8x8xbf16>
    %53 = vector.extract_strided_slice %16 {offsets = [0, 16], sizes = [8, 8], strides = [1, 1]} : vector<8x32xbf16> to vector<8x8xbf16>
    %54 = vector.extract_strided_slice %17 {offsets = [0, 16], sizes = [8, 8], strides = [1, 1]} : vector<8x32xbf16> to vector<8x8xbf16>
    %cst_21 = arith.constant dense<0.000000e+00> : vector<8x8xf32>
    %55 = tpu.matmul %52, %53, %cst_21 {dimension_numbers = #tpu.dot_dimension_numbers<[1], [1], [0], [0], [0, 0, 1, 0], [], []>} : vector<8x8xbf16>, vector<8x8xbf16>, vector<8x8xf32> -> vector<8x8xf32>
    %cst_22 = arith.constant dense<0xFF800000> : vector<8xf32>
    %56 = vector.multi_reduction <maximumf>, %55, %cst_22 [1] : vector<8x8xf32> to vector<8xf32>
    %57 = vector.shape_cast %56 : vector<8xf32> to vector<8x1xf32>
    %58 = vector.broadcast %57 : vector<8x1xf32> to vector<8x8xf32>
    %59 = arith.subf %55, %58 : vector<8x8xf32>
    %60 = math.exp %59 : vector<8x8xf32>
    %cst_23 = arith.constant dense<0.000000e+00> : vector<8xf32>
    %61 = vector.multi_reduction <add>, %60, %cst_23 [1] : vector<8x8xf32> to vector<8xf32>
    %62 = vector.shape_cast %61 : vector<8xf32> to vector<8x1xf32>
    %63 = tpu.reciprocal %62 {approx = true} : vector<8x1xf32> -> vector<8x1xf32>
    %64 = vector.broadcast %63 : vector<8x1xf32> to vector<8x8xf32>
    %65 = arith.mulf %60, %64 : vector<8x8xf32>
    %66 = arith.truncf %65 : vector<8x8xf32> to vector<8x8xbf16>
    %cst_24 = arith.constant dense<0.000000e+00> : vector<8x8xf32>
    %67 = tpu.matmul %66, %54, %cst_24 {dimension_numbers = #tpu.dot_dimension_numbers<[1], [0], [0], [1], [0, 0, 1, 1], [], []>} : vector<8x8xbf16>, vector<8x8xbf16>, vector<8x8xf32> -> vector<8x8xf32>
    %c0_25 = arith.constant 0 : index
    %c16 = arith.constant 16 : index
    %68 = vector.load %arg11[%c0_25, %c16] : memref<8x32xf32, #tpu.memory_space<vmem>>, vector<8x8xf32>
    tpu.vector_store %arg11[%c0_25, %c16], %67 {strides = array<i32>} : memref<8x32xf32, #tpu.memory_space<vmem>>, vector<8x8xf32>,
    %69 = vector.extract_strided_slice %15 {offsets = [0, 24], sizes = [8, 8], strides = [1, 1]} : vector<8x32xbf16> to vector<8x8xbf16>
    %70 = vector.extract_strided_slice %16 {offsets = [0, 24], sizes = [8, 8], strides = [1, 1]} : vector<8x32xbf16> to vector<8x8xbf16>
    %71 = vector.extract_strided_slice %17 {offsets = [0, 24], sizes = [8, 8], strides = [1, 1]} : vector<8x32xbf16> to vector<8x8xbf16>
    %cst_26 = arith.constant dense<0.000000e+00> : vector<8x8xf32>
    %72 = tpu.matmul %69, %70, %cst_26 {dimension_numbers = #tpu.dot_dimension_numbers<[1], [1], [0], [0], [0, 0, 1, 0], [], []>} : vector<8x8xbf16>, vector<8x8xbf16>, vector<8x8xf32> -> vector<8x8xf32>
    %cst_27 = arith.constant dense<0xFF800000> : vector<8xf32>
    %73 = vector.multi_reduction <maximumf>, %72, %cst_27 [1] : vector<8x8xf32> to vector<8xf32>
    %74 = vector.shape_cast %73 : vector<8xf32> to vector<8x1xf32>
    %75 = vector.broadcast %74 : vector<8x1xf32> to vector<8x8xf32>
    %76 = arith.subf %72, %75 : vector<8x8xf32>
    %77 = math.exp %76 : vector<8x8xf32>
    %cst_28 = arith.constant dense<0.000000e+00> : vector<8xf32>
    %78 = vector.multi_reduction <add>, %77, %cst_28 [1] : vector<8x8xf32> to vector<8xf32>
    %79 = vector.shape_cast %78 : vector<8xf32> to vector<8x1xf32>
    %80 = tpu.reciprocal %79 {approx = true} : vector<8x1xf32> -> vector<8x1xf32>
    %81 = vector.broadcast %80 : vector<8x1xf32> to vector<8x8xf32>
    %82 = arith.mulf %77, %81 : vector<8x8xf32>
    %83 = arith.truncf %82 : vector<8x8xf32> to vector<8x8xbf16>
    %cst_29 = arith.constant dense<0.000000e+00> : vector<8x8xf32>
    %84 = tpu.matmul %83, %71, %cst_29 {dimension_numbers = #tpu.dot_dimension_numbers<[1], [0], [0], [1], [0, 0, 1, 1], [], []>} : vector<8x8xbf16>, vector<8x8xbf16>, vector<8x8xf32> -> vector<8x8xf32>
    %c0_30 = arith.constant 0 : index
    %c24 = arith.constant 24 : index
    %85 = vector.load %arg11[%c0_30, %c24] : memref<8x32xf32, #tpu.memory_space<vmem>>, vector<8x8xf32>
    tpu.vector_store %arg11[%c0_30, %c24], %84 {strides = array<i32>} : memref<8x32xf32, #tpu.memory_space<vmem>>, vector<8x8xf32>,
    %c0_31 = arith.constant 0 : index
    %c0_32 = arith.constant 0 : index
    %86 = vector.load %arg11[%c0_31, %c0_32] : memref<8x32xf32, #tpu.memory_space<vmem>>, vector<8x32xf32>
    %87 = arith.truncf %86 : vector<8x32xf32> to vector<8x32xbf16>
    %c0_33 = arith.constant 0 : index
    %c0_34 = arith.constant 0 : index
    %88 = vector.load %arg6[%c0_33, %c0_34] : memref<32x32xbf16, #tpu.memory_space<vmem>>, vector<32x32xbf16>
    %cst_35 = arith.constant dense<0.000000e+00> : vector<8x32xf32>
    %89 = tpu.matmul %87, %88, %cst_35 {dimension_numbers = #tpu.dot_dimension_numbers<[1], [0], [0], [1], [0, 0, 1, 1], [], []>} : vector<8x32xbf16>, vector<32x32xbf16>, vector<8x32xf32> -> vector<8x32xf32>
    %c0_36 = arith.constant 0 : index
    %c0_37 = arith.constant 0 : index
    %90 = vector.load %arg7[%c0_36, %c0_37] : memref<1x32xf32, #tpu.memory_space<vmem>>, vector<1x32xf32>
    %91 = vector.broadcast %90 : vector<1x32xf32> to vector<8x32xf32>
    %92 = arith.addf %89, %91 : vector<8x32xf32>
    %93 = arith.addf %2, %92 : vector<8x32xf32>
    %cst_38 = arith.constant dense<0.000000e+00> : vector<8xf32>
    %94 = vector.multi_reduction <add>, %93, %cst_38 [1] : vector<8x32xf32> to vector<8xf32>
    %95 = vector.shape_cast %94 : vector<8xf32> to vector<8x1xf32>
    %cst_39 = arith.constant 3.200000e+01 : f32
    %96 = vector.broadcast %cst_39 : f32 to vector<8x1xf32>
    %97 = arith.divf %95, %96 : vector<8x1xf32>
    %98 = vector.broadcast %97 : vector<8x1xf32> to vector<8x32xf32>
    %99 = arith.subf %93, %98 : vector<8x32xf32>
    %100 = arith.mulf %99, %99 : vector<8x32xf32>
    %cst_40 = arith.constant dense<0.000000e+00> : vector<8xf32>
    %101 = vector.multi_reduction <add>, %100, %cst_40 [1] : vector<8x32xf32> to vector<8xf32>
    %102 = vector.shape_cast %101 : vector<8xf32> to vector<8x1xf32>
    %cst_41 = arith.constant 3.200000e+01 : f32
    %103 = vector.broadcast %cst_41 : f32 to vector<8x1xf32>
    %104 = arith.divf %102, %103 : vector<8x1xf32>
    %105 = vector.broadcast %97 : vector<8x1xf32> to vector<8x32xf32>
    %106 = arith.subf %93, %105 : vector<8x32xf32>
    %cst_42 = arith.constant 9.99999974E-6 : f32
    %107 = vector.broadcast %cst_42 : f32 to vector<8x1xf32>
    %108 = arith.addf %104, %107 : vector<8x1xf32>
    %109 = math.rsqrt %108 : vector<8x1xf32>
    %110 = vector.broadcast %109 : vector<8x1xf32> to vector<8x32xf32>
    %111 = arith.mulf %106, %110 : vector<8x32xf32>
    %c0_43 = arith.constant 0 : index
    %c0_44 = arith.constant 0 : index
    %112 = vector.load %arg8[%c0_43, %c0_44] : memref<1x32xf32, #tpu.memory_space<vmem>>, vector<1x32xf32>
    %113 = vector.broadcast %112 : vector<1x32xf32> to vector<8x32xf32>
    %114 = arith.mulf %111, %113 : vector<8x32xf32>
    %c0_45 = arith.constant 0 : index
    %c0_46 = arith.constant 0 : index
    %115 = vector.load %arg9[%c0_45, %c0_46] : memref<1x32xf32, #tpu.memory_space<vmem>>, vector<1x32xf32>
    %116 = vector.broadcast %115 : vector<1x32xf32> to vector<8x32xf32>
    %117 = arith.addf %114, %116 : vector<8x32xf32>
    %118 = arith.truncf %117 : vector<8x32xf32> to vector<8x32xbf16>
    %c0_47 = arith.constant 0 : index
    %c0_48 = arith.constant 0 : index
    %c0_49 = arith.constant 0 : index
    %119 = vector.load %arg10[%c0_47, %c0_48, %c0_49] : memref<1x8x32xbf16, #tpu.memory_space<vmem>>, vector<1x8x32xbf16>
    %120 = vector.shape_cast %119 : vector<1x8x32xbf16> to vector<8x32xbf16>
    %121 = vector.shape_cast %118 : vector<8x32xbf16> to vector<1x8x32xbf16>
    tpu.vector_store %arg10[%c0_47, %c0_48, %c0_49], %121 {strides = array<i32>} : memref<1x8x32xbf16, #tpu.memory_space<vmem>>, vector<1x8x32xbf16>,
    return
  }
  func.func @transform_0(%arg0: i32, %arg1: i32) -> (i32, i32, i32) {
    %c0_i32 = arith.constant 0 : i32
    %c0_i32_0 = arith.constant 0 : i32
    return %arg0, %arg1, %c0_i32 : i32, i32, i32
  }
  func.func @transform_1(%arg0: i32, %arg1: i32) -> (i32, i32, i32) {
    %c0_i32 = arith.constant 0 : i32
    %c0_i32_0 = arith.constant 0 : i32
    %c0_i32_1 = arith.constant 0 : i32
    return %arg0, %c0_i32, %c0_i32_0 : i32, i32, i32
  }
  func.func @transform_2(%arg0: i32, %arg1: i32) -> (i32, i32) {
    %c0_i32 = arith.constant 0 : i32
    %c0_i32_0 = arith.constant 0 : i32
    %c0_i32_1 = arith.constant 0 : i32
    return %c0_i32, %c0_i32_0 : i32, i32
  }
  func.func @transform_3(%arg0: i32, %arg1: i32) -> (i32, i32) {
    %c0_i32 = arith.constant 0 : i32
    %c0_i32_0 = arith.constant 0 : i32
    %c0_i32_1 = arith.constant 0 : i32
    return %c0_i32, %c0_i32_0 : i32, i32
  }
  func.func @transform_4(%arg0: i32, %arg1: i32) -> (i32, i32) {
    %c0_i32 = arith.constant 0 : i32
    %c0_i32_0 = arith.constant 0 : i32
    %c0_i32_1 = arith.constant 0 : i32
    return %c0_i32, %c0_i32_0 : i32, i32
  }
  func.func @transform_5(%arg0: i32, %arg1: i32) -> (i32, i32) {
    %c0_i32 = arith.constant 0 : i32
    %c0_i32_0 = arith.constant 0 : i32
    %c0_i32_1 = arith.constant 0 : i32
    return %c0_i32, %c0_i32_0 : i32, i32
  }
  func.func @transform_6(%arg0: i32, %arg1: i32) -> (i32, i32) {
    %c0_i32 = arith.constant 0 : i32
    %c0_i32_0 = arith.constant 0 : i32
    %c0_i32_1 = arith.constant 0 : i32
    return %c0_i32, %c0_i32_0 : i32, i32
  }
  func.func @transform_7(%arg0: i32, %arg1: i32) -> (i32, i32) {
    %c0_i32 = arith.constant 0 : i32
    %c0_i32_0 = arith.constant 0 : i32
    %c0_i32_1 = arith.constant 0 : i32
    return %c0_i32, %c0_i32_0 : i32, i32
  }
  func.func @transform_8(%arg0: i32, %arg1: i32) -> (i32, i32, i32) {
    %c0_i32 = arith.constant 0 : i32
    %c0_i32_0 = arith.constant 0 : i32
    return %arg0, %arg1, %c0_i32 : i32, i32, i32
  }
}

module attributes {stable_mosaic.version = 11 : i64} {
  func.func @_ffn_ln_kernel(%arg0: i32, %arg1: memref<16x32xbf16, #tpu.memory_space<vmem>>, %arg2: memref<32x64xbf16, #tpu.memory_space<vmem>>, %arg3: memref<1x64xf32, #tpu.memory_space<vmem>>, %arg4: memref<64x32xbf16, #tpu.memory_space<vmem>>, %arg5: memref<1x32xf32, #tpu.memory_space<vmem>>, %arg6: memref<1x32xf32, #tpu.memory_space<vmem>>, %arg7: memref<1x32xf32, #tpu.memory_space<vmem>>, %arg8: memref<16x32xbf16, #tpu.memory_space<vmem>>) attributes {dimension_semantics = [#tpu.dimension_semantics<parallel>], iteration_bounds = array<i64: 1>, scalar_prefetch = 0 : i64, scratch_operands = 0 : i64, tpu.core_type = #tpu.core_type<tc>, window_params = [{transform_indices = @transform_0, window_bounds = array<i64: 16, 32>}, {pipeline_mode = #tpu.pipeline_mode<synchronous>, transform_indices = @transform_1, window_bounds = array<i64: 32, 64>}, {pipeline_mode = #tpu.pipeline_mode<synchronous>, transform_indices = @transform_2, window_bounds = array<i64: 1, 64>}, {pipeline_mode = #tpu.pipeline_mode<synchronous>, transform_indices = @transform_3, window_bounds = array<i64: 64, 32>}, {pipeline_mode = #tpu.pipeline_mode<synchronous>, transform_indices = @transform_4, window_bounds = array<i64: 1, 32>}, {pipeline_mode = #tpu.pipeline_mode<synchronous>, transform_indices = @transform_5, window_bounds = array<i64: 1, 32>}, {pipeline_mode = #tpu.pipeline_mode<synchronous>, transform_indices = @transform_6, window_bounds = array<i64: 1, 32>}, {transform_indices = @transform_7, window_bounds = array<i64: 16, 32>}]} {
    %c0 = arith.constant 0 : index
    %c0_0 = arith.constant 0 : index
    %0 = vector.load %arg1[%c0, %c0_0] : memref<16x32xbf16, #tpu.memory_space<vmem>>, vector<16x32xbf16>
    %1 = arith.extf %0 : vector<16x32xbf16> to vector<16x32xf32>
    %c0_1 = arith.constant 0 : index
    %c0_2 = arith.constant 0 : index
    %2 = vector.load %arg2[%c0_1, %c0_2] : memref<32x64xbf16, #tpu.memory_space<vmem>>, vector<32x64xbf16>
    %cst = arith.constant dense<0.000000e+00> : vector<16x64xf32>
    %3 = tpu.matmul %0, %2, %cst {dimension_numbers = #tpu.dot_dimension_numbers<[1], [0], [0], [1], [0, 0, 1, 1], [], []>} : vector<16x32xbf16>, vector<32x64xbf16>, vector<16x64xf32> -> vector<16x64xf32>
    %c0_3 = arith.constant 0 : index
    %c0_4 = arith.constant 0 : index
    %4 = vector.load %arg3[%c0_3, %c0_4] : memref<1x64xf32, #tpu.memory_space<vmem>>, vector<1x64xf32>
    %5 = vector.broadcast %4 : vector<1x64xf32> to vector<16x64xf32>
    %6 = arith.addf %3, %5 : vector<16x64xf32>
    %cst_5 = arith.constant 0.000000e+00 : f32
    %7 = vector.broadcast %cst_5 : f32 to vector<16x64xf32>
    %8 = arith.maximumf %6, %7 : vector<16x64xf32>
    %9 = arith.truncf %8 : vector<16x64xf32> to vector<16x64xbf16>
    %c0_6 = arith.constant 0 : index
    %c0_7 = arith.constant 0 : index
    %10 = vector.load %arg4[%c0_6, %c0_7] : memref<64x32xbf16, #tpu.memory_space<vmem>>, vector<64x32xbf16>
    %cst_8 = arith.constant dense<0.000000e+00> : vector<16x32xf32>
    %11 = tpu.matmul %9, %10, %cst_8 {dimension_numbers = #tpu.dot_dimension_numbers<[1], [0], [0], [1], [0, 0, 1, 1], [], []>} : vector<16x64xbf16>, vector<64x32xbf16>, vector<16x32xf32> -> vector<16x32xf32>
    %c0_9 = arith.constant 0 : index
    %c0_10 = arith.constant 0 : index
    %12 = vector.load %arg5[%c0_9, %c0_10] : memref<1x32xf32, #tpu.memory_space<vmem>>, vector<1x32xf32>
    %13 = vector.broadcast %12 : vector<1x32xf32> to vector<16x32xf32>
    %14 = arith.addf %11, %13 : vector<16x32xf32>
    %15 = arith.addf %1, %14 : vector<16x32xf32>
    %cst_11 = arith.constant dense<0.000000e+00> : vector<16xf32>
    %16 = vector.multi_reduction <add>, %15, %cst_11 [1] : vector<16x32xf32> to vector<16xf32>
    %17 = vector.shape_cast %16 : vector<16xf32> to vector<16x1xf32>
    %cst_12 = arith.constant 3.200000e+01 : f32
    %18 = vector.broadcast %cst_12 : f32 to vector<16x1xf32>
    %19 = arith.divf %17, %18 : vector<16x1xf32>
    %20 = vector.broadcast %19 : vector<16x1xf32> to vector<16x32xf32>
    %21 = arith.subf %15, %20 : vector<16x32xf32>
    %22 = arith.mulf %21, %21 : vector<16x32xf32>
    %cst_13 = arith.constant dense<0.000000e+00> : vector<16xf32>
    %23 = vector.multi_reduction <add>, %22, %cst_13 [1] : vector<16x32xf32> to vector<16xf32>
    %24 = vector.shape_cast %23 : vector<16xf32> to vector<16x1xf32>
    %cst_14 = arith.constant 3.200000e+01 : f32
    %25 = vector.broadcast %cst_14 : f32 to vector<16x1xf32>
    %26 = arith.divf %24, %25 : vector<16x1xf32>
    %27 = vector.broadcast %19 : vector<16x1xf32> to vector<16x32xf32>
    %28 = arith.subf %15, %27 : vector<16x32xf32>
    %cst_15 = arith.constant 9.99999974E-6 : f32
    %29 = vector.broadcast %cst_15 : f32 to vector<16x1xf32>
    %30 = arith.addf %26, %29 : vector<16x1xf32>
    %31 = math.rsqrt %30 : vector<16x1xf32>
    %32 = vector.broadcast %31 : vector<16x1xf32> to vector<16x32xf32>
    %33 = arith.mulf %28, %32 : vector<16x32xf32>
    %c0_16 = arith.constant 0 : index
    %c0_17 = arith.constant 0 : index
    %34 = vector.load %arg6[%c0_16, %c0_17] : memref<1x32xf32, #tpu.memory_space<vmem>>, vector<1x32xf32>
    %35 = vector.broadcast %34 : vector<1x32xf32> to vector<16x32xf32>
    %36 = arith.mulf %33, %35 : vector<16x32xf32>
    %c0_18 = arith.constant 0 : index
    %c0_19 = arith.constant 0 : index
    %37 = vector.load %arg7[%c0_18, %c0_19] : memref<1x32xf32, #tpu.memory_space<vmem>>, vector<1x32xf32>
    %38 = vector.broadcast %37 : vector<1x32xf32> to vector<16x32xf32>
    %39 = arith.addf %36, %38 : vector<16x32xf32>
    %40 = arith.truncf %39 : vector<16x32xf32> to vector<16x32xbf16>
    %c0_20 = arith.constant 0 : index
    %c0_21 = arith.constant 0 : index
    %41 = vector.load %arg8[%c0_20, %c0_21] : memref<16x32xbf16, #tpu.memory_space<vmem>>, vector<16x32xbf16>
    tpu.vector_store %arg8[%c0_20, %c0_21], %40 {strides = array<i32>} : memref<16x32xbf16, #tpu.memory_space<vmem>>, vector<16x32xbf16>,
    return
  }
  func.func @transform_0(%arg0: i32) -> (i32, i32) {
    %c0_i32 = arith.constant 0 : i32
    %c0_i32_0 = arith.constant 0 : i32
    return %arg0, %c0_i32 : i32, i32
  }
  func.func @transform_1(%arg0: i32) -> (i32, i32) {
    %c0_i32 = arith.constant 0 : i32
    %c0_i32_0 = arith.constant 0 : i32
    %c0_i32_1 = arith.constant 0 : i32
    return %c0_i32, %c0_i32_0 : i32, i32
  }
  func.func @transform_2(%arg0: i32) -> (i32, i32) {
    %c0_i32 = arith.constant 0 : i32
    %c0_i32_0 = arith.constant 0 : i32
    %c0_i32_1 = arith.constant 0 : i32
    return %c0_i32, %c0_i32_0 : i32, i32
  }
  func.func @transform_3(%arg0: i32) -> (i32, i32) {
    %c0_i32 = arith.constant 0 : i32
    %c0_i32_0 = arith.constant 0 : i32
    %c0_i32_1 = arith.constant 0 : i32
    return %c0_i32, %c0_i32_0 : i32, i32
  }
  func.func @transform_4(%arg0: i32) -> (i32, i32) {
    %c0_i32 = arith.constant 0 : i32
    %c0_i32_0 = arith.constant 0 : i32
    %c0_i32_1 = arith.constant 0 : i32
    return %c0_i32, %c0_i32_0 : i32, i32
  }
  func.func @transform_5(%arg0: i32) -> (i32, i32) {
    %c0_i32 = arith.constant 0 : i32
    %c0_i32_0 = arith.constant 0 : i32
    %c0_i32_1 = arith.constant 0 : i32
    return %c0_i32, %c0_i32_0 : i32, i32
  }
  func.func @transform_6(%arg0: i32) -> (i32, i32) {
    %c0_i32 = arith.constant 0 : i32
    %c0_i32_0 = arith.constant 0 : i32
    %c0_i32_1 = arith.constant 0 : i32
    return %c0_i32, %c0_i32_0 : i32, i32
  }
  func.func @transform_7(%arg0: i32) -> (i32, i32) {
    %c0_i32 = arith.constant 0 : i32
    %c0_i32_0 = arith.constant 0 : i32
    return %arg0, %c0_i32 : i32, i32
  }
}

module attributes {stable_mosaic.version = 11 : i64} {
  func.func @_mha_ln_kernel(%arg0: i32, %arg1: i32, %arg2: memref<1x8x32xbf16, #tpu.memory_space<vmem>>, %arg3: memref<1x8x32xbf16, #tpu.memory_space<vmem>>, %arg4: memref<32x96xbf16, #tpu.memory_space<vmem>>, %arg5: memref<1x96xf32, #tpu.memory_space<vmem>>, %arg6: memref<32x32xbf16, #tpu.memory_space<vmem>>, %arg7: memref<1x32xf32, #tpu.memory_space<vmem>>, %arg8: memref<1x32xf32, #tpu.memory_space<vmem>>, %arg9: memref<1x32xf32, #tpu.memory_space<vmem>>, %arg10: memref<1x8x32xbf16, #tpu.memory_space<vmem>>, %arg11: memref<8x32xf32, #tpu.memory_space<vmem>>) attributes {dimension_semantics = [#tpu.dimension_semantics<parallel>, #tpu.dimension_semantics<parallel>], iteration_bounds = array<i64: 2, 1>, scalar_prefetch = 0 : i64, scratch_operands = 1 : i64, tpu.core_type = #tpu.core_type<tc>, window_params = [{transform_indices = @transform_0, window_bounds = array<i64: 1, 8, 32>}, {transform_indices = @transform_1, window_bounds = array<i64: 1, 8, 32>}, {pipeline_mode = #tpu.pipeline_mode<synchronous>, transform_indices = @transform_2, window_bounds = array<i64: 32, 96>}, {pipeline_mode = #tpu.pipeline_mode<synchronous>, transform_indices = @transform_3, window_bounds = array<i64: 1, 96>}, {pipeline_mode = #tpu.pipeline_mode<synchronous>, transform_indices = @transform_4, window_bounds = array<i64: 32, 32>}, {pipeline_mode = #tpu.pipeline_mode<synchronous>, transform_indices = @transform_5, window_bounds = array<i64: 1, 32>}, {pipeline_mode = #tpu.pipeline_mode<synchronous>, transform_indices = @transform_6, window_bounds = array<i64: 1, 32>}, {pipeline_mode = #tpu.pipeline_mode<synchronous>, transform_indices = @transform_7, window_bounds = array<i64: 1, 32>}, {transform_indices = @transform_8, window_bounds = array<i64: 1, 8, 32>}]} {
    %c0 = arith.constant 0 : index
    %c0_0 = arith.constant 0 : index
    %c0_1 = arith.constant 0 : index
    %0 = vector.load %arg2[%c0, %c0_0, %c0_1] : memref<1x8x32xbf16, #tpu.memory_space<vmem>>, vector<1x8x32xbf16>
    %1 = vector.shape_cast %0 : vector<1x8x32xbf16> to vector<8x32xbf16>
    %2 = arith.extf %1 : vector<8x32xbf16> to vector<8x32xf32>
    %c0_2 = arith.constant 0 : index
    %c0_3 = arith.constant 0 : index
    %c0_4 = arith.constant 0 : index
    %3 = vector.load %arg3[%c0_2, %c0_3, %c0_4] : memref<1x8x32xbf16, #tpu.memory_space<vmem>>, vector<1x8x32xbf16>
    %4 = vector.shape_cast %3 : vector<1x8x32xbf16> to vector<8x32xbf16>
    %c0_5 = arith.constant 0 : index
    %c0_6 = arith.constant 0 : index
    %5 = vector.load %arg4[%c0_5, %c0_6] : memref<32x96xbf16, #tpu.memory_space<vmem>>, vector<32x96xbf16>
    %cst = arith.constant dense<0.000000e+00> : vector<8x96xf32>
    %6 = tpu.matmul %4, %5, %cst {dimension_numbers = #tpu.dot_dimension_numbers<[1], [0], [0], [1], [0, 0, 1, 1], [], []>} : vector<8x32xbf16>, vector<32x96xbf16>, vector<8x96xf32> -> vector<8x96xf32>
    %c0_7 = arith.constant 0 : index
    %c0_8 = arith.constant 0 : index
    %7 = vector.load %arg5[%c0_7, %c0_8] : memref<1x96xf32, #tpu.memory_space<vmem>>, vector<1x96xf32>
    %8 = vector.broadcast %7 : vector<1x96xf32> to vector<8x96xf32>
    %9 = arith.addf %6, %8 : vector<8x96xf32>
    %10 = vector.extract_strided_slice %9 {offsets = [0, 0], sizes = [8, 32], strides = [1, 1]} : vector<8x96xf32> to vector<8x32xf32>
    %11 = vector.extract_strided_slice %9 {offsets = [0, 32], sizes = [8, 32], strides = [1, 1]} : vector<8x96xf32> to vector<8x32xf32>
    %12 = vector.extract_strided_slice %9 {offsets = [0, 64], sizes = [8, 32], strides = [1, 1]} : vector<8x96xf32> to vector<8x32xf32>
    %cst_9 = arith.constant 0.353553385 : f32
    %13 = vector.broadcast %cst_9 : f32 to vector<8x32xf32>
    %14 = arith.mulf %10, %13 : vector<8x32xf32>
    %15 = arith.truncf %14 : vector<8x32xf32> to vector<8x32xbf16>
    %16 = arith.truncf %11 : vector<8x32xf32> to vector<8x32xbf16>
    %17 = arith.truncf %12 : vector<8x32xf32> to vector<8x32xbf16>
    %c8_i32 = arith.constant 8 : i32
    %18 = arith.muli %arg1, %c8_i32 : i32
    %19 = tpu.iota {dimensions = array<i32: 0>} : vector<8x8xi32>
    %20 = vector.broadcast %18 : i32 to vector<8x8xi32>
    %21 = arith.addi %19, %20 : vector<8x8xi32>
    %22 = tpu.iota {dimensions = array<i32: 1>} : vector<8x8xi32>
    %23 = arith.cmpi sge, %21, %22 : vector<8x8xi32>
    %cst_10 = arith.constant 0.000000e+00 : f32
    %cst_11 = arith.constant -1.000000e+09 : f32
    %24 = vector.broadcast %cst_10 : f32 to vector<8x8xf32>
    %25 = vector.broadcast %cst_11 : f32 to vector<8x8xf32>
    %26 = arith.select %23, %24, %25 : vector<8x8xi1>, vector<8x8xf32>
    %27 = vector.extract_strided_slice %15 {offsets = [0, 0], sizes = [8, 8], strides = [1, 1]} : vector<8x32xbf16> to vector<8x8xbf16>
    %28 = vector.extract_strided_slice %16 {offsets = [0, 0], sizes = [8, 8], strides = [1, 1]} : vector<8x32xbf16> to vector<8x8xbf16>
    %29 = vector.extract_strided_slice %17 {offsets = [0, 0], sizes = [8, 8], strides = [1, 1]} : vector<8x32xbf16> to vector<8x8xbf16>
    %cst_12 = arith.constant dense<0.000000e+00> : vector<8x8xf32>
    %30 = tpu.matmul %27, %28, %cst_12 {dimension_numbers = #tpu.dot_dimension_numbers<[1], [1], [0], [0], [0, 0, 1, 0], [], []>} : vector<8x8xbf16>, vector<8x8xbf16>, vector<8x8xf32> -> vector<8x8xf32>
    %31 = arith.addf %30, %26 : vector<8x8xf32>
    %cst_13 = arith.constant dense<0xFF800000> : vector<8xf32>
    %32 = vector.multi_reduction <maximumf>, %31, %cst_13 [1] : vector<8x8xf32> to vector<8xf32>
    %33 = vector.shape_cast %32 : vector<8xf32> to vector<8x1xf32>
    %34 = vector.broadcast %33 : vector<8x1xf32> to vector<8x8xf32>
    %35 = arith.subf %31, %34 : vector<8x8xf32>
    %36 = math.exp %35 : vector<8x8xf32>
    %cst_14 = arith.constant dense<0.000000e+00> : vector<8xf32>
    %37 = vector.multi_reduction <add>, %36, %cst_14 [1] : vector<8x8xf32> to vector<8xf32>
    %38 = vector.shape_cast %37 : vector<8xf32> to vector<8x1xf32>
    %39 = tpu.reciprocal %38 {approx = true} : vector<8x1xf32> -> vector<8x1xf32>
    %40 = vector.broadcast %39 : vector<8x1xf32> to vector<8x8xf32>
    %41 = arith.mulf %36, %40 : vector<8x8xf32>
    %42 = arith.truncf %41 : vector<8x8xf32> to vector<8x8xbf16>
    %cst_15 = arith.constant dense<0.000000e+00> : vector<8x8xf32>
    %43 = tpu.matmul %42, %29, %cst_15 {dimension_numbers = #tpu.dot_dimension_numbers<[1], [0], [0], [1], [0, 0, 1, 1], [], []>} : vector<8x8xbf16>, vector<8x8xbf16>, vector<8x8xf32> -> vector<8x8xf32>
    %c0_16 = arith.constant 0 : index
    %c0_17 = arith.constant 0 : index
    %44 = vector.load %arg11[%c0_16, %c0_17] : memref<8x32xf32, #tpu.memory_space<vmem>>, vector<8x8xf32>
    tpu.vector_store %arg11[%c0_16, %c0_17], %43 {strides = array<i32>} : memref<8x32xf32, #tpu.memory_space<vmem>>, vector<8x8xf32>,
    %45 = vector.extract_strided_slice %15 {offsets = [0, 8], sizes = [8, 8], strides = [1, 1]} : vector<8x32xbf16> to vector<8x8xbf16>
    %46 = vector.extract_strided_slice %16 {offsets = [0, 8], sizes = [8, 8], strides = [1, 1]} : vector<8x32xbf16> to vector<8x8xbf16>
    %47 = vector.extract_strided_slice %17 {offsets = [0, 8], sizes = [8, 8], strides = [1, 1]} : vector<8x32xbf16> to vector<8x8xbf16>
    %cst_18 = arith.constant dense<0.000000e+00> : vector<8x8xf32>
    %48 = tpu.matmul %45, %46, %cst_18 {dimension_numbers = #tpu.dot_dimension_numbers<[1], [1], [0], [0], [0, 0, 1, 0], [], []>} : vector<8x8xbf16>, vector<8x8xbf16>, vector<8x8xf32> -> vector<8x8xf32>
    %49 = arith.addf %48, %26 : vector<8x8xf32>
    %cst_19 = arith.constant dense<0xFF800000> : vector<8xf32>
    %50 = vector.multi_reduction <maximumf>, %49, %cst_19 [1] : vector<8x8xf32> to vector<8xf32>
    %51 = vector.shape_cast %50 : vector<8xf32> to vector<8x1xf32>
    %52 = vector.broadcast %51 : vector<8x1xf32> to vector<8x8xf32>
    %53 = arith.subf %49, %52 : vector<8x8xf32>
    %54 = math.exp %53 : vector<8x8xf32>
    %cst_20 = arith.constant dense<0.000000e+00> : vector<8xf32>
    %55 = vector.multi_reduction <add>, %54, %cst_20 [1] : vector<8x8xf32> to vector<8xf32>
    %56 = vector.shape_cast %55 : vector<8xf32> to vector<8x1xf32>
    %57 = tpu.reciprocal %56 {approx = true} : vector<8x1xf32> -> vector<8x1xf32>
    %58 = vector.broadcast %57 : vector<8x1xf32> to vector<8x8xf32>
    %59 = arith.mulf %54, %58 : vector<8x8xf32>
    %60 = arith.truncf %59 : vector<8x8xf32> to vector<8x8xbf16>
    %cst_21 = arith.constant dense<0.000000e+00> : vector<8x8xf32>
    %61 = tpu.matmul %60, %47, %cst_21 {dimension_numbers = #tpu.dot_dimension_numbers<[1], [0], [0], [1], [0, 0, 1, 1], [], []>} : vector<8x8xbf16>, vector<8x8xbf16>, vector<8x8xf32> -> vector<8x8xf32>
    %c0_22 = arith.constant 0 : index
    %c8 = arith.constant 8 : index
    %62 = vector.load %arg11[%c0_22, %c8] : memref<8x32xf32, #tpu.memory_space<vmem>>, vector<8x8xf32>
    tpu.vector_store %arg11[%c0_22, %c8], %61 {strides = array<i32>} : memref<8x32xf32, #tpu.memory_space<vmem>>, vector<8x8xf32>,
    %63 = vector.extract_strided_slice %15 {offsets = [0, 16], sizes = [8, 8], strides = [1, 1]} : vector<8x32xbf16> to vector<8x8xbf16>
    %64 = vector.extract_strided_slice %16 {offsets = [0, 16], sizes = [8, 8], strides = [1, 1]} : vector<8x32xbf16> to vector<8x8xbf16>
    %65 = vector.extract_strided_slice %17 {offsets = [0, 16], sizes = [8, 8], strides = [1, 1]} : vector<8x32xbf16> to vector<8x8xbf16>
    %cst_23 = arith.constant dense<0.000000e+00> : vector<8x8xf32>
    %66 = tpu.matmul %63, %64, %cst_23 {dimension_numbers = #tpu.dot_dimension_numbers<[1], [1], [0], [0], [0, 0, 1, 0], [], []>} : vector<8x8xbf16>, vector<8x8xbf16>, vector<8x8xf32> -> vector<8x8xf32>
    %67 = arith.addf %66, %26 : vector<8x8xf32>
    %cst_24 = arith.constant dense<0xFF800000> : vector<8xf32>
    %68 = vector.multi_reduction <maximumf>, %67, %cst_24 [1] : vector<8x8xf32> to vector<8xf32>
    %69 = vector.shape_cast %68 : vector<8xf32> to vector<8x1xf32>
    %70 = vector.broadcast %69 : vector<8x1xf32> to vector<8x8xf32>
    %71 = arith.subf %67, %70 : vector<8x8xf32>
    %72 = math.exp %71 : vector<8x8xf32>
    %cst_25 = arith.constant dense<0.000000e+00> : vector<8xf32>
    %73 = vector.multi_reduction <add>, %72, %cst_25 [1] : vector<8x8xf32> to vector<8xf32>
    %74 = vector.shape_cast %73 : vector<8xf32> to vector<8x1xf32>
    %75 = tpu.reciprocal %74 {approx = true} : vector<8x1xf32> -> vector<8x1xf32>
    %76 = vector.broadcast %75 : vector<8x1xf32> to vector<8x8xf32>
    %77 = arith.mulf %72, %76 : vector<8x8xf32>
    %78 = arith.truncf %77 : vector<8x8xf32> to vector<8x8xbf16>
    %cst_26 = arith.constant dense<0.000000e+00> : vector<8x8xf32>
    %79 = tpu.matmul %78, %65, %cst_26 {dimension_numbers = #tpu.dot_dimension_numbers<[1], [0], [0], [1], [0, 0, 1, 1], [], []>} : vector<8x8xbf16>, vector<8x8xbf16>, vector<8x8xf32> -> vector<8x8xf32>
    %c0_27 = arith.constant 0 : index
    %c16 = arith.constant 16 : index
    %80 = vector.load %arg11[%c0_27, %c16] : memref<8x32xf32, #tpu.memory_space<vmem>>, vector<8x8xf32>
    tpu.vector_store %arg11[%c0_27, %c16], %79 {strides = array<i32>} : memref<8x32xf32, #tpu.memory_space<vmem>>, vector<8x8xf32>,
    %81 = vector.extract_strided_slice %15 {offsets = [0, 24], sizes = [8, 8], strides = [1, 1]} : vector<8x32xbf16> to vector<8x8xbf16>
    %82 = vector.extract_strided_slice %16 {offsets = [0, 24], sizes = [8, 8], strides = [1, 1]} : vector<8x32xbf16> to vector<8x8xbf16>
    %83 = vector.extract_strided_slice %17 {offsets = [0, 24], sizes = [8, 8], strides = [1, 1]} : vector<8x32xbf16> to vector<8x8xbf16>
    %cst_28 = arith.constant dense<0.000000e+00> : vector<8x8xf32>
    %84 = tpu.matmul %81, %82, %cst_28 {dimension_numbers = #tpu.dot_dimension_numbers<[1], [1], [0], [0], [0, 0, 1, 0], [], []>} : vector<8x8xbf16>, vector<8x8xbf16>, vector<8x8xf32> -> vector<8x8xf32>
    %85 = arith.addf %84, %26 : vector<8x8xf32>
    %cst_29 = arith.constant dense<0xFF800000> : vector<8xf32>
    %86 = vector.multi_reduction <maximumf>, %85, %cst_29 [1] : vector<8x8xf32> to vector<8xf32>
    %87 = vector.shape_cast %86 : vector<8xf32> to vector<8x1xf32>
    %88 = vector.broadcast %87 : vector<8x1xf32> to vector<8x8xf32>
    %89 = arith.subf %85, %88 : vector<8x8xf32>
    %90 = math.exp %89 : vector<8x8xf32>
    %cst_30 = arith.constant dense<0.000000e+00> : vector<8xf32>
    %91 = vector.multi_reduction <add>, %90, %cst_30 [1] : vector<8x8xf32> to vector<8xf32>
    %92 = vector.shape_cast %91 : vector<8xf32> to vector<8x1xf32>
    %93 = tpu.reciprocal %92 {approx = true} : vector<8x1xf32> -> vector<8x1xf32>
    %94 = vector.broadcast %93 : vector<8x1xf32> to vector<8x8xf32>
    %95 = arith.mulf %90, %94 : vector<8x8xf32>
    %96 = arith.truncf %95 : vector<8x8xf32> to vector<8x8xbf16>
    %cst_31 = arith.constant dense<0.000000e+00> : vector<8x8xf32>
    %97 = tpu.matmul %96, %83, %cst_31 {dimension_numbers = #tpu.dot_dimension_numbers<[1], [0], [0], [1], [0, 0, 1, 1], [], []>} : vector<8x8xbf16>, vector<8x8xbf16>, vector<8x8xf32> -> vector<8x8xf32>
    %c0_32 = arith.constant 0 : index
    %c24 = arith.constant 24 : index
    %98 = vector.load %arg11[%c0_32, %c24] : memref<8x32xf32, #tpu.memory_space<vmem>>, vector<8x8xf32>
    tpu.vector_store %arg11[%c0_32, %c24], %97 {strides = array<i32>} : memref<8x32xf32, #tpu.memory_space<vmem>>, vector<8x8xf32>,
    %c0_33 = arith.constant 0 : index
    %c0_34 = arith.constant 0 : index
    %99 = vector.load %arg11[%c0_33, %c0_34] : memref<8x32xf32, #tpu.memory_space<vmem>>, vector<8x32xf32>
    %100 = arith.truncf %99 : vector<8x32xf32> to vector<8x32xbf16>
    %c0_35 = arith.constant 0 : index
    %c0_36 = arith.constant 0 : index
    %101 = vector.load %arg6[%c0_35, %c0_36] : memref<32x32xbf16, #tpu.memory_space<vmem>>, vector<32x32xbf16>
    %cst_37 = arith.constant dense<0.000000e+00> : vector<8x32xf32>
    %102 = tpu.matmul %100, %101, %cst_37 {dimension_numbers = #tpu.dot_dimension_numbers<[1], [0], [0], [1], [0, 0, 1, 1], [], []>} : vector<8x32xbf16>, vector<32x32xbf16>, vector<8x32xf32> -> vector<8x32xf32>
    %c0_38 = arith.constant 0 : index
    %c0_39 = arith.constant 0 : index
    %103 = vector.load %arg7[%c0_38, %c0_39] : memref<1x32xf32, #tpu.memory_space<vmem>>, vector<1x32xf32>
    %104 = vector.broadcast %103 : vector<1x32xf32> to vector<8x32xf32>
    %105 = arith.addf %102, %104 : vector<8x32xf32>
    %106 = arith.addf %2, %105 : vector<8x32xf32>
    %cst_40 = arith.constant dense<0.000000e+00> : vector<8xf32>
    %107 = vector.multi_reduction <add>, %106, %cst_40 [1] : vector<8x32xf32> to vector<8xf32>
    %108 = vector.shape_cast %107 : vector<8xf32> to vector<8x1xf32>
    %cst_41 = arith.constant 3.200000e+01 : f32
    %109 = vector.broadcast %cst_41 : f32 to vector<8x1xf32>
    %110 = arith.divf %108, %109 : vector<8x1xf32>
    %111 = vector.broadcast %110 : vector<8x1xf32> to vector<8x32xf32>
    %112 = arith.subf %106, %111 : vector<8x32xf32>
    %113 = arith.mulf %112, %112 : vector<8x32xf32>
    %cst_42 = arith.constant dense<0.000000e+00> : vector<8xf32>
    %114 = vector.multi_reduction <add>, %113, %cst_42 [1] : vector<8x32xf32> to vector<8xf32>
    %115 = vector.shape_cast %114 : vector<8xf32> to vector<8x1xf32>
    %cst_43 = arith.constant 3.200000e+01 : f32
    %116 = vector.broadcast %cst_43 : f32 to vector<8x1xf32>
    %117 = arith.divf %115, %116 : vector<8x1xf32>
    %118 = vector.broadcast %110 : vector<8x1xf32> to vector<8x32xf32>
    %119 = arith.subf %106, %118 : vector<8x32xf32>
    %cst_44 = arith.constant 9.99999974E-6 : f32
    %120 = vector.broadcast %cst_44 : f32 to vector<8x1xf32>
    %121 = arith.addf %117, %120 : vector<8x1xf32>
    %122 = math.rsqrt %121 : vector<8x1xf32>
    %123 = vector.broadcast %122 : vector<8x1xf32> to vector<8x32xf32>
    %124 = arith.mulf %119, %123 : vector<8x32xf32>
    %c0_45 = arith.constant 0 : index
    %c0_46 = arith.constant 0 : index
    %125 = vector.load %arg8[%c0_45, %c0_46] : memref<1x32xf32, #tpu.memory_space<vmem>>, vector<1x32xf32>
    %126 = vector.broadcast %125 : vector<1x32xf32> to vector<8x32xf32>
    %127 = arith.mulf %124, %126 : vector<8x32xf32>
    %c0_47 = arith.constant 0 : index
    %c0_48 = arith.constant 0 : index
    %128 = vector.load %arg9[%c0_47, %c0_48] : memref<1x32xf32, #tpu.memory_space<vmem>>, vector<1x32xf32>
    %129 = vector.broadcast %128 : vector<1x32xf32> to vector<8x32xf32>
    %130 = arith.addf %127, %129 : vector<8x32xf32>
    %131 = arith.truncf %130 : vector<8x32xf32> to vector<8x32xbf16>
    %c0_49 = arith.constant 0 : index
    %c0_50 = arith.constant 0 : index
    %c0_51 = arith.constant 0 : index
    %132 = vector.load %arg10[%c0_49, %c0_50, %c0_51] : memref<1x8x32xbf16, #tpu.memory_space<vmem>>, vector<1x8x32xbf16>
    %133 = vector.shape_cast %132 : vector<1x8x32xbf16> to vector<8x32xbf16>
    %134 = vector.shape_cast %131 : vector<8x32xbf16> to vector<1x8x32xbf16>
    tpu.vector_store %arg10[%c0_49, %c0_50, %c0_51], %134 {strides = array<i32>} : memref<1x8x32xbf16, #tpu.memory_space<vmem>>, vector<1x8x32xbf16>,
    return
  }
  func.func @transform_0(%arg0: i32, %arg1: i32) -> (i32, i32, i32) {
    %c0_i32 = arith.constant 0 : i32
    %c0_i32_0 = arith.constant 0 : i32
    return %arg0, %arg1, %c0_i32 : i32, i32, i32
  }
  func.func @transform_1(%arg0: i32, %arg1: i32) -> (i32, i32, i32) {
    %c0_i32 = arith.constant 0 : i32
    %c0_i32_0 = arith.constant 0 : i32
    %c0_i32_1 = arith.constant 0 : i32
    return %arg0, %c0_i32, %c0_i32_0 : i32, i32, i32
  }
  func.func @transform_2(%arg0: i32, %arg1: i32) -> (i32, i32) {
    %c0_i32 = arith.constant 0 : i32
    %c0_i32_0 = arith.constant 0 : i32
    %c0_i32_1 = arith.constant 0 : i32
    return %c0_i32, %c0_i32_0 : i32, i32
  }
  func.func @transform_3(%arg0: i32, %arg1: i32) -> (i32, i32) {
    %c0_i32 = arith.constant 0 : i32
    %c0_i32_0 = arith.constant 0 : i32
    %c0_i32_1 = arith.constant 0 : i32
    return %c0_i32, %c0_i32_0 : i32, i32
  }
  func.func @transform_4(%arg0: i32, %arg1: i32) -> (i32, i32) {
    %c0_i32 = arith.constant 0 : i32
    %c0_i32_0 = arith.constant 0 : i32
    %c0_i32_1 = arith.constant 0 : i32
    return %c0_i32, %c0_i32_0 : i32, i32
  }
  func.func @transform_5(%arg0: i32, %arg1: i32) -> (i32, i32) {
    %c0_i32 = arith.constant 0 : i32
    %c0_i32_0 = arith.constant 0 : i32
    %c0_i32_1 = arith.constant 0 : i32
    return %c0_i32, %c0_i32_0 : i32, i32
  }
  func.func @transform_6(%arg0: i32, %arg1: i32) -> (i32, i32) {
    %c0_i32 = arith.constant 0 : i32
    %c0_i32_0 = arith.constant 0 : i32
    %c0_i32_1 = arith.constant 0 : i32
    return %c0_i32, %c0_i32_0 : i32, i32
  }
  func.func @transform_7(%arg0: i32, %arg1: i32) -> (i32, i32) {
    %c0_i32 = arith.constant 0 : i32
    %c0_i32_0 = arith.constant 0 : i32
    %c0_i32_1 = arith.constant 0 : i32
    return %c0_i32, %c0_i32_0 : i32, i32
  }
  func.func @transform_8(%arg0: i32, %arg1: i32) -> (i32, i32, i32) {
    %c0_i32 = arith.constant 0 : i32
    %c0_i32_0 = arith.constant 0 : i32
    return %arg0, %arg1, %c0_i32 : i32, i32, i32
  }
}

module attributes {stable_mosaic.version = 11 : i64} {
  func.func @_mha_ln_kernel(%arg0: i32, %arg1: i32, %arg2: memref<1x8x32xbf16, #tpu.memory_space<vmem>>, %arg3: memref<1x8x32xbf16, #tpu.memory_space<vmem>>, %arg4: memref<1x1x8xf32, #tpu.memory_space<vmem>>, %arg5: memref<32x96xbf16, #tpu.memory_space<vmem>>, %arg6: memref<1x96xf32, #tpu.memory_space<vmem>>, %arg7: memref<32x32xbf16, #tpu.memory_space<vmem>>, %arg8: memref<1x32xf32, #tpu.memory_space<vmem>>, %arg9: memref<1x32xf32, #tpu.memory_space<vmem>>, %arg10: memref<1x32xf32, #tpu.memory_space<vmem>>, %arg11: memref<1x8x32xbf16, #tpu.memory_space<vmem>>, %arg12: memref<8x32xf32, #tpu.memory_space<vmem>>) attributes {dimension_semantics = [#tpu.dimension_semantics<parallel>, #tpu.dimension_semantics<parallel>], iteration_bounds = array<i64: 2, 1>, scalar_prefetch = 0 : i64, scratch_operands = 1 : i64, tpu.core_type = #tpu.core_type<tc>, window_params = [{transform_indices = @transform_0, window_bounds = array<i64: 1, 8, 32>}, {transform_indices = @transform_1, window_bounds = array<i64: 1, 8, 32>}, {transform_indices = @transform_2, window_bounds = array<i64: 1, 1, 8>}, {pipeline_mode = #tpu.pipeline_mode<synchronous>, transform_indices = @transform_3, window_bounds = array<i64: 32, 96>}, {pipeline_mode = #tpu.pipeline_mode<synchronous>, transform_indices = @transform_4, window_bounds = array<i64: 1, 96>}, {pipeline_mode = #tpu.pipeline_mode<synchronous>, transform_indices = @transform_5, window_bounds = array<i64: 32, 32>}, {pipeline_mode = #tpu.pipeline_mode<synchronous>, transform_indices = @transform_6, window_bounds = array<i64: 1, 32>}, {pipeline_mode = #tpu.pipeline_mode<synchronous>, transform_indices = @transform_7, window_bounds = array<i64: 1, 32>}, {pipeline_mode = #tpu.pipeline_mode<synchronous>, transform_indices = @transform_8, window_bounds = array<i64: 1, 32>}, {transform_indices = @transform_9, window_bounds = array<i64: 1, 8, 32>}]} {
    %c0 = arith.constant 0 : index
    %c0_0 = arith.constant 0 : index
    %c0_1 = arith.constant 0 : index
    %0 = vector.load %arg2[%c0, %c0_0, %c0_1] : memref<1x8x32xbf16, #tpu.memory_space<vmem>>, vector<1x8x32xbf16>
    %1 = vector.shape_cast %0 : vector<1x8x32xbf16> to vector<8x32xbf16>
    %2 = arith.extf %1 : vector<8x32xbf16> to vector<8x32xf32>
    %c0_2 = arith.constant 0 : index
    %c0_3 = arith.constant 0 : index
    %c0_4 = arith.constant 0 : index
    %3 = vector.load %arg3[%c0_2, %c0_3, %c0_4] : memref<1x8x32xbf16, #tpu.memory_space<vmem>>, vector<1x8x32xbf16>
    %4 = vector.shape_cast %3 : vector<1x8x32xbf16> to vector<8x32xbf16>
    %c0_5 = arith.constant 0 : index
    %c0_6 = arith.constant 0 : index
    %5 = vector.load %arg5[%c0_5, %c0_6] : memref<32x96xbf16, #tpu.memory_space<vmem>>, vector<32x32xbf16>
    %cst = arith.constant dense<0.000000e+00> : vector<8x32xf32>
    %6 = tpu.matmul %1, %5, %cst {dimension_numbers = #tpu.dot_dimension_numbers<[1], [0], [0], [1], [0, 0, 1, 1], [], []>} : vector<8x32xbf16>, vector<32x32xbf16>, vector<8x32xf32> -> vector<8x32xf32>
    %c0_7 = arith.constant 0 : index
    %c0_8 = arith.constant 0 : index
    %7 = vector.load %arg6[%c0_7, %c0_8] : memref<1x96xf32, #tpu.memory_space<vmem>>, vector<1x32xf32>
    %8 = vector.broadcast %7 : vector<1x32xf32> to vector<8x32xf32>
    %9 = arith.addf %6, %8 : vector<8x32xf32>
    %c0_9 = arith.constant 0 : index
    %c32 = arith.constant 32 : index
    %10 = vector.load %arg5[%c0_9, %c32] : memref<32x96xbf16, #tpu.memory_space<vmem>>, vector<32x64xbf16>
    %cst_10 = arith.constant dense<0.000000e+00> : vector<8x64xf32>
    %11 = tpu.matmul %4, %10, %cst_10 {dimension_numbers = #tpu.dot_dimension_numbers<[1], [0], [0], [1], [0, 0, 1, 1], [], []>} : vector<8x32xbf16>, vector<32x64xbf16>, vector<8x64xf32> -> vector<8x64xf32>
    %c0_11 = arith.constant 0 : index
    %c32_12 = arith.constant 32 : index
    %12 = vector.load %arg6[%c0_11, %c32_12] : memref<1x96xf32, #tpu.memory_space<vmem>>, vector<1x64xf32>
    %13 = vector.broadcast %12 : vector<1x64xf32> to vector<8x64xf32>
    %14 = arith.addf %11, %13 : vector<8x64xf32>
    %15 = vector.extract_strided_slice %14 {offsets = [0, 0], sizes = [8, 32], strides = [1, 1]} : vector<8x64xf32> to vector<8x32xf32>
    %16 = vector.extract_strided_slice %14 {offsets = [0, 32], sizes = [8, 32], strides = [1, 1]} : vector<8x64xf32> to vector<8x32xf32>
    %cst_13 = arith.constant 0.353553385 : f32
    %17 = vector.broadcast %cst_13 : f32 to vector<8x32xf32>
    %18 = arith.mulf %9, %17 : vector<8x32xf32>
    %19 = arith.truncf %18 : vector<8x32xf32> to vector<8x32xbf16>
    %20 = arith.truncf %15 : vector<8x32xf32> to vector<8x32xbf16>
    %21 = arith.truncf %16 : vector<8x32xf32> to vector<8x32xbf16>
    %c0_14 = arith.constant 0 : index
    %c0_15 = arith.constant 0 : index
    %c0_16 = arith.constant 0 : index
    %22 = vector.load %arg4[%c0_14, %c0_15, %c0_16] : memref<1x1x8xf32, #tpu.memory_space<vmem>>, vector<1x1x8xf32>
    %23 = vector.shape_cast %22 : vector<1x1x8xf32> to vector<1x8xf32>
    %24 = vector.extract_strided_slice %19 {offsets = [0, 0], sizes = [8, 8], strides = [1, 1]} : vector<8x32xbf16> to vector<8x8xbf16>
    %25 = vector.extract_strided_slice %20 {offsets = [0, 0], sizes = [8, 8], strides = [1, 1]} : vector<8x32xbf16> to vector<8x8xbf16>
    %26 = vector.extract_strided_slice %21 {offsets = [0, 0], sizes = [8, 8], strides = [1, 1]} : vector<8x32xbf16> to vector<8x8xbf16>
    %cst_17 = arith.constant dense<0.000000e+00> : vector<8x8xf32>
    %27 = tpu.matmul %24, %25, %cst_17 {dimension_numbers = #tpu.dot_dimension_numbers<[1], [1], [0], [0], [0, 0, 1, 0], [], []>} : vector<8x8xbf16>, vector<8x8xbf16>, vector<8x8xf32> -> vector<8x8xf32>
    %28 = vector.broadcast %23 : vector<1x8xf32> to vector<8x8xf32>
    %29 = arith.addf %27, %28 : vector<8x8xf32>
    %cst_18 = arith.constant dense<0xFF800000> : vector<8xf32>
    %30 = vector.multi_reduction <maximumf>, %29, %cst_18 [1] : vector<8x8xf32> to vector<8xf32>
    %31 = vector.shape_cast %30 : vector<8xf32> to vector<8x1xf32>
    %32 = vector.broadcast %31 : vector<8x1xf32> to vector<8x8xf32>
    %33 = arith.subf %29, %32 : vector<8x8xf32>
    %34 = math.exp %33 : vector<8x8xf32>
    %cst_19 = arith.constant dense<0.000000e+00> : vector<8xf32>
    %35 = vector.multi_reduction <add>, %34, %cst_19 [1] : vector<8x8xf32> to vector<8xf32>
    %36 = vector.shape_cast %35 : vector<8xf32> to vector<8x1xf32>
    %37 = tpu.reciprocal %36 {approx = true} : vector<8x1xf32> -> vector<8x1xf32>
    %38 = vector.broadcast %37 : vector<8x1xf32> to vector<8x8xf32>
    %39 = arith.mulf %34, %38 : vector<8x8xf32>
    %40 = arith.truncf %39 : vector<8x8xf32> to vector<8x8xbf16>
    %cst_20 = arith.constant dense<0.000000e+00> : vector<8x8xf32>
    %41 = tpu.matmul %40, %26, %cst_20 {dimension_numbers = #tpu.dot_dimension_numbers<[1], [0], [0], [1], [0, 0, 1, 1], [], []>} : vector<8x8xbf16>, vector<8x8xbf16>, vector<8x8xf32> -> vector<8x8xf32>
    %c0_21 = arith.constant 0 : index
    %c0_22 = arith.constant 0 : index
    %42 = vector.load %arg12[%c0_21, %c0_22] : memref<8x32xf32, #tpu.memory_space<vmem>>, vector<8x8xf32>
    tpu.vector_store %arg12[%c0_21, %c0_22], %41 {strides = array<i32>} : memref<8x32xf32, #tpu.memory_space<vmem>>, vector<8x8xf32>,
    %43 = vector.extract_strided_slice %19 {offsets = [0, 8], sizes = [8, 8], strides = [1, 1]} : vector<8x32xbf16> to vector<8x8xbf16>
    %44 = vector.extract_strided_slice %20 {offsets = [0, 8], sizes = [8, 8], strides = [1, 1]} : vector<8x32xbf16> to vector<8x8xbf16>
    %45 = vector.extract_strided_slice %21 {offsets = [0, 8], sizes = [8, 8], strides = [1, 1]} : vector<8x32xbf16> to vector<8x8xbf16>
    %cst_23 = arith.constant dense<0.000000e+00> : vector<8x8xf32>
    %46 = tpu.matmul %43, %44, %cst_23 {dimension_numbers = #tpu.dot_dimension_numbers<[1], [1], [0], [0], [0, 0, 1, 0], [], []>} : vector<8x8xbf16>, vector<8x8xbf16>, vector<8x8xf32> -> vector<8x8xf32>
    %47 = vector.broadcast %23 : vector<1x8xf32> to vector<8x8xf32>
    %48 = arith.addf %46, %47 : vector<8x8xf32>
    %cst_24 = arith.constant dense<0xFF800000> : vector<8xf32>
    %49 = vector.multi_reduction <maximumf>, %48, %cst_24 [1] : vector<8x8xf32> to vector<8xf32>
    %50 = vector.shape_cast %49 : vector<8xf32> to vector<8x1xf32>
    %51 = vector.broadcast %50 : vector<8x1xf32> to vector<8x8xf32>
    %52 = arith.subf %48, %51 : vector<8x8xf32>
    %53 = math.exp %52 : vector<8x8xf32>
    %cst_25 = arith.constant dense<0.000000e+00> : vector<8xf32>
    %54 = vector.multi_reduction <add>, %53, %cst_25 [1] : vector<8x8xf32> to vector<8xf32>
    %55 = vector.shape_cast %54 : vector<8xf32> to vector<8x1xf32>
    %56 = tpu.reciprocal %55 {approx = true} : vector<8x1xf32> -> vector<8x1xf32>
    %57 = vector.broadcast %56 : vector<8x1xf32> to vector<8x8xf32>
    %58 = arith.mulf %53, %57 : vector<8x8xf32>
    %59 = arith.truncf %58 : vector<8x8xf32> to vector<8x8xbf16>
    %cst_26 = arith.constant dense<0.000000e+00> : vector<8x8xf32>
    %60 = tpu.matmul %59, %45, %cst_26 {dimension_numbers = #tpu.dot_dimension_numbers<[1], [0], [0], [1], [0, 0, 1, 1], [], []>} : vector<8x8xbf16>, vector<8x8xbf16>, vector<8x8xf32> -> vector<8x8xf32>
    %c0_27 = arith.constant 0 : index
    %c8 = arith.constant 8 : index
    %61 = vector.load %arg12[%c0_27, %c8] : memref<8x32xf32, #tpu.memory_space<vmem>>, vector<8x8xf32>
    tpu.vector_store %arg12[%c0_27, %c8], %60 {strides = array<i32>} : memref<8x32xf32, #tpu.memory_space<vmem>>, vector<8x8xf32>,
    %62 = vector.extract_strided_slice %19 {offsets = [0, 16], sizes = [8, 8], strides = [1, 1]} : vector<8x32xbf16> to vector<8x8xbf16>
    %63 = vector.extract_strided_slice %20 {offsets = [0, 16], sizes = [8, 8], strides = [1, 1]} : vector<8x32xbf16> to vector<8x8xbf16>
    %64 = vector.extract_strided_slice %21 {offsets = [0, 16], sizes = [8, 8], strides = [1, 1]} : vector<8x32xbf16> to vector<8x8xbf16>
    %cst_28 = arith.constant dense<0.000000e+00> : vector<8x8xf32>
    %65 = tpu.matmul %62, %63, %cst_28 {dimension_numbers = #tpu.dot_dimension_numbers<[1], [1], [0], [0], [0, 0, 1, 0], [], []>} : vector<8x8xbf16>, vector<8x8xbf16>, vector<8x8xf32> -> vector<8x8xf32>
    %66 = vector.broadcast %23 : vector<1x8xf32> to vector<8x8xf32>
    %67 = arith.addf %65, %66 : vector<8x8xf32>
    %cst_29 = arith.constant dense<0xFF800000> : vector<8xf32>
    %68 = vector.multi_reduction <maximumf>, %67, %cst_29 [1] : vector<8x8xf32> to vector<8xf32>
    %69 = vector.shape_cast %68 : vector<8xf32> to vector<8x1xf32>
    %70 = vector.broadcast %69 : vector<8x1xf32> to vector<8x8xf32>
    %71 = arith.subf %67, %70 : vector<8x8xf32>
    %72 = math.exp %71 : vector<8x8xf32>
    %cst_30 = arith.constant dense<0.000000e+00> : vector<8xf32>
    %73 = vector.multi_reduction <add>, %72, %cst_30 [1] : vector<8x8xf32> to vector<8xf32>
    %74 = vector.shape_cast %73 : vector<8xf32> to vector<8x1xf32>
    %75 = tpu.reciprocal %74 {approx = true} : vector<8x1xf32> -> vector<8x1xf32>
    %76 = vector.broadcast %75 : vector<8x1xf32> to vector<8x8xf32>
    %77 = arith.mulf %72, %76 : vector<8x8xf32>
    %78 = arith.truncf %77 : vector<8x8xf32> to vector<8x8xbf16>
    %cst_31 = arith.constant dense<0.000000e+00> : vector<8x8xf32>
    %79 = tpu.matmul %78, %64, %cst_31 {dimension_numbers = #tpu.dot_dimension_numbers<[1], [0], [0], [1], [0, 0, 1, 1], [], []>} : vector<8x8xbf16>, vector<8x8xbf16>, vector<8x8xf32> -> vector<8x8xf32>
    %c0_32 = arith.constant 0 : index
    %c16 = arith.constant 16 : index
    %80 = vector.load %arg12[%c0_32, %c16] : memref<8x32xf32, #tpu.memory_space<vmem>>, vector<8x8xf32>
    tpu.vector_store %arg12[%c0_32, %c16], %79 {strides = array<i32>} : memref<8x32xf32, #tpu.memory_space<vmem>>, vector<8x8xf32>,
    %81 = vector.extract_strided_slice %19 {offsets = [0, 24], sizes = [8, 8], strides = [1, 1]} : vector<8x32xbf16> to vector<8x8xbf16>
    %82 = vector.extract_strided_slice %20 {offsets = [0, 24], sizes = [8, 8], strides = [1, 1]} : vector<8x32xbf16> to vector<8x8xbf16>
    %83 = vector.extract_strided_slice %21 {offsets = [0, 24], sizes = [8, 8], strides = [1, 1]} : vector<8x32xbf16> to vector<8x8xbf16>
    %cst_33 = arith.constant dense<0.000000e+00> : vector<8x8xf32>
    %84 = tpu.matmul %81, %82, %cst_33 {dimension_numbers = #tpu.dot_dimension_numbers<[1], [1], [0], [0], [0, 0, 1, 0], [], []>} : vector<8x8xbf16>, vector<8x8xbf16>, vector<8x8xf32> -> vector<8x8xf32>
    %85 = vector.broadcast %23 : vector<1x8xf32> to vector<8x8xf32>
    %86 = arith.addf %84, %85 : vector<8x8xf32>
    %cst_34 = arith.constant dense<0xFF800000> : vector<8xf32>
    %87 = vector.multi_reduction <maximumf>, %86, %cst_34 [1] : vector<8x8xf32> to vector<8xf32>
    %88 = vector.shape_cast %87 : vector<8xf32> to vector<8x1xf32>
    %89 = vector.broadcast %88 : vector<8x1xf32> to vector<8x8xf32>
    %90 = arith.subf %86, %89 : vector<8x8xf32>
    %91 = math.exp %90 : vector<8x8xf32>
    %cst_35 = arith.constant dense<0.000000e+00> : vector<8xf32>
    %92 = vector.multi_reduction <add>, %91, %cst_35 [1] : vector<8x8xf32> to vector<8xf32>
    %93 = vector.shape_cast %92 : vector<8xf32> to vector<8x1xf32>
    %94 = tpu.reciprocal %93 {approx = true} : vector<8x1xf32> -> vector<8x1xf32>
    %95 = vector.broadcast %94 : vector<8x1xf32> to vector<8x8xf32>
    %96 = arith.mulf %91, %95 : vector<8x8xf32>
    %97 = arith.truncf %96 : vector<8x8xf32> to vector<8x8xbf16>
    %cst_36 = arith.constant dense<0.000000e+00> : vector<8x8xf32>
    %98 = tpu.matmul %97, %83, %cst_36 {dimension_numbers = #tpu.dot_dimension_numbers<[1], [0], [0], [1], [0, 0, 1, 1], [], []>} : vector<8x8xbf16>, vector<8x8xbf16>, vector<8x8xf32> -> vector<8x8xf32>
    %c0_37 = arith.constant 0 : index
    %c24 = arith.constant 24 : index
    %99 = vector.load %arg12[%c0_37, %c24] : memref<8x32xf32, #tpu.memory_space<vmem>>, vector<8x8xf32>
    tpu.vector_store %arg12[%c0_37, %c24], %98 {strides = array<i32>} : memref<8x32xf32, #tpu.memory_space<vmem>>, vector<8x8xf32>,
    %c0_38 = arith.constant 0 : index
    %c0_39 = arith.constant 0 : index
    %100 = vector.load %arg12[%c0_38, %c0_39] : memref<8x32xf32, #tpu.memory_space<vmem>>, vector<8x32xf32>
    %101 = arith.truncf %100 : vector<8x32xf32> to vector<8x32xbf16>
    %c0_40 = arith.constant 0 : index
    %c0_41 = arith.constant 0 : index
    %102 = vector.load %arg7[%c0_40, %c0_41] : memref<32x32xbf16, #tpu.memory_space<vmem>>, vector<32x32xbf16>
    %cst_42 = arith.constant dense<0.000000e+00> : vector<8x32xf32>
    %103 = tpu.matmul %101, %102, %cst_42 {dimension_numbers = #tpu.dot_dimension_numbers<[1], [0], [0], [1], [0, 0, 1, 1], [], []>} : vector<8x32xbf16>, vector<32x32xbf16>, vector<8x32xf32> -> vector<8x32xf32>
    %c0_43 = arith.constant 0 : index
    %c0_44 = arith.constant 0 : index
    %104 = vector.load %arg8[%c0_43, %c0_44] : memref<1x32xf32, #tpu.memory_space<vmem>>, vector<1x32xf32>
    %105 = vector.broadcast %104 : vector<1x32xf32> to vector<8x32xf32>
    %106 = arith.addf %103, %105 : vector<8x32xf32>
    %107 = arith.addf %2, %106 : vector<8x32xf32>
    %cst_45 = arith.constant dense<0.000000e+00> : vector<8xf32>
    %108 = vector.multi_reduction <add>, %107, %cst_45 [1] : vector<8x32xf32> to vector<8xf32>
    %109 = vector.shape_cast %108 : vector<8xf32> to vector<8x1xf32>
    %cst_46 = arith.constant 3.200000e+01 : f32
    %110 = vector.broadcast %cst_46 : f32 to vector<8x1xf32>
    %111 = arith.divf %109, %110 : vector<8x1xf32>
    %112 = vector.broadcast %111 : vector<8x1xf32> to vector<8x32xf32>
    %113 = arith.subf %107, %112 : vector<8x32xf32>
    %114 = arith.mulf %113, %113 : vector<8x32xf32>
    %cst_47 = arith.constant dense<0.000000e+00> : vector<8xf32>
    %115 = vector.multi_reduction <add>, %114, %cst_47 [1] : vector<8x32xf32> to vector<8xf32>
    %116 = vector.shape_cast %115 : vector<8xf32> to vector<8x1xf32>
    %cst_48 = arith.constant 3.200000e+01 : f32
    %117 = vector.broadcast %cst_48 : f32 to vector<8x1xf32>
    %118 = arith.divf %116, %117 : vector<8x1xf32>
    %119 = vector.broadcast %111 : vector<8x1xf32> to vector<8x32xf32>
    %120 = arith.subf %107, %119 : vector<8x32xf32>
    %cst_49 = arith.constant 9.99999974E-6 : f32
    %121 = vector.broadcast %cst_49 : f32 to vector<8x1xf32>
    %122 = arith.addf %118, %121 : vector<8x1xf32>
    %123 = math.rsqrt %122 : vector<8x1xf32>
    %124 = vector.broadcast %123 : vector<8x1xf32> to vector<8x32xf32>
    %125 = arith.mulf %120, %124 : vector<8x32xf32>
    %c0_50 = arith.constant 0 : index
    %c0_51 = arith.constant 0 : index
    %126 = vector.load %arg9[%c0_50, %c0_51] : memref<1x32xf32, #tpu.memory_space<vmem>>, vector<1x32xf32>
    %127 = vector.broadcast %126 : vector<1x32xf32> to vector<8x32xf32>
    %128 = arith.mulf %125, %127 : vector<8x32xf32>
    %c0_52 = arith.constant 0 : index
    %c0_53 = arith.constant 0 : index
    %129 = vector.load %arg10[%c0_52, %c0_53] : memref<1x32xf32, #tpu.memory_space<vmem>>, vector<1x32xf32>
    %130 = vector.broadcast %129 : vector<1x32xf32> to vector<8x32xf32>
    %131 = arith.addf %128, %130 : vector<8x32xf32>
    %132 = arith.truncf %131 : vector<8x32xf32> to vector<8x32xbf16>
    %c0_54 = arith.constant 0 : index
    %c0_55 = arith.constant 0 : index
    %c0_56 = arith.constant 0 : index
    %133 = vector.load %arg11[%c0_54, %c0_55, %c0_56] : memref<1x8x32xbf16, #tpu.memory_space<vmem>>, vector<1x8x32xbf16>
    %134 = vector.shape_cast %133 : vector<1x8x32xbf16> to vector<8x32xbf16>
    %135 = vector.shape_cast %132 : vector<8x32xbf16> to vector<1x8x32xbf16>
    tpu.vector_store %arg11[%c0_54, %c0_55, %c0_56], %135 {strides = array<i32>} : memref<1x8x32xbf16, #tpu.memory_space<vmem>>, vector<1x8x32xbf16>,
    return
  }
  func.func @transform_0(%arg0: i32, %arg1: i32) -> (i32, i32, i32) {
    %c0_i32 = arith.constant 0 : i32
    %c0_i32_0 = arith.constant 0 : i32
    return %arg0, %arg1, %c0_i32 : i32, i32, i32
  }
  func.func @transform_1(%arg0: i32, %arg1: i32) -> (i32, i32, i32) {
    %c0_i32 = arith.constant 0 : i32
    %c0_i32_0 = arith.constant 0 : i32
    %c0_i32_1 = arith.constant 0 : i32
    return %arg0, %c0_i32, %c0_i32_0 : i32, i32, i32
  }
  func.func @transform_2(%arg0: i32, %arg1: i32) -> (i32, i32, i32) {
    %c0_i32 = arith.constant 0 : i32
    %c0_i32_0 = arith.constant 0 : i32
    %c0_i32_1 = arith.constant 0 : i32
    return %arg0, %c0_i32, %c0_i32_0 : i32, i32, i32
  }
  func.func @transform_3(%arg0: i32, %arg1: i32) -> (i32, i32) {
    %c0_i32 = arith.constant 0 : i32
    %c0_i32_0 = arith.constant 0 : i32
    %c0_i32_1 = arith.constant 0 : i32
    return %c0_i32, %c0_i32_0 : i32, i32
  }
  func.func @transform_4(%arg0: i32, %arg1: i32) -> (i32, i32) {
    %c0_i32 = arith.constant 0 : i32
    %c0_i32_0 = arith.constant 0 : i32
    %c0_i32_1 = arith.constant 0 : i32
    return %c0_i32, %c0_i32_0 : i32, i32
  }
  func.func @transform_5(%arg0: i32, %arg1: i32) -> (i32, i32) {
    %c0_i32 = arith.constant 0 : i32
    %c0_i32_0 = arith.constant 0 : i32
    %c0_i32_1 = arith.constant 0 : i32
    return %c0_i32, %c0_i32_0 : i32, i32
  }
  func.func @transform_6(%arg0: i32, %arg1: i32) -> (i32, i32) {
    %c0_i32 = arith.constant 0 : i32
    %c0_i32_0 = arith.constant 0 : i32
    %c0_i32_1 = arith.constant 0 : i32
    return %c0_i32, %c0_i32_0 : i32, i32
  }
  func.func @transform_7(%arg0: i32, %arg1: i32) -> (i32, i32) {
    %c0_i32 = arith.constant 0 : i32
    %c0_i32_0 = arith.constant 0 : i32
    %c0_i32_1 = arith.constant 0 : i32
    return %c0_i32, %c0_i32_0 : i32, i32
  }
  func.func @transform_8(%arg0: i32, %arg1: i32) -> (i32, i32) {
    %c0_i32 = arith.constant 0 : i32
    %c0_i32_0 = arith.constant 0 : i32
    %c0_i32_1 = arith.constant 0 : i32
    return %c0_i32, %c0_i32_0 : i32, i32
  }
  func.func @transform_9(%arg0: i32, %arg1: i32) -> (i32, i32, i32) {
    %c0_i32 = arith.constant 0 : i32
    %c0_i32_0 = arith.constant 0 : i32
    return %arg0, %arg1, %c0_i32 : i32, i32, i32
  }
}

module attributes {stable_mosaic.version = 11 : i64} {
  func.func @_linear_kernel(%arg0: i32, %arg1: memref<16x32xbf16, #tpu.memory_space<vmem>>, %arg2: memref<32x32xbf16, #tpu.memory_space<vmem>>, %arg3: memref<1x32xf32, #tpu.memory_space<vmem>>, %arg4: memref<16x32xf32, #tpu.memory_space<vmem>>) attributes {dimension_semantics = [#tpu.dimension_semantics<parallel>], iteration_bounds = array<i64: 1>, scalar_prefetch = 0 : i64, scratch_operands = 0 : i64, tpu.core_type = #tpu.core_type<tc>, window_params = [{transform_indices = @transform_0, window_bounds = array<i64: 16, 32>}, {pipeline_mode = #tpu.pipeline_mode<synchronous>, transform_indices = @transform_1, window_bounds = array<i64: 32, 32>}, {pipeline_mode = #tpu.pipeline_mode<synchronous>, transform_indices = @transform_2, window_bounds = array<i64: 1, 32>}, {transform_indices = @transform_3, window_bounds = array<i64: 16, 32>}]} {
    %c0 = arith.constant 0 : index
    %c0_0 = arith.constant 0 : index
    %0 = vector.load %arg1[%c0, %c0_0] : memref<16x32xbf16, #tpu.memory_space<vmem>>, vector<16x32xbf16>
    %c0_1 = arith.constant 0 : index
    %c0_2 = arith.constant 0 : index
    %1 = vector.load %arg2[%c0_1, %c0_2] : memref<32x32xbf16, #tpu.memory_space<vmem>>, vector<32x32xbf16>
    %cst = arith.constant dense<0.000000e+00> : vector<16x32xf32>
    %2 = tpu.matmul %0, %1, %cst {dimension_numbers = #tpu.dot_dimension_numbers<[1], [0], [0], [1], [0, 0, 1, 1], [], []>} : vector<16x32xbf16>, vector<32x32xbf16>, vector<16x32xf32> -> vector<16x32xf32>
    %c0_3 = arith.constant 0 : index
    %c0_4 = arith.constant 0 : index
    %3 = vector.load %arg3[%c0_3, %c0_4] : memref<1x32xf32, #tpu.memory_space<vmem>>, vector<1x32xf32>
    %4 = vector.broadcast %3 : vector<1x32xf32> to vector<16x32xf32>
    %5 = arith.addf %2, %4 : vector<16x32xf32>
    %c0_5 = arith.constant 0 : index
    %c0_6 = arith.constant 0 : index
    %6 = vector.load %arg4[%c0_5, %c0_6] : memref<16x32xf32, #tpu.memory_space<vmem>>, vector<16x32xf32>
    tpu.vector_store %arg4[%c0_5, %c0_6], %5 {strides = array<i32>} : memref<16x32xf32, #tpu.memory_space<vmem>>, vector<16x32xf32>,
    return
  }
  func.func @transform_0(%arg0: i32) -> (i32, i32) {
    %c0_i32 = arith.constant 0 : i32
    %c0_i32_0 = arith.constant 0 : i32
    return %arg0, %c0_i32 : i32, i32
  }
  func.func @transform_1(%arg0: i32) -> (i32, i32) {
    %c0_i32 = arith.constant 0 : i32
    %c0_i32_0 = arith.constant 0 : i32
    %c0_i32_1 = arith.constant 0 : i32
    return %c0_i32, %c0_i32_0 : i32, i32
  }
  func.func @transform_2(%arg0: i32) -> (i32, i32) {
    %c0_i32 = arith.constant 0 : i32
    %c0_i32_0 = arith.constant 0 : i32
    %c0_i32_1 = arith.constant 0 : i32
    return %c0_i32, %c0_i32_0 : i32, i32
  }
  func.func @transform_3(%arg0: i32) -> (i32, i32) {
    %c0_i32 = arith.constant 0 : i32
    %c0_i32_0 = arith.constant 0 : i32
    return %arg0, %c0_i32 : i32, i32
  }
}

</mosaic_0001>

<llo_original>
// kernel: transformer_forward.12
$region0: #{transformer_forward.12}
  #allocation0 [shape = 'u32[]', space=smem, size = 0x4, offset = 0x4, fixed_abs, tag = 'smem constant byte address 0x4 - core index']
  #allocation1 [shape = 'u32[144,128]{1,0:T(1,128)}', space=vmem, size = 0x12000, scoped, tag = 'internal scratch']
  %s0 = inlined_call_operand.hbm [shape: bf16[16,32], index: 0, kind: input, shape index: {}]
  %s1 = inlined_call_operand.hbm [shape: bf16[32,64], index: 1, kind: input, shape index: {}]
  %s2 = inlined_call_operand.hbm [shape: f32[1,64], index: 2, kind: input, shape index: {}]
  %s3 = inlined_call_operand.hbm [shape: bf16[64,32], index: 3, kind: input, shape index: {}]
  %s4 = inlined_call_operand.hbm [shape: f32[1,32], index: 4, kind: input, shape index: {}]
  %s5 = inlined_call_operand.hbm [shape: f32[1,32], index: 5, kind: input, shape index: {}]
  %s6 = inlined_call_operand.hbm [shape: f32[1,32], index: 6, kind: input, shape index: {}]
  %s7 = inlined_call_operand.hbm [shape: bf16[16,32], index: 7, kind: output, shape index: {}]
  %s8 = sld [smem:[#allocation0]]
  $region66: #{transformer_forward.12} parent=0
    _
  %s10 = ssub.s32 1, %s8
  %s11 = scalar_select 0, %s10, %s8
  $region1: #{transformer_forward.12} parent=0
    #allocation2 [shape = 'u8[4096]{0}', space=vmem, size = 0x1000, scoped, tag = 'input window, operand 0, single buffered']
    #allocation3 [shape = 's32[1]{0}', space=sflag, size = 0x4, scoped, tag = 'scoped memory for transformer_forward.12']
    #allocation4 [shape = 's32[1]{0}', space=sflag, size = 0x4, scoped, tag = 'scoped memory for transformer_forward.12']
    #allocation5 [shape = 'u8[8192]{0}', space=vmem, size = 0x2000, scoped, tag = 'input window, operand 1, single buffered']
    #allocation6 [shape = 's32[1]{0}', space=sflag, size = 0x4, scoped, tag = 'scoped memory for transformer_forward.12']
    #allocation7 [shape = 'u8[512]{0}', space=vmem, size = 0x400, scoped, tag = 'input window, operand 2, single buffered']
    #allocation8 [shape = 'u8[16384]{0}', space=vmem, size = 0x4000, scoped, tag = 'input window, operand 3, single buffered']
    #allocation9 [shape = 's32[1]{0}', space=sflag, size = 0x4, scoped, tag = 'scoped memory for transformer_forward.12']
    #allocation10 [shape = 'u8[512]{0}', space=vmem, size = 0x400, scoped, tag = 'input window, operand 4, single buffered']
    #allocation11 [shape = 'u8[512]{0}', space=vmem, size = 0x400, scoped, tag = 'input window, operand 5, single buffered']
    #allocation12 [shape = 's32[1]{0}', space=sflag, size = 0x4, scoped, tag = 'scoped memory for transformer_forward.12']
    #allocation13 [shape = 'u8[512]{0}', space=vmem, size = 0x400, scoped, tag = 'input window, operand 6, single buffered']
    #allocation14 [shape = 'u8[4096]{0}', space=vmem, size = 0x1000, scoped, tag = 'output window, operand 0, single buffered']
    %12 = vsyncpa [#allocation3], 0
    %13 = vsyncpa [#allocation6], 0
    %14 = vsyncpa [#allocation9], 0
    %15 = vsyncpa [#allocation12], 0
    %16 = vsyncpa [#allocation4], 0
    // Predicated region
    $region2: #{transformer_forward.12} parent=1 // pred_check
      _
    $region3: #{transformer_forward.12} parent=1 // pred_check_branch
      %18 = sbr.rel (0) target = $region5
    $region4: #{transformer_forward.12} parent=1 // pred_region
      %s20 = ssub.s32 128, 128
      %21 = vsyncadd [#allocation3], %s20
      %s22 = sshll.u32 [#allocation2], 4
      %s23 = int_to_ptr.vmem [resolvable:$true] %s22
      %28 = dma.hbm_to_vmem [thread:$0]  %s0, 128, %s23, [#allocation3], 64, 64, 4
    $region5: #{transformer_forward.12} parent=1 // pred_fallthru
      _
    // Predicated region
    $region6: #{transformer_forward.12} parent=1 // pred_check
      _
    $region7: #{transformer_forward.12} parent=1 // pred_check_branch
      %30 = sbr.rel (0) target = $region9
    $region8: #{transformer_forward.12} parent=1 // pred_region
      %s32 = ssub.s32 256, 256
      %33 = vsyncadd [#allocation6], %s32
      %s34 = sshll.u32 [#allocation5], 4
      %s35 = int_to_ptr.vmem [resolvable:$true] %s34
      %40 = dma.hbm_to_vmem [thread:$0]  %s1, 256, %s35, [#allocation6], 64, 64, 4
    $region9: #{transformer_forward.12} parent=1 // pred_fallthru
      _
    // Predicated region
    $region10: #{transformer_forward.12} parent=1 // pred_check
      _
    $region11: #{transformer_forward.12} parent=1 // pred_check_branch
      %42 = sbr.rel (0) target = $region13
    $region12: #{transformer_forward.12} parent=1 // pred_region
      %s44 = ssub.s32 16, 16
      %45 = vsyncadd [#allocation6], %s44
      %s47 = sshll.u32 [#allocation7], 4
      %s48 = int_to_ptr.vmem [resolvable:$true] %s47
      %50 = dma.hbm_to_vmem [thread:$0]  %s2, 16, %s48, [#allocation6]
    $region13: #{transformer_forward.12} parent=1 // pred_fallthru
      _
    // Predicated region
    $region14: #{transformer_forward.12} parent=1 // pred_check
      _
    $region15: #{transformer_forward.12} parent=1 // pred_check_branch
      %52 = sbr.rel (0) target = $region17
    $region16: #{transformer_forward.12} parent=1 // pred_region
      %s54 = ssub.s32 512, 512
      %55 = vsyncadd [#allocation9], %s54
      %s56 = sshll.u32 [#allocation8], 4
      %s57 = int_to_ptr.vmem [resolvable:$true] %s56
      %62 = dma.hbm_to_vmem [thread:$0]  %s3, 512, %s57, [#allocation9], 64, 64, 4
    $region17: #{transformer_forward.12} parent=1 // pred_fallthru
      _
    // Predicated region
    $region18: #{transformer_forward.12} parent=1 // pred_check
      _
    $region19: #{transformer_forward.12} parent=1 // pred_check_branch
      %64 = sbr.rel (0) target = $region21
    $region20: #{transformer_forward.12} parent=1 // pred_region
      %s66 = ssub.s32 16, 16
      %67 = vsyncadd [#allocation9], %s66
      %s69 = sshll.u32 [#allocation10], 4
      %s70 = int_to_ptr.vmem [resolvable:$true] %s69
      %72 = dma.hbm_to_vmem [thread:$0]  %s4, 16, %s70, [#allocation9]
    $region21: #{transformer_forward.12} parent=1 // pred_fallthru
      _
    // Predicated region
    $region22: #{transformer_forward.12} parent=1 // pred_check
      _
    $region23: #{transformer_forward.12} parent=1 // pred_check_branch
      %74 = sbr.rel (0) target = $region25
    $region24: #{transformer_forward.12} parent=1 // pred_region
      %s76 = ssub.s32 16, 16
      %77 = vsyncadd [#allocation12], %s76
      %s79 = sshll.u32 [#allocation11], 4
      %s80 = int_to_ptr.vmem [resolvable:$true] %s79
      %82 = dma.hbm_to_vmem [thread:$0]  %s5, 16, %s80, [#allocation12]
    $region25: #{transformer_forward.12} parent=1 // pred_fallthru
      _
    // Predicated region
    $region26: #{transformer_forward.12} parent=1 // pred_check
      _
    $region27: #{transformer_forward.12} parent=1 // pred_check_branch
      %84 = sbr.rel (0) target = $region29
    $region28: #{transformer_forward.12} parent=1 // pred_region
      %s86 = ssub.s32 16, 16
      %87 = vsyncadd [#allocation12], %s86
      %s89 = sshll.u32 [#allocation13], 4
      %s90 = int_to_ptr.vmem [resolvable:$true] %s89
      %92 = dma.hbm_to_vmem [thread:$0]  %s6, 16, %s90, [#allocation12]
    $region29: #{transformer_forward.12} parent=1 // pred_fallthru
      _
    // Predicated region
    $region30: #{transformer_forward.12} parent=1 // pred_check
      _
    $region31: #{transformer_forward.12} parent=1 // pred_check_branch
      %94 = sbr.rel (0) target = $region33
    $region32: #{transformer_forward.12} parent=1 // pred_region
      %95 = dma.done [#allocation3], 128
    $region33: #{transformer_forward.12} parent=1 // pred_fallthru
      _
    // Predicated region
    $region34: #{transformer_forward.12} parent=1 // pred_check
      _
    $region35: #{transformer_forward.12} parent=1 // pred_check_branch
      %97 = sbr.rel (0) target = $region37
    $region36: #{transformer_forward.12} parent=1 // pred_region
      %98 = dma.done [#allocation6], 256
    $region37: #{transformer_forward.12} parent=1 // pred_fallthru
      _
    // Predicated region
    $region38: #{transformer_forward.12} parent=1 // pred_check
      _
    $region39: #{transformer_forward.12} parent=1 // pred_check_branch
      %100 = sbr.rel (0) target = $region41
    $region40: #{transformer_forward.12} parent=1 // pred_region
      %101 = dma.done [#allocation6], 16
    $region41: #{transformer_forward.12} parent=1 // pred_fallthru
      _
    // Predicated region
    $region42: #{transformer_forward.12} parent=1 // pred_check
      _
    $region43: #{transformer_forward.12} parent=1 // pred_check_branch
      %103 = sbr.rel (0) target = $region45
    $region44: #{transformer_forward.12} parent=1 // pred_region
      %104 = dma.done [#allocation9], 512
    $region45: #{transformer_forward.12} parent=1 // pred_fallthru
      _
    // Predicated region
    $region46: #{transformer_forward.12} parent=1 // pred_check
      _
    $region47: #{transformer_forward.12} parent=1 // pred_check_branch
      %106 = sbr.rel (0) target = $region49
    $region48: #{transformer_forward.12} parent=1 // pred_region
      %107 = dma.done [#allocation9], 16
    $region49: #{transformer_forward.12} parent=1 // pred_fallthru
      _
    // Predicated region
    $region50: #{transformer_forward.12} parent=1 // pred_check
      _
    $region51: #{transformer_forward.12} parent=1 // pred_check_branch
      %109 = sbr.rel (0) target = $region53
    $region52: #{transformer_forward.12} parent=1 // pred_region
      %110 = dma.done [#allocation12], 16
    $region53: #{transformer_forward.12} parent=1 // pred_fallthru
      _
    // Predicated region
    $region54: #{transformer_forward.12} parent=1 // pred_check
      _
    $region55: #{transformer_forward.12} parent=1 // pred_check_branch
      %112 = sbr.rel (0) target = $region57
    $region56: #{transformer_forward.12} parent=1 // pred_region
      %113 = dma.done [#allocation12], 16
    $region57: #{transformer_forward.12} parent=1 // pred_fallthru
      _
    %v115 = vld [vmem:[#allocation2] sm:$0xf]
    %v116 = vld [vmem:[#allocation2 + $0x4] sm:$0xf]
    %v117 = vunpack.c.l.bf16 %v115
    %v118 = vunpack.c.l.bf16 %v116
    %v119 = vld [vmem:[#allocation5] sm:$0xf]
    %v120 = vld [vmem:[#allocation5 + $0x4] sm:$0xf]
    %v121 = vld [vmem:[#allocation5 + $0x8] sm:$0xf]
    %v122 = vld [vmem:[#allocation5 + $0xc] sm:$0xf]
    %v123 = vld [vmem:[#allocation7] sm:$0x1]
    %v125 = vlaneseq
    %v126 = vshrl.u32 %v125, 7
    %v127 = vsub.s32 0, %v126
    %v128 = vrot.slane %v123, %v127
    %v132 = vunpack.c.l.b16 %v115
    %v133 = vunpack.c.l.b16 %v116
    %v134 = vpack.c.b16 %v133, %v132
    %v139 = vunpack.c.l.b16 %v119
    %v140 = vunpack.c.l.b16 %v120
    %v141 = vunpack.c.l.b16 %v121
    %v142 = vunpack.c.l.b16 %v122
    %v143 = vpack.c.b16 %v140, %v139
    %v144 = vpack.c.b16 %v142, %v141
    %vm147 = vcmask 261120
    %v149 = vsel %vm147, %v134, 0
    %151 = vmatprep.subr.bf16.mxu0 0
    %152 = vmatpush1.bf16.msra.mxu0 %v143
    %153 = vmatprep.subr.bf16.mxu0 0
    %154 = vmatpush1.bf16.msra.mxu0 %v144
    %155 = vmatprep.subr.bf16.mxu0 0
    %156 = vmatpush1.bf16.msra.mxu0 0
    %157 = vmatprep.subr.bf16.mxu0 0
    %158 = vmatpush1.bf16.msra.mxu0 0
    %159 = vmatprep.subr.bf16.mxu0 0
    %160 = vmatpush1.bf16.msra.mxu0 0
    %161 = vmatprep.subr.bf16.mxu0 0
    %162 = vmatpush1.bf16.msra.mxu0 0
    %163 = vmatprep.subr.bf16.mxu0 0
    %164 = vmatpush1.bf16.msra.mxu0 0
    %165 = vmatprep.subr.bf16.mxu0 0
    %166 = vmatpush1.bf16.msra.mxu0 0
    %167 = vmatprep.subr.bf16.mxu0 0
    %168 = vmatpush1.bf16.msra.mxu0 0
    %169 = vmatprep.subr.bf16.mxu0 0
    %170 = vmatpush1.bf16.msra.mxu0 0
    %171 = vmatprep.subr.bf16.mxu0 0
    %172 = vmatpush1.bf16.msra.mxu0 0
    %173 = vmatprep.subr.bf16.mxu0 0
    %174 = vmatpush1.bf16.msra.mxu0 0
    %175 = vmatprep.subr.bf16.mxu0 0
    %176 = vmatpush1.bf16.msra.mxu0 0
    %177 = vmatprep.subr.bf16.mxu0 0
    %178 = vmatpush1.bf16.msra.mxu0 0
    %179 = vmatprep.subr.bf16.mxu0 0
    %180 = vmatpush1.bf16.msra.mxu0 0
    %181 = vmatprep.subr.bf16.mxu0 0
    %182 = vmatpush1.bf16.msra.mxu0 0
    %183 = vmatprep.mubr.bf16.mxu0 0
    %184 = vmatmul.mubr.bf16.gmra.mrb[0].mxu0 %v149
    %v185 = vpop.f32.mrb[0].mxu0
    %v186 = vadd.f32 %v128, %v185
    %v187 = vpop.f32.mrb[0].mxu0
    %v188 = vpop.f32.mrb[0].mxu0
    %v189 = vadd.f32 %v128, %v188
    %v190 = vpop.f32.mrb[0].mxu0
    %191 = vdwg.mxu0
    %v192 = vmax.f32 %v186, 0.0
    %v193 = vmax.f32 %v189, 0.0
    %v194 = vpack.c.bf16 %v193, %v192
    %v195 = vld [vmem:[#allocation8] sm:$0xf]
    %v196 = vld [vmem:[#allocation8 + $0x4] sm:$0xf]
    %v197 = vld [vmem:[#allocation8 + $0x8] sm:$0xf]
    %v198 = vld [vmem:[#allocation8 + $0xc] sm:$0xf]
    %v199 = vld [vmem:[#allocation8 + $0x10] sm:$0xf]
    %v200 = vld [vmem:[#allocation8 + $0x14] sm:$0xf]
    %v201 = vld [vmem:[#allocation8 + $0x18] sm:$0xf]
    %v202 = vld [vmem:[#allocation8 + $0x1c] sm:$0xf]
    %v203 = vld [vmem:[#allocation10] sm:$0x1]
    %v205 = vlaneseq
    %v206 = vshrl.u32 %v205, 7
    %v207 = vsub.s32 0, %v206
    %v208 = vrot.slane %v203, %v207
    %v218 = vunpack.c.l.b16 %v195
    %v219 = vunpack.c.l.b16 %v196
    %v220 = vunpack.c.l.b16 %v197
    %v221 = vunpack.c.l.b16 %v198
    %v222 = vunpack.c.l.b16 %v199
    %v223 = vunpack.c.l.b16 %v200
    %v224 = vunpack.c.l.b16 %v201
    %v225 = vunpack.c.l.b16 %v202
    %v226 = vpack.c.b16 %v219, %v218
    %v227 = vpack.c.b16 %v221, %v220
    %v228 = vpack.c.b16 %v223, %v222
    %v229 = vpack.c.b16 %v225, %v224
    %vm234 = vcmask 523264
    %v236 = vsel %vm234, %v194, 0
    %238 = vmatprep.subr.bf16.mxu0 0
    %239 = vmatpush1.bf16.msra.mxu0 %v226
    %240 = vmatprep.subr.bf16.mxu0 0
    %241 = vmatpush1.bf16.msra.mxu0 %v227
    %242 = vmatprep.subr.bf16.mxu0 0
    %243 = vmatpush1.bf16.msra.mxu0 %v228
    %244 = vmatprep.subr.bf16.mxu0 0
    %245 = vmatpush1.bf16.msra.mxu0 %v229
    %246 = vmatprep.subr.bf16.mxu0 0
    %247 = vmatpush1.bf16.msra.mxu0 0
    %248 = vmatprep.subr.bf16.mxu0 0
    %249 = vmatpush1.bf16.msra.mxu0 0
    %250 = vmatprep.subr.bf16.mxu0 0
    %251 = vmatpush1.bf16.msra.mxu0 0
    %252 = vmatprep.subr.bf16.mxu0 0
    %253 = vmatpush1.bf16.msra.mxu0 0
    %254 = vmatprep.subr.bf16.mxu0 0
    %255 = vmatpush1.bf16.msra.mxu0 0
    %256 = vmatprep.subr.bf16.mxu0 0
    %257 = vmatpush1.bf16.msra.mxu0 0
    %258 = vmatprep.subr.bf16.mxu0 0
    %259 = vmatpush1.bf16.msra.mxu0 0
    %260 = vmatprep.subr.bf16.mxu0 0
    %261 = vmatpush1.bf16.msra.mxu0 0
    %262 = vmatprep.subr.bf16.mxu0 0
    %263 = vmatpush1.bf16.msra.mxu0 0
    %264 = vmatprep.subr.bf16.mxu0 0
    %265 = vmatpush1.bf16.msra.mxu0 0
    %266 = vmatprep.subr.bf16.mxu0 0
    %267 = vmatpush1.bf16.msra.mxu0 0
    %268 = vmatprep.subr.bf16.mxu0 0
    %269 = vmatpush1.bf16.msra.mxu0 0
    %270 = vmatprep.mubr.bf16.mxu0 0
    %271 = vmatmul.mubr.bf16.gmra.mrb[0].mxu0 %v236
    %v272 = vpop.f32.mrb[0].mxu0
    %v273 = vadd.f32 %v208, %v272
    %v274 = vpop.f32.mrb[0].mxu0
    %v275 = vpop.f32.mrb[0].mxu0
    %v276 = vadd.f32 %v208, %v275
    %v277 = vpop.f32.mrb[0].mxu0
    %278 = vdwg.mxu0
    %v279 = vadd.f32 %v117, %v273
    %v280 = vadd.f32 %v118, %v276
    %v281 = vsel %vm147, %v279, 0.0
    %282 = vadd.xlane.f32.xlu0 %v281
    %v283 = vpop.xlane.xlu0 %282
    %v284 = vsel %vm147, %v280, 0.0
    %285 = vadd.xlane.f32.xlu0 %v284
    %v286 = vpop.xlane.xlu0 %285
    %v287 = vrcp.pop 32.0
    %v288 = vmul.f32 %v283, %v287
    %v289 = vmul.f32 %v286, %v287
    %v290 = vsub.f32 %v279, %v288
    %v291 = vsub.f32 %v280, %v289
    %v292 = vmul.f32 %v290, %v290
    %v293 = vmul.f32 %v291, %v291
    %v294 = vsel %vm147, %v292, 0.0
    %295 = vadd.xlane.f32.xlu0 %v294
    %v296 = vpop.xlane.xlu0 %295
    %v297 = vsel %vm147, %v293, 0.0
    %298 = vadd.xlane.f32.xlu0 %v297
    %v299 = vpop.xlane.xlu0 %298
    %v300 = vmul.f32 %v296, %v287
    %v301 = vmul.f32 %v299, %v287
    %v302 = vadd.f32 %v300, 1e-05
    %v303 = vadd.f32 %v301, 1e-05
    %v304 = vrsqrt.pop %v302
    %v305 = vrsqrt.pop %v303
    %v306 = vmul.f32 %v290, %v304
    %v307 = vmul.f32 %v291, %v305
    %v308 = vld [vmem:[#allocation11] sm:$0x1]
    %v310 = vlaneseq
    %v311 = vshrl.u32 %v310, 7
    %v312 = vsub.s32 0, %v311
    %v313 = vrot.slane %v308, %v312
    %v315 = vmul.f32 %v306, %v313
    %v316 = vmul.f32 %v307, %v313
    %v317 = vld [vmem:[#allocation13] sm:$0x1]
    %v319 = vlaneseq
    %v320 = vshrl.u32 %v319, 7
    %v321 = vsub.s32 0, %v320
    %v322 = vrot.slane %v317, %v321
    %v324 = vadd.f32 %v315, %v322
    %v325 = vadd.f32 %v316, %v322
    %v326 = vpack.c.bf16 %v325, %v324
    %v328 = vunpack.c.l.b16 %v326
    %v329 = vunpack.c.h.b16 %v326
    %v330 = vpack.c.b16 %v328, %v328
    %v331 = vpack.c.b16 %v329, %v329
    %vm334 = vcmask 257024
    %335 = vst.msk [vmem:[#allocation14] sm:$0xf] %vm334, %v330
    %336 = vst.msk [vmem:[#allocation14 + $0x4] sm:$0xf] %vm334, %v331
    // Predicated region
    $region58: #{transformer_forward.12} parent=1 // pred_check
      _
    $region59: #{transformer_forward.12} parent=1 // pred_check_branch
      %338 = sbr.rel (0) target = $region61
    $region60: #{transformer_forward.12} parent=1 // pred_region
      %s340 = ssub.s32 128, 128
      %341 = vsyncadd [#allocation4], %s340
      %s342 = sshll.u32 [#allocation14], 4
      %s343 = int_to_ptr.vmem [resolvable:$true] %s342
      %348 = dma.vmem_to_hbm [thread:$0]  %s343, 128, %s7, [#allocation4], 64, 64, 4
    $region61: #{transformer_forward.12} parent=1 // pred_fallthru
      _
    // Predicated region
    $region62: #{transformer_forward.12} parent=1 // pred_check
      _
    $region63: #{transformer_forward.12} parent=1 // pred_check_branch
      %350 = sbr.rel (0) target = $region65
    $region64: #{transformer_forward.12} parent=1 // pred_region
      %351 = dma.done [#allocation4], 128
    $region65: #{transformer_forward.12} parent=1 // pred_fallthru
      _
    %352 = vsyncpa [#allocation3], 1
    %353 = vsyncpa [#allocation6], 1
    %354 = vsyncpa [#allocation9], 1
    %355 = vsyncpa [#allocation12], 1
    %356 = vsyncpa [#allocation4], 1

// kernel: transformer_forward.11
$region0: #{transformer_forward.11}
  #allocation0 [shape = 'u32[]', space=smem, size = 0x4, offset = 0x4, fixed_abs, tag = 'smem constant byte address 0x4 - core index']
  #allocation1 [shape = 'u32[144,128]{1,0:T(1,128)}', space=vmem, size = 0x12000, scoped, tag = 'internal scratch']
  #allocation2 [shape = 'f32[8,32]{1,0:T(8,128)}', space=vmem, size = 0x1000, scoped, tag = 'scratch operand']
  %s0 = inlined_call_operand.hbm [shape: bf16[2,8,32], index: 0, kind: input, shape index: {}, may-alias: {0,1}]
  %s1 = inlined_call_operand.hbm [shape: bf16[2,8,32], index: 1, kind: input, shape index: {}, may-alias: {0,1}]
  %s2 = inlined_call_operand.hbm [shape: bf16[32,96], index: 2, kind: input, shape index: {}]
  %s3 = inlined_call_operand.hbm [shape: f32[1,96], index: 3, kind: input, shape index: {}]
  %s4 = inlined_call_operand.hbm [shape: bf16[32,32], index: 4, kind: input, shape index: {}]
  %s5 = inlined_call_operand.hbm [shape: f32[1,32], index: 5, kind: input, shape index: {}]
  %s6 = inlined_call_operand.hbm [shape: f32[1,32], index: 6, kind: input, shape index: {}]
  %s7 = inlined_call_operand.hbm [shape: f32[1,32], index: 7, kind: input, shape index: {}]
  %s8 = inlined_call_operand.hbm [shape: bf16[2,8,32], index: 8, kind: output, shape index: {}]
  %s9 = sld [smem:[#allocation0]]
  $region97: #{transformer_forward.11} parent=0
    _
  %s11 = ssub.s32 1, %s9
  %s12 = scalar_select 0, %s11, %s9
  $region1: #{transformer_forward.11} parent=0
    #allocation3 [shape = 'u8[4096]{0}', space=vmem, size = 0x1000, scoped, tag = 'input window, operand 0']
    #allocation4 [shape = 's32[2]{0}', space=sflag, size = 0x8, scoped, tag = 'scoped memory for transformer_forward.11']
    #allocation5 [shape = 's32[2]{0}', space=sflag, size = 0x8, scoped, tag = 'scoped memory for transformer_forward.11']
    #allocation6 [shape = 'u8[4096]{0}', space=vmem, size = 0x1000, scoped, tag = 'input window, operand 1']
    #allocation7 [shape = 's32[2]{0}', space=sflag, size = 0x8, scoped, tag = 'scoped memory for transformer_forward.11']
    #allocation8 [shape = 'u8[8192]{0}', space=vmem, size = 0x2000, scoped, tag = 'input window, operand 2, single buffered']
    #allocation9 [shape = 'u8[512]{0}', space=vmem, size = 0x400, scoped, tag = 'input window, operand 3, single buffered']
    #allocation10 [shape = 's32[1]{0}', space=sflag, size = 0x4, scoped, tag = 'scoped memory for transformer_forward.11']
    #allocation11 [shape = 'u8[8192]{0}', space=vmem, size = 0x2000, scoped, tag = 'input window, operand 4, single buffered']
    #allocation12 [shape = 'u8[512]{0}', space=vmem, size = 0x400, scoped, tag = 'input window, operand 5, single buffered']
    #allocation13 [shape = 's32[1]{0}', space=sflag, size = 0x4, scoped, tag = 'scoped memory for transformer_forward.11']
    #allocation14 [shape = 'u8[512]{0}', space=vmem, size = 0x400, scoped, tag = 'input window, operand 6, single buffered']
    #allocation15 [shape = 'u8[512]{0}', space=vmem, size = 0x400, scoped, tag = 'input window, operand 7, single buffered']
    #allocation16 [shape = 's32[1]{0}', space=sflag, size = 0x4, scoped, tag = 'scoped memory for transformer_forward.11']
    #allocation17 [shape = 'u8[4096]{0}', space=vmem, size = 0x1000, scoped, tag = 'output window, operand 0']
    %13 = vsyncpa [#allocation4], 0
    %s14 = scalar_lea.sflag [#allocation4], 1
    %15 = vsyncpa %s14, 0
    %16 = vsyncpa [#allocation7], 0
    %s17 = scalar_lea.sflag [#allocation7], 1
    %18 = vsyncpa %s17, 0
    %19 = vsyncpa [#allocation10], 0
    %20 = vsyncpa [#allocation13], 0
    %21 = vsyncpa [#allocation16], 0
    %22 = vsyncpa [#allocation5], 0
    %s23 = scalar_lea.sflag [#allocation5], 1
    %24 = vsyncpa %s23, 0
    loop: start=0, step=1, limit=4
    $region2: #{transformer_forward.11} parent=1 // loop_pre_header
      _
    $region3: #{transformer_forward.11} parent=1 // loop_header
      %s26 = sphi 0, %s30
      %p27 = scmp.ge.s32.totalorder %s26, 4
      %s33 = sphi 0, %s45
      %s34 = sphi 0, %s41
      %s35 = sphi 0, %s33
      %s36 = sphi 0, %s34
      %s37 = sphi 0, %s35
      %s38 = sphi 0, %s36
      %s50 = sphi 0, %s52
      %s53 = sphi 0, %s50
      %s54 = sphi 0, %s53
      %s70 = sphi 0, %s54
      %s76 = sphi 0, %s78
      %s79 = sphi 0, %s76
      %s80 = sphi 0, %s79
      %s96 = sphi 0, %s80
      %s100 = sphi 0, %s100
      %s102 = sphi 0, %s100
      %s103 = sphi 0, %s102
      %s117 = sphi 0, %s103
      %s121 = sphi 0, %s121
      %s123 = sphi 0, %s121
      %s124 = sphi 0, %s123
      %s138 = sphi 0, %s124
      %s142 = sphi 0, %s142
      %s144 = sphi 0, %s142
      %s145 = sphi 0, %s144
      %s159 = sphi 0, %s145
      %s163 = sphi 0, %s163
      %s165 = sphi 0, %s163
      %s166 = sphi 0, %s165
      %s180 = sphi 0, %s166
      %s184 = sphi 0, %s184
      %s186 = sphi 0, %s184
      %s187 = sphi 0, %s186
      %s201 = sphi 0, %s187
      %s205 = sphi 0, %s205
      %s207 = sphi 0, %s205
      %s208 = sphi 0, %s207
      %s222 = sphi 0, %s208
      %s230 = sphi 0, %s232
      %s233 = sphi 0, %s230
      %s234 = sphi 0, %s233
      %s250 = sphi 0, %s234
    $region4: #{transformer_forward.11} parent=1 // loop_header_branch
      %29 = sbr.rel (%p27) target = $region8
    $region5: #{transformer_forward.11} parent=1 // loop_body
      %s31 = ssub.s32 %s26, 1
      %s32 = ssub.s32 %s26, 2
      %s39 = sadd.s32 1, %s34
      %p40 = scmp.ge.s32.totalorder %s39, 1
      %s41 = scalar_select %p40, 0, %s39
      %s42 = sadd.s32 1, %s33
      %s43 = scalar_select %p40, %s42, %s33
      %p44 = scmp.ge.s32.totalorder %s43, 2
      %s45 = scalar_select %p44, 0, %s43
      %s46 = ssub.s32 %s33, %s45
      %s47 = ssub.s32 %s34, %s41
      %s48 = sor.u32 %s46, %s47
      %p49 = scmp.eq.s32.totalorder %s48, 0
      %s51 = sadd.s32 %s50, 1
      %s52 = scalar_select %p49, %s50, %s51
      %p55 = pneg %p49
      %p56 = scmp.eq.s32.totalorder %s26, 1
      %p57 = por %p55, %p56
      %p58 = scmp.ne.s32.totalorder %s50, %s53
      %p59 = scmp.eq.s32.totalorder %s26, 0
      %p60 = por %p58, %p59
      %p61 = scmp.ne.s32.totalorder %s50, %s53
      %p62 = scmp.eq.s32.totalorder %s31, 1
      %p63 = por %p61, %p62
      %p64 = scmp.ne.s32.totalorder %s53, %s54
      %p65 = scmp.eq.s32.totalorder %s31, 0
      %p66 = por %p64, %p65
      %p67 = scmp.ne.s32.totalorder %s53, %s54
      %p68 = scmp.eq.s32.totalorder %s32, 1
      %p69 = por %p67, %p68
      %p71 = scmp.ne.s32.totalorder %s54, %s70
      %p72 = scmp.eq.s32.totalorder %s32, 0
      %p73 = por %p71, %p72
      %s74 = ssub.s32 %s33, %s45
      %p75 = scmp.eq.s32.totalorder %s74, 0
      %s77 = sadd.s32 %s76, 1
      %s78 = scalar_select %p75, %s76, %s77
      %p81 = pneg %p75
      %p82 = scmp.eq.s32.totalorder %s26, 1
      %p83 = por %p81, %p82
      %p84 = scmp.ne.s32.totalorder %s76, %s79
      %p85 = scmp.eq.s32.totalorder %s26, 0
      %p86 = por %p84, %p85
      %p87 = scmp.ne.s32.totalorder %s76, %s79
      %p88 = scmp.eq.s32.totalorder %s31, 1
      %p89 = por %p87, %p88
      %p90 = scmp.ne.s32.totalorder %s79, %s80
      %p91 = scmp.eq.s32.totalorder %s31, 0
      %p92 = por %p90, %p91
      %p93 = scmp.ne.s32.totalorder %s79, %s80
      %p94 = scmp.eq.s32.totalorder %s32, 1
      %p95 = por %p93, %p94
      %p97 = scmp.ne.s32.totalorder %s80, %s96
      %p98 = scmp.eq.s32.totalorder %s32, 0
      %p99 = por %p97, %p98
      %s101 = sadd.s32 %s100, 1
      %p104 = scmp.eq.s32.totalorder %s26, 1
      %p105 = scmp.ne.s32.totalorder %s100, %s102
      %p106 = scmp.eq.s32.totalorder %s26, 0
      %p107 = por %p105, %p106
      %p108 = scmp.ne.s32.totalorder %s100, %s102
      %p109 = scmp.eq.s32.totalorder %s31, 1
      %p110 = por %p108, %p109
      %p111 = scmp.ne.s32.totalorder %s102, %s103
      %p112 = scmp.eq.s32.totalorder %s31, 0
      %p113 = por %p111, %p112
      %p114 = scmp.ne.s32.totalorder %s102, %s103
      %p115 = scmp.eq.s32.totalorder %s32, 1
      %p116 = por %p114, %p115
      %p118 = scmp.ne.s32.totalorder %s103, %s117
      %p119 = scmp.eq.s32.totalorder %s32, 0
      %p120 = por %p118, %p119
      %s122 = sadd.s32 %s121, 1
      %p125 = scmp.eq.s32.totalorder %s26, 1
      %p126 = scmp.ne.s32.totalorder %s121, %s123
      %p127 = scmp.eq.s32.totalorder %s26, 0
      %p128 = por %p126, %p127
      %p129 = scmp.ne.s32.totalorder %s121, %s123
      %p130 = scmp.eq.s32.totalorder %s31, 1
      %p131 = por %p129, %p130
      %p132 = scmp.ne.s32.totalorder %s123, %s124
      %p133 = scmp.eq.s32.totalorder %s31, 0
      %p134 = por %p132, %p133
      %p135 = scmp.ne.s32.totalorder %s123, %s124
      %p136 = scmp.eq.s32.totalorder %s32, 1
      %p137 = por %p135, %p136
      %p139 = scmp.ne.s32.totalorder %s124, %s138
      %p140 = scmp.eq.s32.totalorder %s32, 0
      %p141 = por %p139, %p140
      %s143 = sadd.s32 %s142, 1
      %p146 = scmp.eq.s32.totalorder %s26, 1
      %p147 = scmp.ne.s32.totalorder %s142, %s144
      %p148 = scmp.eq.s32.totalorder %s26, 0
      %p149 = por %p147, %p148
      %p150 = scmp.ne.s32.totalorder %s142, %s144
      %p151 = scmp.eq.s32.totalorder %s31, 1
      %p152 = por %p150, %p151
      %p153 = scmp.ne.s32.totalorder %s144, %s145
      %p154 = scmp.eq.s32.totalorder %s31, 0
      %p155 = por %p153, %p154
      %p156 = scmp.ne.s32.totalorder %s144, %s145
      %p157 = scmp.eq.s32.totalorder %s32, 1
      %p158 = por %p156, %p157
      %p160 = scmp.ne.s32.totalorder %s145, %s159
      %p161 = scmp.eq.s32.totalorder %s32, 0
      %p162 = por %p160, %p161
      %s164 = sadd.s32 %s163, 1
      %p167 = scmp.eq.s32.totalorder %s26, 1
      %p168 = scmp.ne.s32.totalorder %s163, %s165
      %p169 = scmp.eq.s32.totalorder %s26, 0
      %p170 = por %p168, %p169
      %p171 = scmp.ne.s32.totalorder %s163, %s165
      %p172 = scmp.eq.s32.totalorder %s31, 1
      %p173 = por %p171, %p172
      %p174 = scmp.ne.s32.totalorder %s165, %s166
      %p175 = scmp.eq.s32.totalorder %s31, 0
      %p176 = por %p174, %p175
      %p177 = scmp.ne.s32.totalorder %s165, %s166
      %p178 = scmp.eq.s32.totalorder %s32, 1
      %p179 = por %p177, %p178
      %p181 = scmp.ne.s32.totalorder %s166, %s180
      %p182 = scmp.eq.s32.totalorder %s32, 0
      %p183 = por %p181, %p182
      %s185 = sadd.s32 %s184, 1
      %p188 = scmp.eq.s32.totalorder %s26, 1
      %p189 = scmp.ne.s32.totalorder %s184, %s186
      %p190 = scmp.eq.s32.totalorder %s26, 0
      %p191 = por %p189, %p190
      %p192 = scmp.ne.s32.totalorder %s184, %s186
      %p193 = scmp.eq.s32.totalorder %s31, 1
      %p194 = por %p192, %p193
      %p195 = scmp.ne.s32.totalorder %s186, %s187
      %p196 = scmp.eq.s32.totalorder %s31, 0
      %p197 = por %p195, %p196
      %p198 = scmp.ne.s32.totalorder %s186, %s187
      %p199 = scmp.eq.s32.totalorder %s32, 1
      %p200 = por %p198, %p199
      %p202 = scmp.ne.s32.totalorder %s187, %s201
      %p203 = scmp.eq.s32.totalorder %s32, 0
      %p204 = por %p202, %p203
      %s206 = sadd.s32 %s205, 1
      %p209 = scmp.eq.s32.totalorder %s26, 1
      %p210 = scmp.ne.s32.totalorder %s205, %s207
      %p211 = scmp.eq.s32.totalorder %s26, 0
      %p212 = por %p210, %p211
      %p213 = scmp.ne.s32.totalorder %s205, %s207
      %p214 = scmp.eq.s32.totalorder %s31, 1
      %p215 = por %p213, %p214
      %p216 = scmp.ne.s32.totalorder %s207, %s208
      %p217 = scmp.eq.s32.totalorder %s31, 0
      %p218 = por %p216, %p217
      %p219 = scmp.ne.s32.totalorder %s207, %s208
      %p220 = scmp.eq.s32.totalorder %s32, 1
      %p221 = por %p219, %p220
      %p223 = scmp.ne.s32.totalorder %s208, %s222
      %p224 = scmp.eq.s32.totalorder %s32, 0
      %p225 = por %p223, %p224
      %s226 = ssub.s32 %s33, %s45
      %s227 = ssub.s32 %s34, %s41
      %s228 = sor.u32 %s226, %s227
      %p229 = scmp.eq.s32.totalorder %s228, 0
      %s231 = sadd.s32 %s230, 1
      %s232 = scalar_select %p229, %s230, %s231
      %p235 = pneg %p229
      %p236 = scmp.eq.s32.totalorder %s26, 1
      %p237 = por %p235, %p236
      %p238 = scmp.ne.s32.totalorder %s230, %s233
      %p239 = scmp.eq.s32.totalorder %s26, 0
      %p240 = por %p238, %p239
      %p241 = scmp.ne.s32.totalorder %s230, %s233
      %p242 = scmp.eq.s32.totalorder %s31, 1
      %p243 = por %p241, %p242
      %p244 = scmp.ne.s32.totalorder %s233, %s234
      %p245 = scmp.eq.s32.totalorder %s31, 0
      %p246 = por %p244, %p245
      %p247 = scmp.ne.s32.totalorder %s233, %s234
      %p248 = scmp.eq.s32.totalorder %s32, 1
      %p249 = por %p247, %p248
      %p251 = scmp.ne.s32.totalorder %s234, %s250
      %p252 = scmp.eq.s32.totalorder %s32, 0
      %p253 = por %p251, %p252
      %p254 = scmp.le.s32.totalorder 1, %s26
      %p255 = scmp.lt.s32.totalorder %s26, 3
      %p256 = pnand %p254, %p255
      %p257 = pneg %p256
      // Predicated region
      $region9: #{transformer_forward.11} parent=5 // pred_check
        _
      $region10: #{transformer_forward.11} parent=5 // pred_check_branch
        %259 = sbr.rel (%p256) target = $region12
      $region11: #{transformer_forward.11} parent=5 // pred_region
        %s260 = ssub.s32 %s26, 1
        // Predicated region
        $region13: #{transformer_forward.11} parent=11 // pred_check
          %p261 = pneg %p113
        $region14: #{transformer_forward.11} parent=11 // pred_check_branch
          %263 = sbr.rel (%p261) target = $region16
        $region15: #{transformer_forward.11} parent=11 // pred_region
          %s265 = ssub.s32 256, 256
          %266 = vsyncadd [#allocation7], %s265
          %s267 = sshll.u32 [#allocation8], 4
          %s268 = int_to_ptr.vmem [resolvable:$true] %s267
          %273 = dma.hbm_to_vmem [thread:$0]  %s2, 256, %s268, [#allocation7], 64, 64, 4
        $region16: #{transformer_forward.11} parent=11 // pred_fallthru
          _
        // Predicated region
        $region17: #{transformer_forward.11} parent=11 // pred_check
          %p274 = pneg %p134
        $region18: #{transformer_forward.11} parent=11 // pred_check_branch
          %276 = sbr.rel (%p274) target = $region20
        $region19: #{transformer_forward.11} parent=11 // pred_region
          %s278 = ssub.s32 16, 16
          %279 = vsyncadd [#allocation10], %s278
          %s281 = sshll.u32 [#allocation9], 4
          %s282 = int_to_ptr.vmem [resolvable:$true] %s281
          %284 = dma.hbm_to_vmem [thread:$0]  %s3, 16, %s282, [#allocation10]
        $region20: #{transformer_forward.11} parent=11 // pred_fallthru
          _
        // Predicated region
        $region21: #{transformer_forward.11} parent=11 // pred_check
          %p285 = pneg %p155
        $region22: #{transformer_forward.11} parent=11 // pred_check_branch
          %287 = sbr.rel (%p285) target = $region24
        $region23: #{transformer_forward.11} parent=11 // pred_region
          %s289 = ssub.s32 256, 256
          %290 = vsyncadd [#allocation10], %s289
          %s291 = sshll.u32 [#allocation11], 4
          %s292 = int_to_ptr.vmem [resolvable:$true] %s291
          %297 = dma.hbm_to_vmem [thread:$0]  %s4, 256, %s292, [#allocation10], 64, 64, 4
        $region24: #{transformer_forward.11} parent=11 // pred_fallthru
          _
        // Predicated region
        $region25: #{transformer_forward.11} parent=11 // pred_check
          %p298 = pneg %p176
        $region26: #{transformer_forward.11} parent=11 // pred_check_branch
          %300 = sbr.rel (%p298) target = $region28
        $region27: #{transformer_forward.11} parent=11 // pred_region
          %s302 = ssub.s32 16, 16
          %303 = vsyncadd [#allocation13], %s302
          %s305 = sshll.u32 [#allocation12], 4
          %s306 = int_to_ptr.vmem [resolvable:$true] %s305
          %308 = dma.hbm_to_vmem [thread:$0]  %s5, 16, %s306, [#allocation13]
        $region28: #{transformer_forward.11} parent=11 // pred_fallthru
          _
        // Predicated region
        $region29: #{transformer_forward.11} parent=11 // pred_check
          %p309 = pneg %p197
        $region30: #{transformer_forward.11} parent=11 // pred_check_branch
          %311 = sbr.rel (%p309) target = $region32
        $region31: #{transformer_forward.11} parent=11 // pred_region
          %s313 = ssub.s32 16, 16
          %314 = vsyncadd [#allocation13], %s313
          %s316 = sshll.u32 [#allocation14], 4
          %s317 = int_to_ptr.vmem [resolvable:$true] %s316
          %319 = dma.hbm_to_vmem [thread:$0]  %s6, 16, %s317, [#allocation13]
        $region32: #{transformer_forward.11} parent=11 // pred_fallthru
          _
        // Predicated region
        $region33: #{transformer_forward.11} parent=11 // pred_check
          %p320 = pneg %p218
        $region34: #{transformer_forward.11} parent=11 // pred_check_branch
          %322 = sbr.rel (%p320) target = $region36
        $region35: #{transformer_forward.11} parent=11 // pred_region
          %s324 = ssub.s32 16, 16
          %325 = vsyncadd [#allocation16], %s324
          %s327 = sshll.u32 [#allocation15], 4
          %s328 = int_to_ptr.vmem [resolvable:$true] %s327
          %330 = dma.hbm_to_vmem [thread:$0]  %s7, 16, %s328, [#allocation16]
        $region36: #{transformer_forward.11} parent=11 // pred_fallthru
          _
      $region12: #{transformer_forward.11} parent=5 // pred_fallthru
        _
      %p331 = scmp.lt.s32.totalorder %s26, 2
      // Predicated region
      $region37: #{transformer_forward.11} parent=5 // pred_check
        %p332 = pneg %p331
      $region38: #{transformer_forward.11} parent=5 // pred_check_branch
        %334 = sbr.rel (%p332) target = $region40
      $region39: #{transformer_forward.11} parent=5 // pred_region
        // Predicated region
        $region41: #{transformer_forward.11} parent=39 // pred_check
          %p335 = pneg %p60
        $region42: #{transformer_forward.11} parent=39 // pred_check_branch
          %337 = sbr.rel (%p335) target = $region44
        $region43: #{transformer_forward.11} parent=39 // pred_region
          %s338 = sand.u32 %s50, 1
          %s339 = scalar_lea.sflag [#allocation4], %s338
          %s340 = sand.u32 %s50, 1
          %s341 = smul.addr %s340, 4
          %s342 = scalar_lea.vmem [#allocation3], %s341
          %s344 = ssub.s32 64, 64
          %345 = vsyncadd %s339, %s344
          %s346 = sadd.s32 %s34, %s33
          %s347 = smul.addr %s346, 64
          %s348 = scalar_lea.hbm %s0, %s347
          %s350 = sshll.u32 %s342, 4
          %s351 = int_to_ptr.vmem [resolvable:$true] %s350
          %353 = dma.hbm_to_vmem [thread:$0]  %s348, 64, %s351, %s339
        $region44: #{transformer_forward.11} parent=39 // pred_fallthru
          _
        // Predicated region
        $region45: #{transformer_forward.11} parent=39 // pred_check
          %p354 = pneg %p86
        $region46: #{transformer_forward.11} parent=39 // pred_check_branch
          %356 = sbr.rel (%p354) target = $region48
        $region47: #{transformer_forward.11} parent=39 // pred_region
          %s357 = sand.u32 %s26, 1
          %s358 = scalar_lea.sflag [#allocation7], %s357
          %s359 = sand.u32 %s76, 1
          %s360 = smul.addr %s359, 4
          %s361 = scalar_lea.vmem [#allocation6], %s360
          %s363 = ssub.s32 64, 64
          %364 = vsyncadd %s358, %s363
          %s365 = smul.addr %s33, 64
          %s366 = scalar_lea.hbm %s1, %s365
          %s368 = sshll.u32 %s361, 4
          %s369 = int_to_ptr.vmem [resolvable:$true] %s368
          %371 = dma.hbm_to_vmem [thread:$0]  %s366, 64, %s369, %s358
        $region48: #{transformer_forward.11} parent=39 // pred_fallthru
          _
      $region40: #{transformer_forward.11} parent=5 // pred_fallthru
        _
      %p372 = scmp.le.s32.totalorder 1, %s26
      %p373 = scmp.lt.s32.totalorder %s26, 3
      %p374 = pnand %p372, %p373
      %p375 = pneg %p374
      // Predicated region
      $region49: #{transformer_forward.11} parent=5 // pred_check
        _
      $region50: #{transformer_forward.11} parent=5 // pred_check_branch
        %377 = sbr.rel (%p374) target = $region52
      $region51: #{transformer_forward.11} parent=5 // pred_region
        %s378 = ssub.s32 %s26, 1
        %s379 = sand.u32 %s53, 1
        %s380 = scalar_lea.sflag [#allocation4], %s379
        %s381 = sand.u32 %s53, 1
        %s382 = smul.addr %s381, 4
        %s383 = scalar_lea.vmem [#allocation3], %s382
        // Predicated region
        $region53: #{transformer_forward.11} parent=51 // pred_check
          %p384 = pneg %p66
        $region54: #{transformer_forward.11} parent=51 // pred_check_branch
          %386 = sbr.rel (%p384) target = $region56
        $region55: #{transformer_forward.11} parent=51 // pred_region
          %387 = dma.done %s380, 64
        $region56: #{transformer_forward.11} parent=51 // pred_fallthru
          _
        %s388 = sand.u32 %s31, 1
        %s389 = scalar_lea.sflag [#allocation7], %s388
        %s390 = sand.u32 %s79, 1
        %s391 = smul.addr %s390, 4
        %s392 = scalar_lea.vmem [#allocation6], %s391
        // Predicated region
        $region57: #{transformer_forward.11} parent=51 // pred_check
          %p393 = pneg %p92
        $region58: #{transformer_forward.11} parent=51 // pred_check_branch
          %395 = sbr.rel (%p393) target = $region60
        $region59: #{transformer_forward.11} parent=51 // pred_region
          %396 = dma.done %s389, 64
        $region60: #{transformer_forward.11} parent=51 // pred_fallthru
          _
        // Predicated region
        $region61: #{transformer_forward.11} parent=51 // pred_check
          %p397 = pneg %p113
        $region62: #{transformer_forward.11} parent=51 // pred_check_branch
          %399 = sbr.rel (%p397) target = $region64
        $region63: #{transformer_forward.11} parent=51 // pred_region
          %400 = dma.done [#allocation7], 256
        $region64: #{transformer_forward.11} parent=51 // pred_fallthru
          _
        // Predicated region
        $region65: #{transformer_forward.11} parent=51 // pred_check
          %p401 = pneg %p134
        $region66: #{transformer_forward.11} parent=51 // pred_check_branch
          %403 = sbr.rel (%p401) target = $region68
        $region67: #{transformer_forward.11} parent=51 // pred_region
          %404 = dma.done [#allocation10], 16
        $region68: #{transformer_forward.11} parent=51 // pred_fallthru
          _
        // Predicated region
        $region69: #{transformer_forward.11} parent=51 // pred_check
          %p405 = pneg %p155
        $region70: #{transformer_forward.11} parent=51 // pred_check_branch
          %407 = sbr.rel (%p405) target = $region72
        $region71: #{transformer_forward.11} parent=51 // pred_region
          %408 = dma.done [#allocation10], 256
        $region72: #{transformer_forward.11} parent=51 // pred_fallthru
          _
        // Predicated region
        $region73: #{transformer_forward.11} parent=51 // pred_check
          %p409 = pneg %p176
        $region74: #{transformer_forward.11} parent=51 // pred_check_branch
          %411 = sbr.rel (%p409) target = $region76
        $region75: #{transformer_forward.11} parent=51 // pred_region
          %412 = dma.done [#allocation13], 16
        $region76: #{transformer_forward.11} parent=51 // pred_fallthru
          _
        // Predicated region
        $region77: #{transformer_forward.11} parent=51 // pred_check
          %p413 = pneg %p197
        $region78: #{transformer_forward.11} parent=51 // pred_check_branch
          %415 = sbr.rel (%p413) target = $region80
        $region79: #{transformer_forward.11} parent=51 // pred_region
          %416 = dma.done [#allocation13], 16
        $region80: #{transformer_forward.11} parent=51 // pred_fallthru
          _
        // Predicated region
        $region81: #{transformer_forward.11} parent=51 // pred_check
          %p417 = pneg %p218
        $region82: #{transformer_forward.11} parent=51 // pred_check_branch
          %419 = sbr.rel (%p417) target = $region84
        $region83: #{transformer_forward.11} parent=51 // pred_region
          %420 = dma.done [#allocation16], 16
        $region84: #{transformer_forward.11} parent=51 // pred_fallthru
          _
        %s421 = sand.u32 %s53, 1
        %s422 = scalar_lea.sflag [#allocation4], %s421
        %s423 = sand.u32 %s53, 1
        %s424 = smul.addr %s423, 4
        %s425 = scalar_lea.vmem [#allocation3], %s424
        %p426 = pneg %p66
        %p427 = pneg %p63
        %s428 = sand.u32 %s31, 1
        %s429 = scalar_lea.sflag [#allocation7], %s428
        %s430 = sand.u32 %s79, 1
        %s431 = smul.addr %s430, 4
        %s432 = scalar_lea.vmem [#allocation6], %s431
        %p433 = pneg %p92
        %p434 = pneg %p89
        %p435 = pneg %p113
        %p436 = pneg %p110
        %p437 = pneg %p134
        %p438 = pneg %p131
        %p439 = pneg %p155
        %p440 = pneg %p152
        %p441 = pneg %p176
        %p442 = pneg %p173
        %p443 = pneg %p197
        %p444 = pneg %p194
        %p445 = pneg %p218
        %p446 = pneg %p215
        %p447 = pneg %p246
        %p448 = pneg %p243
        %s449 = sand.u32 %s233, 1
        %s450 = scalar_lea.sflag [#allocation5], %s449
        %s451 = sand.u32 %s233, 1
        %s452 = smul.addr %s451, 4
        %s453 = scalar_lea.vmem [#allocation17], %s452
        %v455 = vld [vmem:[%s383] sm:$0xf]
        %v456 = vunpack.c.l.bf16 %v455
        %v457 = vld [vmem:[%s392] sm:$0xf]
        %v458 = vld [vmem:[#allocation8] sm:$0xf]
        %v459 = vld [vmem:[#allocation8 + $0x4] sm:$0xf]
        %v460 = vld [vmem:[#allocation8 + $0x8] sm:$0xf]
        %v461 = vld [vmem:[#allocation8 + $0xc] sm:$0xf]
        %v462 = vld [vmem:[#allocation9] sm:$0x1]
        %v464 = vlaneseq
        %v465 = vshrl.u32 %v464, 7
        %v466 = vsub.s32 0, %v465
        %v467 = vrot.slane %v462, %v466
        %v473 = vunpack.c.l.b16 %v458
        %v474 = vunpack.c.l.b16 %v459
        %v475 = vunpack.c.l.b16 %v460
        %v476 = vunpack.c.l.b16 %v461
        %v477 = vpack.c.b16 %v474, %v473
        %v478 = vpack.c.b16 %v476, %v475
        %vm481 = vcmask 261120
        %v483 = vsel %vm481, %v457, 0
        %485 = vmatprep.subr.bf16.mxu0 0
        %486 = vmatpush1.bf16.msra.mxu0 %v477
        %487 = vmatprep.subr.bf16.mxu0 0
        %488 = vmatpush1.bf16.msra.mxu0 %v478
        %489 = vmatprep.subr.bf16.mxu0 0
        %490 = vmatpush1.bf16.msra.mxu0 0
        %491 = vmatprep.subr.bf16.mxu0 0
        %492 = vmatpush1.bf16.msra.mxu0 0
        %493 = vmatprep.subr.bf16.mxu0 0
        %494 = vmatpush1.bf16.msra.mxu0 0
        %495 = vmatprep.subr.bf16.mxu0 0
        %496 = vmatpush1.bf16.msra.mxu0 0
        %497 = vmatprep.subr.bf16.mxu0 0
        %498 = vmatpush1.bf16.msra.mxu0 0
        %499 = vmatprep.subr.bf16.mxu0 0
        %500 = vmatpush1.bf16.msra.mxu0 0
        %501 = vmatprep.subr.bf16.mxu0 0
        %502 = vmatpush1.bf16.msra.mxu0 0
        %503 = vmatprep.subr.bf16.mxu0 0
        %504 = vmatpush1.bf16.msra.mxu0 0
        %505 = vmatprep.subr.bf16.mxu0 0
        %506 = vmatpush1.bf16.msra.mxu0 0
        %507 = vmatprep.subr.bf16.mxu0 0
        %508 = vmatpush1.bf16.msra.mxu0 0
        %509 = vmatprep.subr.bf16.mxu0 0
        %510 = vmatpush1.bf16.msra.mxu0 0
        %511 = vmatprep.subr.bf16.mxu0 0
        %512 = vmatpush1.bf16.msra.mxu0 0
        %513 = vmatprep.subr.bf16.mxu0 0
        %514 = vmatpush1.bf16.msra.mxu0 0
        %515 = vmatprep.subr.bf16.mxu0 0
        %516 = vmatpush1.bf16.msra.mxu0 0
        %517 = vmatprep.mubr.bf16.mxu0 0
        %518 = vmatmul.mubr.bf16.gmra.mrb[0].mxu0 %v483
        %v519 = vpop.f32.mrb[0].mxu0
        %v520 = vadd.f32 %v467, %v519
        %v521 = vpop.f32.mrb[0].mxu0
        %v522 = vpop.f32.mrb[0].mxu0
        %v523 = vpop.f32.mrb[0].mxu0
        %524 = vdwg.mxu0
        %v525 = vmul.f32 %v520, 0.35355338
        %v526 = vpack.c.bf16 %v525, %v525
        %v527 = vpack.c.bf16 %v520, %v520
        %529 = vrot.lane.b32.xlu0 %v527, 96
        %v530 = vpop.permute.xlu0 %529
        %vm531 = vcmask 64512
        %v533 = vsel %vm531, %v526, 0
        %v536 = vsel %vm531, %v530, 0
        %538 = vmatprep.subr.bf16.mxu0 0
        %539 = vmatpush1.bf16.xpose.msra.mxu0 %v536
        %540 = vmatprep.subr.bf16.mxu0 0
        %541 = vmatpush1.bf16.xpose.msra.mxu0 0
        %542 = vmatprep.subr.bf16.mxu0 0
        %543 = vmatpush1.bf16.xpose.msra.mxu0 0
        %544 = vmatprep.subr.bf16.mxu0 0
        %545 = vmatpush1.bf16.xpose.msra.mxu0 0
        %546 = vmatprep.subr.bf16.mxu0 0
        %547 = vmatpush1.bf16.xpose.msra.mxu0 0
        %548 = vmatprep.subr.bf16.mxu0 0
        %549 = vmatpush1.bf16.xpose.msra.mxu0 0
        %550 = vmatprep.subr.bf16.mxu0 0
        %551 = vmatpush1.bf16.xpose.msra.mxu0 0
        %552 = vmatprep.subr.bf16.mxu0 0
        %553 = vmatpush1.bf16.xpose.msra.mxu0 0
        %554 = vmatprep.subr.bf16.mxu0 0
        %555 = vmatpush1.bf16.xpose.msra.mxu0 0
        %556 = vmatprep.subr.bf16.mxu0 0
        %557 = vmatpush1.bf16.xpose.msra.mxu0 0
        %558 = vmatprep.subr.bf16.mxu0 0
        %559 = vmatpush1.bf16.xpose.msra.mxu0 0
        %560 = vmatprep.subr.bf16.mxu0 0
        %561 = vmatpush1.bf16.xpose.msra.mxu0 0
        %562 = vmatprep.subr.bf16.mxu0 0
        %563 = vmatpush1.bf16.xpose.msra.mxu0 0
        %564 = vmatprep.subr.bf16.mxu0 0
        %565 = vmatpush1.bf16.xpose.msra.mxu0 0
        %566 = vmatprep.subr.bf16.mxu0 0
        %567 = vmatpush1.bf16.xpose.msra.mxu0 0
        %568 = vmatprep.subr.bf16.mxu0 0
        %569 = vmatpush1.bf16.xpose.msra.mxu0 0
        %570 = vmatprep.mubr.bf16.mxu0 0
        %571 = vmatmul.mubr.bf16.gmra.mrb[0].mxu0 %v533
        %v572 = vpop.f32.mrb[0].mxu0
        %v573 = vadd.f32 0.0, %v572
        %v574 = vpop.f32.mrb[0].mxu0
        %v575 = vpop.f32.mrb[0].mxu0
        %v576 = vpop.f32.mrb[0].mxu0
        %577 = vdwg.mxu0
        %v578 = vsel %vm531, %v573, -inf
        %579 = vmax.xlane.f32.xlu0 %v578
        %v580 = vpop.xlane.xlu0 %579
        %v581 = vsub.f32 %v573, %v580
        %v582 = vmul.f32 %v581, 1.442695
        %v583 = vpow.pop %v582
        %v584 = vsel %vm531, %v583, 0.0
        %585 = vadd.xlane.f32.xlu0 %v584
        %v586 = vpop.xlane.xlu0 %585
        %v587 = vrcp.pop %v586
        %v588 = vmul.f32 %v583, %v587
        %v589 = vpack.c.bf16 %v588, %v588
        %590 = vrot.lane.b32.xlu0 %v527, 64
        %v591 = vpop.permute.xlu0 %590
        %v593 = vsel %vm531, %v589, 0
        %vm595 = vcmask 1043456
        %v597 = vsel %vm595, %v591, 0
        %599 = vmatprep.subr.bf16.mxu0 0
        %600 = vmatpush1.bf16.msra.mxu0 %v597
        %601 = vmatprep.subr.bf16.mxu0 0
        %602 = vmatpush1.bf16.msra.mxu0 0
        %603 = vmatprep.subr.bf16.mxu0 0
        %604 = vmatpush1.bf16.msra.mxu0 0
        %605 = vmatprep.subr.bf16.mxu0 0
        %606 = vmatpush1.bf16.msra.mxu0 0
        %607 = vmatprep.subr.bf16.mxu0 0
        %608 = vmatpush1.bf16.msra.mxu0 0
        %609 = vmatprep.subr.bf16.mxu0 0
        %610 = vmatpush1.bf16.msra.mxu0 0
        %611 = vmatprep.subr.bf16.mxu0 0
        %612 = vmatpush1.bf16.msra.mxu0 0
        %613 = vmatprep.subr.bf16.mxu0 0
        %614 = vmatpush1.bf16.msra.mxu0 0
        %615 = vmatprep.subr.bf16.mxu0 0
        %616 = vmatpush1.bf16.msra.mxu0 0
        %617 = vmatprep.subr.bf16.mxu0 0
        %618 = vmatpush1.bf16.msra.mxu0 0
        %619 = vmatprep.subr.bf16.mxu0 0
        %620 = vmatpush1.bf16.msra.mxu0 0
        %621 = vmatprep.subr.bf16.mxu0 0
        %622 = vmatpush1.bf16.msra.mxu0 0
        %623 = vmatprep.subr.bf16.mxu0 0
        %624 = vmatpush1.bf16.msra.mxu0 0
        %625 = vmatprep.subr.bf16.mxu0 0
        %626 = vmatpush1.bf16.msra.mxu0 0
        %627 = vmatprep.subr.bf16.mxu0 0
        %628 = vmatpush1.bf16.msra.mxu0 0
        %629 = vmatprep.subr.bf16.mxu0 0
        %630 = vmatpush1.bf16.msra.mxu0 0
        %631 = vmatprep.mubr.bf16.mxu0 0
        %632 = vmatmul.mubr.bf16.gmra.mrb[0].mxu0 %v593
        %v633 = vpop.f32.mrb[0].mxu0
        %v634 = vadd.f32 0.0, %v633
        %v635 = vpop.f32.mrb[0].mxu0
        %v636 = vpop.f32.mrb[0].mxu0
        %v637 = vpop.f32.mrb[0].mxu0
        %638 = vdwg.mxu0
        %639 = vst.msk [vmem:[#allocation2] sm:$0xff] %vm531, %v634
        %641 = vrot.lane.b32.xlu0 %v526, 120
        %v642 = vpop.permute.xlu0 %641
        %643 = vrot.lane.b32.xlu0 %v527, 88
        %v644 = vpop.permute.xlu0 %643
        %v646 = vsel %vm531, %v642, 0
        %v649 = vsel %vm531, %v644, 0
        %651 = vmatprep.subr.bf16.mxu0 0
        %652 = vmatpush1.bf16.xpose.msra.mxu0 %v649
        %653 = vmatprep.subr.bf16.mxu0 0
        %654 = vmatpush1.bf16.xpose.msra.mxu0 0
        %655 = vmatprep.subr.bf16.mxu0 0
        %656 = vmatpush1.bf16.xpose.msra.mxu0 0
        %657 = vmatprep.subr.bf16.mxu0 0
        %658 = vmatpush1.bf16.xpose.msra.mxu0 0
        %659 = vmatprep.subr.bf16.mxu0 0
        %660 = vmatpush1.bf16.xpose.msra.mxu0 0
        %661 = vmatprep.subr.bf16.mxu0 0
        %662 = vmatpush1.bf16.xpose.msra.mxu0 0
        %663 = vmatprep.subr.bf16.mxu0 0
        %664 = vmatpush1.bf16.xpose.msra.mxu0 0
        %665 = vmatprep.subr.bf16.mxu0 0
        %666 = vmatpush1.bf16.xpose.msra.mxu0 0
        %667 = vmatprep.subr.bf16.mxu0 0
        %668 = vmatpush1.bf16.xpose.msra.mxu0 0
        %669 = vmatprep.subr.bf16.mxu0 0
        %670 = vmatpush1.bf16.xpose.msra.mxu0 0
        %671 = vmatprep.subr.bf16.mxu0 0
        %672 = vmatpush1.bf16.xpose.msra.mxu0 0
        %673 = vmatprep.subr.bf16.mxu0 0
        %674 = vmatpush1.bf16.xpose.msra.mxu0 0
        %675 = vmatprep.subr.bf16.mxu0 0
        %676 = vmatpush1.bf16.xpose.msra.mxu0 0
        %677 = vmatprep.subr.bf16.mxu0 0
        %678 = vmatpush1.bf16.xpose.msra.mxu0 0
        %679 = vmatprep.subr.bf16.mxu0 0
        %680 = vmatpush1.bf16.xpose.msra.mxu0 0
        %681 = vmatprep.subr.bf16.mxu0 0
        %682 = vmatpush1.bf16.xpose.msra.mxu0 0
        %683 = vmatprep.mubr.bf16.mxu0 0
        %684 = vmatmul.mubr.bf16.gmra.mrb[0].mxu0 %v646
        %v685 = vpop.f32.mrb[0].mxu0
        %v686 = vadd.f32 0.0, %v685
        %v687 = vpop.f32.mrb[0].mxu0
        %v688 = vpop.f32.mrb[0].mxu0
        %v689 = vpop.f32.mrb[0].mxu0
        %690 = vdwg.mxu0
        %v691 = vsel %vm531, %v686, -inf
        %692 = vmax.xlane.f32.xlu0 %v691
        %v693 = vpop.xlane.xlu0 %692
        %v694 = vsub.f32 %v686, %v693
        %v695 = vmul.f32 %v694, 1.442695
        %v696 = vpow.pop %v695
        %v697 = vsel %vm531, %v696, 0.0
        %698 = vadd.xlane.f32.xlu0 %v697
        %v699 = vpop.xlane.xlu0 %698
        %v700 = vrcp.pop %v699
        %v701 = vmul.f32 %v696, %v700
        %v702 = vpack.c.bf16 %v701, %v701
        %703 = vrot.lane.b32.xlu0 %v527, 56
        %v704 = vpop.permute.xlu0 %703
        %v706 = vsel %vm531, %v702, 0
        %v709 = vsel %vm595, %v704, 0
        %711 = vmatprep.subr.bf16.mxu0 0
        %712 = vmatpush1.bf16.msra.mxu0 %v709
        %713 = vmatprep.subr.bf16.mxu0 0
        %714 = vmatpush1.bf16.msra.mxu0 0
        %715 = vmatprep.subr.bf16.mxu0 0
        %716 = vmatpush1.bf16.msra.mxu0 0
        %717 = vmatprep.subr.bf16.mxu0 0
        %718 = vmatpush1.bf16.msra.mxu0 0
        %719 = vmatprep.subr.bf16.mxu0 0
        %720 = vmatpush1.bf16.msra.mxu0 0
        %721 = vmatprep.subr.bf16.mxu0 0
        %722 = vmatpush1.bf16.msra.mxu0 0
        %723 = vmatprep.subr.bf16.mxu0 0
        %724 = vmatpush1.bf16.msra.mxu0 0
        %725 = vmatprep.subr.bf16.mxu0 0
        %726 = vmatpush1.bf16.msra.mxu0 0
        %727 = vmatprep.subr.bf16.mxu0 0
        %728 = vmatpush1.bf16.msra.mxu0 0
        %729 = vmatprep.subr.bf16.mxu0 0
        %730 = vmatpush1.bf16.msra.mxu0 0
        %731 = vmatprep.subr.bf16.mxu0 0
        %732 = vmatpush1.bf16.msra.mxu0 0
        %733 = vmatprep.subr.bf16.mxu0 0
        %734 = vmatpush1.bf16.msra.mxu0 0
        %735 = vmatprep.subr.bf16.mxu0 0
        %736 = vmatpush1.bf16.msra.mxu0 0
        %737 = vmatprep.subr.bf16.mxu0 0
        %738 = vmatpush1.bf16.msra.mxu0 0
        %739 = vmatprep.subr.bf16.mxu0 0
        %740 = vmatpush1.bf16.msra.mxu0 0
        %741 = vmatprep.subr.bf16.mxu0 0
        %742 = vmatpush1.bf16.msra.mxu0 0
        %743 = vmatprep.mubr.bf16.mxu0 0
        %744 = vmatmul.mubr.bf16.gmra.mrb[0].mxu0 %v706
        %v745 = vpop.f32.mrb[0].mxu0
        %v746 = vadd.f32 0.0, %v745
        %v747 = vpop.f32.mrb[0].mxu0
        %v748 = vpop.f32.mrb[0].mxu0
        %v749 = vpop.f32.mrb[0].mxu0
        %750 = vdwg.mxu0
        %752 = vrot.lane.b32.xlu0 %v746, 8
        %v753 = vpop.permute.xlu0 %752
        %vm755 = vcmask 130112
        %756 = vst.msk [vmem:[#allocation2] sm:$0xff] %vm755, %v753
        %757 = vrot.lane.b32.xlu0 %v526, 112
        %v758 = vpop.permute.xlu0 %757
        %759 = vrot.lane.b32.xlu0 %v527, 80
        %v760 = vpop.permute.xlu0 %759
        %v762 = vsel %vm531, %v758, 0
        %v765 = vsel %vm531, %v760, 0
        %767 = vmatprep.subr.bf16.mxu0 0
        %768 = vmatpush1.bf16.xpose.msra.mxu0 %v765
        %769 = vmatprep.subr.bf16.mxu0 0
        %770 = vmatpush1.bf16.xpose.msra.mxu0 0
        %771 = vmatprep.subr.bf16.mxu0 0
        %772 = vmatpush1.bf16.xpose.msra.mxu0 0
        %773 = vmatprep.subr.bf16.mxu0 0
        %774 = vmatpush1.bf16.xpose.msra.mxu0 0
        %775 = vmatprep.subr.bf16.mxu0 0
        %776 = vmatpush1.bf16.xpose.msra.mxu0 0
        %777 = vmatprep.subr.bf16.mxu0 0
        %778 = vmatpush1.bf16.xpose.msra.mxu0 0
        %779 = vmatprep.subr.bf16.mxu0 0
        %780 = vmatpush1.bf16.xpose.msra.mxu0 0
        %781 = vmatprep.subr.bf16.mxu0 0
        %782 = vmatpush1.bf16.xpose.msra.mxu0 0
        %783 = vmatprep.subr.bf16.mxu0 0
        %784 = vmatpush1.bf16.xpose.msra.mxu0 0
        %785 = vmatprep.subr.bf16.mxu0 0
        %786 = vmatpush1.bf16.xpose.msra.mxu0 0
        %787 = vmatprep.subr.bf16.mxu0 0
        %788 = vmatpush1.bf16.xpose.msra.mxu0 0
        %789 = vmatprep.subr.bf16.mxu0 0
        %790 = vmatpush1.bf16.xpose.msra.mxu0 0
        %791 = vmatprep.subr.bf16.mxu0 0
        %792 = vmatpush1.bf16.xpose.msra.mxu0 0
        %793 = vmatprep.subr.bf16.mxu0 0
        %794 = vmatpush1.bf16.xpose.msra.mxu0 0
        %795 = vmatprep.subr.bf16.mxu0 0
        %796 = vmatpush1.bf16.xpose.msra.mxu0 0
        %797 = vmatprep.subr.bf16.mxu0 0
        %798 = vmatpush1.bf16.xpose.msra.mxu0 0
        %799 = vmatprep.mubr.bf16.mxu0 0
        %800 = vmatmul.mubr.bf16.gmra.mrb[0].mxu0 %v762
        %v801 = vpop.f32.mrb[0].mxu0
        %v802 = vadd.f32 0.0, %v801
        %v803 = vpop.f32.mrb[0].mxu0
        %v804 = vpop.f32.mrb[0].mxu0
        %v805 = vpop.f32.mrb[0].mxu0
        %806 = vdwg.mxu0
        %v807 = vsel %vm531, %v802, -inf
        %808 = vmax.xlane.f32.xlu0 %v807
        %v809 = vpop.xlane.xlu0 %808
        %v810 = vsub.f32 %v802, %v809
        %v811 = vmul.f32 %v810, 1.442695
        %v812 = vpow.pop %v811
        %v813 = vsel %vm531, %v812, 0.0
        %814 = vadd.xlane.f32.xlu0 %v813
        %v815 = vpop.xlane.xlu0 %814
        %v816 = vrcp.pop %v815
        %v817 = vmul.f32 %v812, %v816
        %v818 = vpack.c.bf16 %v817, %v817
        %819 = vrot.lane.b32.xlu0 %v527, 48
        %v820 = vpop.permute.xlu0 %819
        %v822 = vsel %vm531, %v818, 0
        %v825 = vsel %vm595, %v820, 0
        %827 = vmatprep.subr.bf16.mxu0 0
        %828 = vmatpush1.bf16.msra.mxu0 %v825
        %829 = vmatprep.subr.bf16.mxu0 0
        %830 = vmatpush1.bf16.msra.mxu0 0
        %831 = vmatprep.subr.bf16.mxu0 0
        %832 = vmatpush1.bf16.msra.mxu0 0
        %833 = vmatprep.subr.bf16.mxu0 0
        %834 = vmatpush1.bf16.msra.mxu0 0
        %835 = vmatprep.subr.bf16.mxu0 0
        %836 = vmatpush1.bf16.msra.mxu0 0
        %837 = vmatprep.subr.bf16.mxu0 0
        %838 = vmatpush1.bf16.msra.mxu0 0
        %839 = vmatprep.subr.bf16.mxu0 0
        %840 = vmatpush1.bf16.msra.mxu0 0
        %841 = vmatprep.subr.bf16.mxu0 0
        %842 = vmatpush1.bf16.msra.mxu0 0
        %843 = vmatprep.subr.bf16.mxu0 0
        %844 = vmatpush1.bf16.msra.mxu0 0
        %845 = vmatprep.subr.bf16.mxu0 0
        %846 = vmatpush1.bf16.msra.mxu0 0
        %847 = vmatprep.subr.bf16.mxu0 0
        %848 = vmatpush1.bf16.msra.mxu0 0
        %849 = vmatprep.subr.bf16.mxu0 0
        %850 = vmatpush1.bf16.msra.mxu0 0
        %851 = vmatprep.subr.bf16.mxu0 0
        %852 = vmatpush1.bf16.msra.mxu0 0
        %853 = vmatprep.subr.bf16.mxu0 0
        %854 = vmatpush1.bf16.msra.mxu0 0
        %855 = vmatprep.subr.bf16.mxu0 0
        %856 = vmatpush1.bf16.msra.mxu0 0
        %857 = vmatprep.subr.bf16.mxu0 0
        %858 = vmatpush1.bf16.msra.mxu0 0
        %859 = vmatprep.mubr.bf16.mxu0 0
        %860 = vmatmul.mubr.bf16.gmra.mrb[0].mxu0 %v822
        %v861 = vpop.f32.mrb[0].mxu0
        %v862 = vadd.f32 0.0, %v861
        %v863 = vpop.f32.mrb[0].mxu0
        %v864 = vpop.f32.mrb[0].mxu0
        %v865 = vpop.f32.mrb[0].mxu0
        %866 = vdwg.mxu0
        %868 = vrot.lane.b32.xlu0 %v862, 16
        %v869 = vpop.permute.xlu0 %868
        %vm871 = vcmask 195712
        %872 = vst.msk [vmem:[#allocation2] sm:$0xff] %vm871, %v869
        %873 = vrot.lane.b32.xlu0 %v526, 104
        %v874 = vpop.permute.xlu0 %873
        %875 = vrot.lane.b32.xlu0 %v527, 72
        %v876 = vpop.permute.xlu0 %875
        %v878 = vsel %vm531, %v874, 0
        %v881 = vsel %vm531, %v876, 0
        %883 = vmatprep.subr.bf16.mxu0 0
        %884 = vmatpush1.bf16.xpose.msra.mxu0 %v881
        %885 = vmatprep.subr.bf16.mxu0 0
        %886 = vmatpush1.bf16.xpose.msra.mxu0 0
        %887 = vmatprep.subr.bf16.mxu0 0
        %888 = vmatpush1.bf16.xpose.msra.mxu0 0
        %889 = vmatprep.subr.bf16.mxu0 0
        %890 = vmatpush1.bf16.xpose.msra.mxu0 0
        %891 = vmatprep.subr.bf16.mxu0 0
        %892 = vmatpush1.bf16.xpose.msra.mxu0 0
        %893 = vmatprep.subr.bf16.mxu0 0
        %894 = vmatpush1.bf16.xpose.msra.mxu0 0
        %895 = vmatprep.subr.bf16.mxu0 0
        %896 = vmatpush1.bf16.xpose.msra.mxu0 0
        %897 = vmatprep.subr.bf16.mxu0 0
        %898 = vmatpush1.bf16.xpose.msra.mxu0 0
        %899 = vmatprep.subr.bf16.mxu0 0
        %900 = vmatpush1.bf16.xpose.msra.mxu0 0
        %901 = vmatprep.subr.bf16.mxu0 0
        %902 = vmatpush1.bf16.xpose.msra.mxu0 0
        %903 = vmatprep.subr.bf16.mxu0 0
        %904 = vmatpush1.bf16.xpose.msra.mxu0 0
        %905 = vmatprep.subr.bf16.mxu0 0
        %906 = vmatpush1.bf16.xpose.msra.mxu0 0
        %907 = vmatprep.subr.bf16.mxu0 0
        %908 = vmatpush1.bf16.xpose.msra.mxu0 0
        %909 = vmatprep.subr.bf16.mxu0 0
        %910 = vmatpush1.bf16.xpose.msra.mxu0 0
        %911 = vmatprep.subr.bf16.mxu0 0
        %912 = vmatpush1.bf16.xpose.msra.mxu0 0
        %913 = vmatprep.subr.bf16.mxu0 0
        %914 = vmatpush1.bf16.xpose.msra.mxu0 0
        %915 = vmatprep.mubr.bf16.mxu0 0
        %916 = vmatmul.mubr.bf16.gmra.mrb[0].mxu0 %v878
        %v917 = vpop.f32.mrb[0].mxu0
        %v918 = vadd.f32 0.0, %v917
        %v919 = vpop.f32.mrb[0].mxu0
        %v920 = vpop.f32.mrb[0].mxu0
        %v921 = vpop.f32.mrb[0].mxu0
        %922 = vdwg.mxu0
        %v923 = vsel %vm531, %v918, -inf
        %924 = vmax.xlane.f32.xlu0 %v923
        %v925 = vpop.xlane.xlu0 %924
        %v926 = vsub.f32 %v918, %v925
        %v927 = vmul.f32 %v926, 1.442695
        %v928 = vpow.pop %v927
        %v929 = vsel %vm531, %v928, 0.0
        %930 = vadd.xlane.f32.xlu0 %v929
        %v931 = vpop.xlane.xlu0 %930
        %v932 = vrcp.pop %v931
        %v933 = vmul.f32 %v928, %v932
        %v934 = vpack.c.bf16 %v933, %v933
        %935 = vrot.lane.b32.xlu0 %v527, 40
        %v936 = vpop.permute.xlu0 %935
        %v938 = vsel %vm531, %v934, 0
        %v941 = vsel %vm595, %v936, 0
        %943 = vmatprep.subr.bf16.mxu0 0
        %944 = vmatpush1.bf16.msra.mxu0 %v941
        %945 = vmatprep.subr.bf16.mxu0 0
        %946 = vmatpush1.bf16.msra.mxu0 0
        %947 = vmatprep.subr.bf16.mxu0 0
        %948 = vmatpush1.bf16.msra.mxu0 0
        %949 = vmatprep.subr.bf16.mxu0 0
        %950 = vmatpush1.bf16.msra.mxu0 0
        %951 = vmatprep.subr.bf16.mxu0 0
        %952 = vmatpush1.bf16.msra.mxu0 0
        %953 = vmatprep.subr.bf16.mxu0 0
        %954 = vmatpush1.bf16.msra.mxu0 0
        %955 = vmatprep.subr.bf16.mxu0 0
        %956 = vmatpush1.bf16.msra.mxu0 0
        %957 = vmatprep.subr.bf16.mxu0 0
        %958 = vmatpush1.bf16.msra.mxu0 0
        %959 = vmatprep.subr.bf16.mxu0 0
        %960 = vmatpush1.bf16.msra.mxu0 0
        %961 = vmatprep.subr.bf16.mxu0 0
        %962 = vmatpush1.bf16.msra.mxu0 0
        %963 = vmatprep.subr.bf16.mxu0 0
        %964 = vmatpush1.bf16.msra.mxu0 0
        %965 = vmatprep.subr.bf16.mxu0 0
        %966 = vmatpush1.bf16.msra.mxu0 0
        %967 = vmatprep.subr.bf16.mxu0 0
        %968 = vmatpush1.bf16.msra.mxu0 0
        %969 = vmatprep.subr.bf16.mxu0 0
        %970 = vmatpush1.bf16.msra.mxu0 0
        %971 = vmatprep.subr.bf16.mxu0 0
        %972 = vmatpush1.bf16.msra.mxu0 0
        %973 = vmatprep.subr.bf16.mxu0 0
        %974 = vmatpush1.bf16.msra.mxu0 0
        %975 = vmatprep.mubr.bf16.mxu0 0
        %976 = vmatmul.mubr.bf16.gmra.mrb[0].mxu0 %v938
        %v977 = vpop.f32.mrb[0].mxu0
        %v978 = vadd.f32 0.0, %v977
        %v979 = vpop.f32.mrb[0].mxu0
        %v980 = vpop.f32.mrb[0].mxu0
        %v981 = vpop.f32.mrb[0].mxu0
        %982 = vdwg.mxu0
        %984 = vrot.lane.b32.xlu0 %v978, 24
        %v985 = vpop.permute.xlu0 %984
        %vm987 = vcmask 261312
        %988 = vst.msk [vmem:[#allocation2] sm:$0xff] %vm987, %v985
        %v989 = vld [vmem:[#allocation2] sm:$0xff]
        %v990 = vpack.c.bf16 %v989, %v989
        %v991 = vld [vmem:[#allocation11] sm:$0xf]
        %v992 = vld [vmem:[#allocation11 + $0x4] sm:$0xf]
        %v993 = vld [vmem:[#allocation11 + $0x8] sm:$0xf]
        %v994 = vld [vmem:[#allocation11 + $0xc] sm:$0xf]
        %v995 = vld [vmem:[#allocation12] sm:$0x1]
        %v997 = vlaneseq
        %v998 = vshrl.u32 %v997, 7
        %v999 = vsub.s32 0, %v998
        %v1000 = vrot.slane %v995, %v999
        %v1006 = vunpack.c.l.b16 %v991
        %v1007 = vunpack.c.l.b16 %v992
        %v1008 = vunpack.c.l.b16 %v993
        %v1009 = vunpack.c.l.b16 %v994
        %v1010 = vpack.c.b16 %v1007, %v1006
        %v1011 = vpack.c.b16 %v1009, %v1008
        %v1015 = vsel %vm481, %v990, 0
        %1017 = vmatprep.subr.bf16.mxu0 0
        %1018 = vmatpush1.bf16.msra.mxu0 %v1010
        %1019 = vmatprep.subr.bf16.mxu0 0
        %1020 = vmatpush1.bf16.msra.mxu0 %v1011
        %1021 = vmatprep.subr.bf16.mxu0 0
        %1022 = vmatpush1.bf16.msra.mxu0 0
        %1023 = vmatprep.subr.bf16.mxu0 0
        %1024 = vmatpush1.bf16.msra.mxu0 0
        %1025 = vmatprep.subr.bf16.mxu0 0
        %1026 = vmatpush1.bf16.msra.mxu0 0
        %1027 = vmatprep.subr.bf16.mxu0 0
        %1028 = vmatpush1.bf16.msra.mxu0 0
        %1029 = vmatprep.subr.bf16.mxu0 0
        %1030 = vmatpush1.bf16.msra.mxu0 0
        %1031 = vmatprep.subr.bf16.mxu0 0
        %1032 = vmatpush1.bf16.msra.mxu0 0
        %1033 = vmatprep.subr.bf16.mxu0 0
        %1034 = vmatpush1.bf16.msra.mxu0 0
        %1035 = vmatprep.subr.bf16.mxu0 0
        %1036 = vmatpush1.bf16.msra.mxu0 0
        %1037 = vmatprep.subr.bf16.mxu0 0
        %1038 = vmatpush1.bf16.msra.mxu0 0
        %1039 = vmatprep.subr.bf16.mxu0 0
        %1040 = vmatpush1.bf16.msra.mxu0 0
        %1041 = vmatprep.subr.bf16.mxu0 0
        %1042 = vmatpush1.bf16.msra.mxu0 0
        %1043 = vmatprep.subr.bf16.mxu0 0
        %1044 = vmatpush1.bf16.msra.mxu0 0
        %1045 = vmatprep.subr.bf16.mxu0 0
        %1046 = vmatpush1.bf16.msra.mxu0 0
        %1047 = vmatprep.subr.bf16.mxu0 0
        %1048 = vmatpush1.bf16.msra.mxu0 0
        %1049 = vmatprep.mubr.bf16.mxu0 0
        %1050 = vmatmul.mubr.bf16.gmra.mrb[0].mxu0 %v1015
        %v1051 = vpop.f32.mrb[0].mxu0
        %v1052 = vadd.f32 %v1000, %v1051
        %v1053 = vpop.f32.mrb[0].mxu0
        %v1054 = vpop.f32.mrb[0].mxu0
        %v1055 = vpop.f32.mrb[0].mxu0
        %1056 = vdwg.mxu0
        %v1057 = vadd.f32 %v456, %v1052
        %v1058 = vsel %vm481, %v1057, 0.0
        %1059 = vadd.xlane.f32.xlu0 %v1058
        %v1060 = vpop.xlane.xlu0 %1059
        %v1061 = vrcp.pop 32.0
        %v1062 = vmul.f32 %v1060, %v1061
        %v1063 = vsub.f32 %v1057, %v1062
        %v1064 = vmul.f32 %v1063, %v1063
        %v1065 = vsel %vm481, %v1064, 0.0
        %1066 = vadd.xlane.f32.xlu0 %v1065
        %v1067 = vpop.xlane.xlu0 %1066
        %v1068 = vmul.f32 %v1067, %v1061
        %v1069 = vadd.f32 %v1068, 1e-05
        %v1070 = vrsqrt.pop %v1069
        %v1071 = vmul.f32 %v1063, %v1070
        %v1072 = vld [vmem:[#allocation14] sm:$0x1]
        %v1074 = vlaneseq
        %v1075 = vshrl.u32 %v1074, 7
        %v1076 = vsub.s32 0, %v1075
        %v1077 = vrot.slane %v1072, %v1076
        %v1079 = vmul.f32 %v1071, %v1077
        %v1080 = vld [vmem:[#allocation15] sm:$0x1]
        %v1082 = vlaneseq
        %v1083 = vshrl.u32 %v1082, 7
        %v1084 = vsub.s32 0, %v1083
        %v1085 = vrot.slane %v1080, %v1084
        %v1087 = vadd.f32 %v1079, %v1085
        %v1088 = vpack.c.bf16 %v1087, %v1087
        %vm1089 = vcmask 257024
        %1090 = vst.msk [vmem:[%s453] sm:$0xf] %vm1089, %v1088
        %s1091 = sand.u32 %s233, 1
        %s1092 = scalar_lea.sflag [#allocation5], %s1091
        %s1093 = sand.u32 %s233, 1
        %s1094 = smul.addr %s1093, 4
        %s1095 = scalar_lea.vmem [#allocation17], %s1094
        // Predicated region
        $region85: #{transformer_forward.11} parent=51 // pred_check
          %p1096 = pneg %p243
        $region86: #{transformer_forward.11} parent=51 // pred_check_branch
          %1098 = sbr.rel (%p1096) target = $region88
        $region87: #{transformer_forward.11} parent=51 // pred_region
          %s1100 = ssub.s32 64, 64
          %1101 = vsyncadd %s1092, %s1100
          %s1102 = sadd.s32 %s36, %s35
          %s1103 = smul.addr %s1102, 64
          %s1104 = scalar_lea.hbm %s8, %s1103
          %s1106 = sshll.u32 %s1095, 4
          %s1107 = int_to_ptr.vmem [resolvable:$true] %s1106
          %1109 = dma.vmem_to_hbm [thread:$0]  %s1107, 64, %s1104, %s1092
        $region88: #{transformer_forward.11} parent=51 // pred_fallthru
          _
      $region52: #{transformer_forward.11} parent=5 // pred_fallthru
        _
      %p1110 = scmp.le.s32.totalorder 2, %s26
      // Predicated region
      $region89: #{transformer_forward.11} parent=5 // pred_check
        %p1111 = pneg %p1110
      $region90: #{transformer_forward.11} parent=5 // pred_check_branch
        %1113 = sbr.rel (%p1111) target = $region92
      $region91: #{transformer_forward.11} parent=5 // pred_region
        %s1114 = ssub.s32 %s26, 2
        // Predicated region
        $region93: #{transformer_forward.11} parent=91 // pred_check
          %p1115 = pneg %p249
        $region94: #{transformer_forward.11} parent=91 // pred_check_branch
          %1117 = sbr.rel (%p1115) target = $region96
        $region95: #{transformer_forward.11} parent=91 // pred_region
          %s1118 = sand.u32 %s234, 1
          %s1119 = scalar_lea.sflag [#allocation5], %s1118
          %s1120 = sand.u32 %s234, 1
          %s1121 = smul.addr %s1120, 4
          %s1122 = scalar_lea.vmem [#allocation17], %s1121
          %1123 = dma.done %s1119, 64
        $region96: #{transformer_forward.11} parent=91 // pred_fallthru
          _
      $region92: #{transformer_forward.11} parent=5 // pred_fallthru
        _
    $region6: #{transformer_forward.11} parent=1 // loop_footer
      %s30 = sadd.s32 1, %s26
    $region7: #{transformer_forward.11} parent=1 // loop_footer_branch
      %25 = sbr.rel target = $region3
    $region8: #{transformer_forward.11} parent=1 // loop_exit
      _
    %1124 = vsyncpa [#allocation4], 1
    %s1125 = scalar_lea.sflag [#allocation4], 1
    %1126 = vsyncpa %s1125, 1
    %1127 = vsyncpa [#allocation7], 1
    %s1128 = scalar_lea.sflag [#allocation7], 1
    %1129 = vsyncpa %s1128, 1
    %1130 = vsyncpa [#allocation10], 1
    %1131 = vsyncpa [#allocation13], 1
    %1132 = vsyncpa [#allocation16], 1
    %1133 = vsyncpa [#allocation5], 1
    %s1134 = scalar_lea.sflag [#allocation5], 1
    %1135 = vsyncpa %s1134, 1

// kernel: transformer_forward.15
$region0: #{transformer_forward.15}
  #allocation0 [shape = 'u32[]', space=smem, size = 0x4, offset = 0x4, fixed_abs, tag = 'smem constant byte address 0x4 - core index']
  #allocation1 [shape = 'u32[144,128]{1,0:T(1,128)}', space=vmem, size = 0x12000, scoped, tag = 'internal scratch']
  #allocation2 [shape = 'f32[8,32]{1,0:T(8,128)}', space=vmem, size = 0x1000, scoped, tag = 'scratch operand']
  %s0 = inlined_call_operand.hbm [shape: bf16[2,8,32], index: 0, kind: input, shape index: {}, may-alias: {0,1}]
  %s1 = inlined_call_operand.hbm [shape: bf16[2,8,32], index: 1, kind: input, shape index: {}, may-alias: {0,1}]
  %s2 = inlined_call_operand.hbm [shape: bf16[32,96], index: 2, kind: input, shape index: {}]
  %s3 = inlined_call_operand.hbm [shape: f32[1,96], index: 3, kind: input, shape index: {}]
  %s4 = inlined_call_operand.hbm [shape: bf16[32,32], index: 4, kind: input, shape index: {}]
  %s5 = inlined_call_operand.hbm [shape: f32[1,32], index: 5, kind: input, shape index: {}]
  %s6 = inlined_call_operand.hbm [shape: f32[1,32], index: 6, kind: input, shape index: {}]
  %s7 = inlined_call_operand.hbm [shape: f32[1,32], index: 7, kind: input, shape index: {}]
  %s8 = inlined_call_operand.hbm [shape: bf16[2,8,32], index: 8, kind: output, shape index: {}]
  %s9 = sld [smem:[#allocation0]]
  $region97: #{transformer_forward.15} parent=0
    _
  %s11 = ssub.s32 1, %s9
  %s12 = scalar_select 0, %s11, %s9
  $region1: #{transformer_forward.15} parent=0
    #allocation3 [shape = 'u8[4096]{0}', space=vmem, size = 0x1000, scoped, tag = 'input window, operand 0']
    #allocation4 [shape = 's32[2]{0}', space=sflag, size = 0x8, scoped, tag = 'scoped memory for transformer_forward.15']
    #allocation5 [shape = 's32[2]{0}', space=sflag, size = 0x8, scoped, tag = 'scoped memory for transformer_forward.15']
    #allocation6 [shape = 'u8[4096]{0}', space=vmem, size = 0x1000, scoped, tag = 'input window, operand 1']
    #allocation7 [shape = 's32[2]{0}', space=sflag, size = 0x8, scoped, tag = 'scoped memory for transformer_forward.15']
    #allocation8 [shape = 'u8[8192]{0}', space=vmem, size = 0x2000, scoped, tag = 'input window, operand 2, single buffered']
    #allocation9 [shape = 'u8[512]{0}', space=vmem, size = 0x400, scoped, tag = 'input window, operand 3, single buffered']
    #allocation10 [shape = 's32[1]{0}', space=sflag, size = 0x4, scoped, tag = 'scoped memory for transformer_forward.15']
    #allocation11 [shape = 'u8[8192]{0}', space=vmem, size = 0x2000, scoped, tag = 'input window, operand 4, single buffered']
    #allocation12 [shape = 'u8[512]{0}', space=vmem, size = 0x400, scoped, tag = 'input window, operand 5, single buffered']
    #allocation13 [shape = 's32[1]{0}', space=sflag, size = 0x4, scoped, tag = 'scoped memory for transformer_forward.15']
    #allocation14 [shape = 'u8[512]{0}', space=vmem, size = 0x400, scoped, tag = 'input window, operand 6, single buffered']
    #allocation15 [shape = 'u8[512]{0}', space=vmem, size = 0x400, scoped, tag = 'input window, operand 7, single buffered']
    #allocation16 [shape = 's32[1]{0}', space=sflag, size = 0x4, scoped, tag = 'scoped memory for transformer_forward.15']
    #allocation17 [shape = 'u8[4096]{0}', space=vmem, size = 0x1000, scoped, tag = 'output window, operand 0']
    %13 = vsyncpa [#allocation4], 0
    %s14 = scalar_lea.sflag [#allocation4], 1
    %15 = vsyncpa %s14, 0
    %16 = vsyncpa [#allocation7], 0
    %s17 = scalar_lea.sflag [#allocation7], 1
    %18 = vsyncpa %s17, 0
    %19 = vsyncpa [#allocation10], 0
    %20 = vsyncpa [#allocation13], 0
    %21 = vsyncpa [#allocation16], 0
    %22 = vsyncpa [#allocation5], 0
    %s23 = scalar_lea.sflag [#allocation5], 1
    %24 = vsyncpa %s23, 0
    loop: start=0, step=1, limit=4
    $region2: #{transformer_forward.15} parent=1 // loop_pre_header
      _
    $region3: #{transformer_forward.15} parent=1 // loop_header
      %s26 = sphi 0, %s30
      %p27 = scmp.ge.s32.totalorder %s26, 4
      %s33 = sphi 0, %s45
      %s34 = sphi 0, %s41
      %s35 = sphi 0, %s33
      %s36 = sphi 0, %s34
      %s37 = sphi 0, %s35
      %s38 = sphi 0, %s36
      %s50 = sphi 0, %s52
      %s53 = sphi 0, %s50
      %s54 = sphi 0, %s53
      %s70 = sphi 0, %s54
      %s76 = sphi 0, %s78
      %s79 = sphi 0, %s76
      %s80 = sphi 0, %s79
      %s96 = sphi 0, %s80
      %s100 = sphi 0, %s100
      %s102 = sphi 0, %s100
      %s103 = sphi 0, %s102
      %s117 = sphi 0, %s103
      %s121 = sphi 0, %s121
      %s123 = sphi 0, %s121
      %s124 = sphi 0, %s123
      %s138 = sphi 0, %s124
      %s142 = sphi 0, %s142
      %s144 = sphi 0, %s142
      %s145 = sphi 0, %s144
      %s159 = sphi 0, %s145
      %s163 = sphi 0, %s163
      %s165 = sphi 0, %s163
      %s166 = sphi 0, %s165
      %s180 = sphi 0, %s166
      %s184 = sphi 0, %s184
      %s186 = sphi 0, %s184
      %s187 = sphi 0, %s186
      %s201 = sphi 0, %s187
      %s205 = sphi 0, %s205
      %s207 = sphi 0, %s205
      %s208 = sphi 0, %s207
      %s222 = sphi 0, %s208
      %s230 = sphi 0, %s232
      %s233 = sphi 0, %s230
      %s234 = sphi 0, %s233
      %s250 = sphi 0, %s234
    $region4: #{transformer_forward.15} parent=1 // loop_header_branch
      %29 = sbr.rel (%p27) target = $region8
    $region5: #{transformer_forward.15} parent=1 // loop_body
      %s31 = ssub.s32 %s26, 1
      %s32 = ssub.s32 %s26, 2
      %s39 = sadd.s32 1, %s34
      %p40 = scmp.ge.s32.totalorder %s39, 1
      %s41 = scalar_select %p40, 0, %s39
      %s42 = sadd.s32 1, %s33
      %s43 = scalar_select %p40, %s42, %s33
      %p44 = scmp.ge.s32.totalorder %s43, 2
      %s45 = scalar_select %p44, 0, %s43
      %s46 = ssub.s32 %s33, %s45
      %s47 = ssub.s32 %s34, %s41
      %s48 = sor.u32 %s46, %s47
      %p49 = scmp.eq.s32.totalorder %s48, 0
      %s51 = sadd.s32 %s50, 1
      %s52 = scalar_select %p49, %s50, %s51
      %p55 = pneg %p49
      %p56 = scmp.eq.s32.totalorder %s26, 1
      %p57 = por %p55, %p56
      %p58 = scmp.ne.s32.totalorder %s50, %s53
      %p59 = scmp.eq.s32.totalorder %s26, 0
      %p60 = por %p58, %p59
      %p61 = scmp.ne.s32.totalorder %s50, %s53
      %p62 = scmp.eq.s32.totalorder %s31, 1
      %p63 = por %p61, %p62
      %p64 = scmp.ne.s32.totalorder %s53, %s54
      %p65 = scmp.eq.s32.totalorder %s31, 0
      %p66 = por %p64, %p65
      %p67 = scmp.ne.s32.totalorder %s53, %s54
      %p68 = scmp.eq.s32.totalorder %s32, 1
      %p69 = por %p67, %p68
      %p71 = scmp.ne.s32.totalorder %s54, %s70
      %p72 = scmp.eq.s32.totalorder %s32, 0
      %p73 = por %p71, %p72
      %s74 = ssub.s32 %s33, %s45
      %p75 = scmp.eq.s32.totalorder %s74, 0
      %s77 = sadd.s32 %s76, 1
      %s78 = scalar_select %p75, %s76, %s77
      %p81 = pneg %p75
      %p82 = scmp.eq.s32.totalorder %s26, 1
      %p83 = por %p81, %p82
      %p84 = scmp.ne.s32.totalorder %s76, %s79
      %p85 = scmp.eq.s32.totalorder %s26, 0
      %p86 = por %p84, %p85
      %p87 = scmp.ne.s32.totalorder %s76, %s79
      %p88 = scmp.eq.s32.totalorder %s31, 1
      %p89 = por %p87, %p88
      %p90 = scmp.ne.s32.totalorder %s79, %s80
      %p91 = scmp.eq.s32.totalorder %s31, 0
      %p92 = por %p90, %p91
      %p93 = scmp.ne.s32.totalorder %s79, %s80
      %p94 = scmp.eq.s32.totalorder %s32, 1
      %p95 = por %p93, %p94
      %p97 = scmp.ne.s32.totalorder %s80, %s96
      %p98 = scmp.eq.s32.totalorder %s32, 0
      %p99 = por %p97, %p98
      %s101 = sadd.s32 %s100, 1
      %p104 = scmp.eq.s32.totalorder %s26, 1
      %p105 = scmp.ne.s32.totalorder %s100, %s102
      %p106 = scmp.eq.s32.totalorder %s26, 0
      %p107 = por %p105, %p106
      %p108 = scmp.ne.s32.totalorder %s100, %s102
      %p109 = scmp.eq.s32.totalorder %s31, 1
      %p110 = por %p108, %p109
      %p111 = scmp.ne.s32.totalorder %s102, %s103
      %p112 = scmp.eq.s32.totalorder %s31, 0
      %p113 = por %p111, %p112
      %p114 = scmp.ne.s32.totalorder %s102, %s103
      %p115 = scmp.eq.s32.totalorder %s32, 1
      %p116 = por %p114, %p115
      %p118 = scmp.ne.s32.totalorder %s103, %s117
      %p119 = scmp.eq.s32.totalorder %s32, 0
      %p120 = por %p118, %p119
      %s122 = sadd.s32 %s121, 1
      %p125 = scmp.eq.s32.totalorder %s26, 1
      %p126 = scmp.ne.s32.totalorder %s121, %s123
      %p127 = scmp.eq.s32.totalorder %s26, 0
      %p128 = por %p126, %p127
      %p129 = scmp.ne.s32.totalorder %s121, %s123
      %p130 = scmp.eq.s32.totalorder %s31, 1
      %p131 = por %p129, %p130
      %p132 = scmp.ne.s32.totalorder %s123, %s124
      %p133 = scmp.eq.s32.totalorder %s31, 0
      %p134 = por %p132, %p133
      %p135 = scmp.ne.s32.totalorder %s123, %s124
      %p136 = scmp.eq.s32.totalorder %s32, 1
      %p137 = por %p135, %p136
      %p139 = scmp.ne.s32.totalorder %s124, %s138
      %p140 = scmp.eq.s32.totalorder %s32, 0
      %p141 = por %p139, %p140
      %s143 = sadd.s32 %s142, 1
      %p146 = scmp.eq.s32.totalorder %s26, 1
      %p147 = scmp.ne.s32.totalorder %s142, %s144
      %p148 = scmp.eq.s32.totalorder %s26, 0
      %p149 = por %p147, %p148
      %p150 = scmp.ne.s32.totalorder %s142, %s144
      %p151 = scmp.eq.s32.totalorder %s31, 1
      %p152 = por %p150, %p151
      %p153 = scmp.ne.s32.totalorder %s144, %s145
      %p154 = scmp.eq.s32.totalorder %s31, 0
      %p155 = por %p153, %p154
      %p156 = scmp.ne.s32.totalorder %s144, %s145
      %p157 = scmp.eq.s32.totalorder %s32, 1
      %p158 = por %p156, %p157
      %p160 = scmp.ne.s32.totalorder %s145, %s159
      %p161 = scmp.eq.s32.totalorder %s32, 0
      %p162 = por %p160, %p161
      %s164 = sadd.s32 %s163, 1
      %p167 = scmp.eq.s32.totalorder %s26, 1
      %p168 = scmp.ne.s32.totalorder %s163, %s165
      %p169 = scmp.eq.s32.totalorder %s26, 0
      %p170 = por %p168, %p169
      %p171 = scmp.ne.s32.totalorder %s163, %s165
      %p172 = scmp.eq.s32.totalorder %s31, 1
      %p173 = por %p171, %p172
      %p174 = scmp.ne.s32.totalorder %s165, %s166
      %p175 = scmp.eq.s32.totalorder %s31, 0
      %p176 = por %p174, %p175
      %p177 = scmp.ne.s32.totalorder %s165, %s166
      %p178 = scmp.eq.s32.totalorder %s32, 1
      %p179 = por %p177, %p178
      %p181 = scmp.ne.s32.totalorder %s166, %s180
      %p182 = scmp.eq.s32.totalorder %s32, 0
      %p183 = por %p181, %p182
      %s185 = sadd.s32 %s184, 1
      %p188 = scmp.eq.s32.totalorder %s26, 1
      %p189 = scmp.ne.s32.totalorder %s184, %s186
      %p190 = scmp.eq.s32.totalorder %s26, 0
      %p191 = por %p189, %p190
      %p192 = scmp.ne.s32.totalorder %s184, %s186
      %p193 = scmp.eq.s32.totalorder %s31, 1
      %p194 = por %p192, %p193
      %p195 = scmp.ne.s32.totalorder %s186, %s187
      %p196 = scmp.eq.s32.totalorder %s31, 0
      %p197 = por %p195, %p196
      %p198 = scmp.ne.s32.totalorder %s186, %s187
      %p199 = scmp.eq.s32.totalorder %s32, 1
      %p200 = por %p198, %p199
      %p202 = scmp.ne.s32.totalorder %s187, %s201
      %p203 = scmp.eq.s32.totalorder %s32, 0
      %p204 = por %p202, %p203
      %s206 = sadd.s32 %s205, 1
      %p209 = scmp.eq.s32.totalorder %s26, 1
      %p210 = scmp.ne.s32.totalorder %s205, %s207
      %p211 = scmp.eq.s32.totalorder %s26, 0
      %p212 = por %p210, %p211
      %p213 = scmp.ne.s32.totalorder %s205, %s207
      %p214 = scmp.eq.s32.totalorder %s31, 1
      %p215 = por %p213, %p214
      %p216 = scmp.ne.s32.totalorder %s207, %s208
      %p217 = scmp.eq.s32.totalorder %s31, 0
      %p218 = por %p216, %p217
      %p219 = scmp.ne.s32.totalorder %s207, %s208
      %p220 = scmp.eq.s32.totalorder %s32, 1
      %p221 = por %p219, %p220
      %p223 = scmp.ne.s32.totalorder %s208, %s222
      %p224 = scmp.eq.s32.totalorder %s32, 0
      %p225 = por %p223, %p224
      %s226 = ssub.s32 %s33, %s45
      %s227 = ssub.s32 %s34, %s41
      %s228 = sor.u32 %s226, %s227
      %p229 = scmp.eq.s32.totalorder %s228, 0
      %s231 = sadd.s32 %s230, 1
      %s232 = scalar_select %p229, %s230, %s231
      %p235 = pneg %p229
      %p236 = scmp.eq.s32.totalorder %s26, 1
      %p237 = por %p235, %p236
      %p238 = scmp.ne.s32.totalorder %s230, %s233
      %p239 = scmp.eq.s32.totalorder %s26, 0
      %p240 = por %p238, %p239
      %p241 = scmp.ne.s32.totalorder %s230, %s233
      %p242 = scmp.eq.s32.totalorder %s31, 1
      %p243 = por %p241, %p242
      %p244 = scmp.ne.s32.totalorder %s233, %s234
      %p245 = scmp.eq.s32.totalorder %s31, 0
      %p246 = por %p244, %p245
      %p247 = scmp.ne.s32.totalorder %s233, %s234
      %p248 = scmp.eq.s32.totalorder %s32, 1
      %p249 = por %p247, %p248
      %p251 = scmp.ne.s32.totalorder %s234, %s250
      %p252 = scmp.eq.s32.totalorder %s32, 0
      %p253 = por %p251, %p252
      %p254 = scmp.le.s32.totalorder 1, %s26
      %p255 = scmp.lt.s32.totalorder %s26, 3
      %p256 = pnand %p254, %p255
      %p257 = pneg %p256
      // Predicated region
      $region9: #{transformer_forward.15} parent=5 // pred_check
        _
      $region10: #{transformer_forward.15} parent=5 // pred_check_branch
        %259 = sbr.rel (%p256) target = $region12
      $region11: #{transformer_forward.15} parent=5 // pred_region
        %s260 = ssub.s32 %s26, 1
        // Predicated region
        $region13: #{transformer_forward.15} parent=11 // pred_check
          %p261 = pneg %p113
        $region14: #{transformer_forward.15} parent=11 // pred_check_branch
          %263 = sbr.rel (%p261) target = $region16
        $region15: #{transformer_forward.15} parent=11 // pred_region
          %s265 = ssub.s32 256, 256
          %266 = vsyncadd [#allocation7], %s265
          %s267 = sshll.u32 [#allocation8], 4
          %s268 = int_to_ptr.vmem [resolvable:$true] %s267
          %273 = dma.hbm_to_vmem [thread:$0]  %s2, 256, %s268, [#allocation7], 64, 64, 4
        $region16: #{transformer_forward.15} parent=11 // pred_fallthru
          _
        // Predicated region
        $region17: #{transformer_forward.15} parent=11 // pred_check
          %p274 = pneg %p134
        $region18: #{transformer_forward.15} parent=11 // pred_check_branch
          %276 = sbr.rel (%p274) target = $region20
        $region19: #{transformer_forward.15} parent=11 // pred_region
          %s278 = ssub.s32 16, 16
          %279 = vsyncadd [#allocation10], %s278
          %s281 = sshll.u32 [#allocation9], 4
          %s282 = int_to_ptr.vmem [resolvable:$true] %s281
          %284 = dma.hbm_to_vmem [thread:$0]  %s3, 16, %s282, [#allocation10]
        $region20: #{transformer_forward.15} parent=11 // pred_fallthru
          _
        // Predicated region
        $region21: #{transformer_forward.15} parent=11 // pred_check
          %p285 = pneg %p155
        $region22: #{transformer_forward.15} parent=11 // pred_check_branch
          %287 = sbr.rel (%p285) target = $region24
        $region23: #{transformer_forward.15} parent=11 // pred_region
          %s289 = ssub.s32 256, 256
          %290 = vsyncadd [#allocation10], %s289
          %s291 = sshll.u32 [#allocation11], 4
          %s292 = int_to_ptr.vmem [resolvable:$true] %s291
          %297 = dma.hbm_to_vmem [thread:$0]  %s4, 256, %s292, [#allocation10], 64, 64, 4
        $region24: #{transformer_forward.15} parent=11 // pred_fallthru
          _
        // Predicated region
        $region25: #{transformer_forward.15} parent=11 // pred_check
          %p298 = pneg %p176
        $region26: #{transformer_forward.15} parent=11 // pred_check_branch
          %300 = sbr.rel (%p298) target = $region28
        $region27: #{transformer_forward.15} parent=11 // pred_region
          %s302 = ssub.s32 16, 16
          %303 = vsyncadd [#allocation13], %s302
          %s305 = sshll.u32 [#allocation12], 4
          %s306 = int_to_ptr.vmem [resolvable:$true] %s305
          %308 = dma.hbm_to_vmem [thread:$0]  %s5, 16, %s306, [#allocation13]
        $region28: #{transformer_forward.15} parent=11 // pred_fallthru
          _
        // Predicated region
        $region29: #{transformer_forward.15} parent=11 // pred_check
          %p309 = pneg %p197
        $region30: #{transformer_forward.15} parent=11 // pred_check_branch
          %311 = sbr.rel (%p309) target = $region32
        $region31: #{transformer_forward.15} parent=11 // pred_region
          %s313 = ssub.s32 16, 16
          %314 = vsyncadd [#allocation13], %s313
          %s316 = sshll.u32 [#allocation14], 4
          %s317 = int_to_ptr.vmem [resolvable:$true] %s316
          %319 = dma.hbm_to_vmem [thread:$0]  %s6, 16, %s317, [#allocation13]
        $region32: #{transformer_forward.15} parent=11 // pred_fallthru
          _
        // Predicated region
        $region33: #{transformer_forward.15} parent=11 // pred_check
          %p320 = pneg %p218
        $region34: #{transformer_forward.15} parent=11 // pred_check_branch
          %322 = sbr.rel (%p320) target = $region36
        $region35: #{transformer_forward.15} parent=11 // pred_region
          %s324 = ssub.s32 16, 16
          %325 = vsyncadd [#allocation16], %s324
          %s327 = sshll.u32 [#allocation15], 4
          %s328 = int_to_ptr.vmem [resolvable:$true] %s327
          %330 = dma.hbm_to_vmem [thread:$0]  %s7, 16, %s328, [#allocation16]
        $region36: #{transformer_forward.15} parent=11 // pred_fallthru
          _
      $region12: #{transformer_forward.15} parent=5 // pred_fallthru
        _
      %p331 = scmp.lt.s32.totalorder %s26, 2
      // Predicated region
      $region37: #{transformer_forward.15} parent=5 // pred_check
        %p332 = pneg %p331
      $region38: #{transformer_forward.15} parent=5 // pred_check_branch
        %334 = sbr.rel (%p332) target = $region40
      $region39: #{transformer_forward.15} parent=5 // pred_region
        // Predicated region
        $region41: #{transformer_forward.15} parent=39 // pred_check
          %p335 = pneg %p60
        $region42: #{transformer_forward.15} parent=39 // pred_check_branch
          %337 = sbr.rel (%p335) target = $region44
        $region43: #{transformer_forward.15} parent=39 // pred_region
          %s338 = sand.u32 %s50, 1
          %s339 = scalar_lea.sflag [#allocation4], %s338
          %s340 = sand.u32 %s50, 1
          %s341 = smul.addr %s340, 4
          %s342 = scalar_lea.vmem [#allocation3], %s341
          %s344 = ssub.s32 64, 64
          %345 = vsyncadd %s339, %s344
          %s346 = sadd.s32 %s34, %s33
          %s347 = smul.addr %s346, 64
          %s348 = scalar_lea.hbm %s0, %s347
          %s350 = sshll.u32 %s342, 4
          %s351 = int_to_ptr.vmem [resolvable:$true] %s350
          %353 = dma.hbm_to_vmem [thread:$0]  %s348, 64, %s351, %s339
        $region44: #{transformer_forward.15} parent=39 // pred_fallthru
          _
        // Predicated region
        $region45: #{transformer_forward.15} parent=39 // pred_check
          %p354 = pneg %p86
        $region46: #{transformer_forward.15} parent=39 // pred_check_branch
          %356 = sbr.rel (%p354) target = $region48
        $region47: #{transformer_forward.15} parent=39 // pred_region
          %s357 = sand.u32 %s26, 1
          %s358 = scalar_lea.sflag [#allocation7], %s357
          %s359 = sand.u32 %s76, 1
          %s360 = smul.addr %s359, 4
          %s361 = scalar_lea.vmem [#allocation6], %s360
          %s363 = ssub.s32 64, 64
          %364 = vsyncadd %s358, %s363
          %s365 = smul.addr %s33, 64
          %s366 = scalar_lea.hbm %s1, %s365
          %s368 = sshll.u32 %s361, 4
          %s369 = int_to_ptr.vmem [resolvable:$true] %s368
          %371 = dma.hbm_to_vmem [thread:$0]  %s366, 64, %s369, %s358
        $region48: #{transformer_forward.15} parent=39 // pred_fallthru
          _
      $region40: #{transformer_forward.15} parent=5 // pred_fallthru
        _
      %p372 = scmp.le.s32.totalorder 1, %s26
      %p373 = scmp.lt.s32.totalorder %s26, 3
      %p374 = pnand %p372, %p373
      %p375 = pneg %p374
      // Predicated region
      $region49: #{transformer_forward.15} parent=5 // pred_check
        _
      $region50: #{transformer_forward.15} parent=5 // pred_check_branch
        %377 = sbr.rel (%p374) target = $region52
      $region51: #{transformer_forward.15} parent=5 // pred_region
        %s378 = ssub.s32 %s26, 1
        %s379 = sand.u32 %s53, 1
        %s380 = scalar_lea.sflag [#allocation4], %s379
        %s381 = sand.u32 %s53, 1
        %s382 = smul.addr %s381, 4
        %s383 = scalar_lea.vmem [#allocation3], %s382
        // Predicated region
        $region53: #{transformer_forward.15} parent=51 // pred_check
          %p384 = pneg %p66
        $region54: #{transformer_forward.15} parent=51 // pred_check_branch
          %386 = sbr.rel (%p384) target = $region56
        $region55: #{transformer_forward.15} parent=51 // pred_region
          %387 = dma.done %s380, 64
        $region56: #{transformer_forward.15} parent=51 // pred_fallthru
          _
        %s388 = sand.u32 %s31, 1
        %s389 = scalar_lea.sflag [#allocation7], %s388
        %s390 = sand.u32 %s79, 1
        %s391 = smul.addr %s390, 4
        %s392 = scalar_lea.vmem [#allocation6], %s391
        // Predicated region
        $region57: #{transformer_forward.15} parent=51 // pred_check
          %p393 = pneg %p92
        $region58: #{transformer_forward.15} parent=51 // pred_check_branch
          %395 = sbr.rel (%p393) target = $region60
        $region59: #{transformer_forward.15} parent=51 // pred_region
          %396 = dma.done %s389, 64
        $region60: #{transformer_forward.15} parent=51 // pred_fallthru
          _
        // Predicated region
        $region61: #{transformer_forward.15} parent=51 // pred_check
          %p397 = pneg %p113
        $region62: #{transformer_forward.15} parent=51 // pred_check_branch
          %399 = sbr.rel (%p397) target = $region64
        $region63: #{transformer_forward.15} parent=51 // pred_region
          %400 = dma.done [#allocation7], 256
        $region64: #{transformer_forward.15} parent=51 // pred_fallthru
          _
        // Predicated region
        $region65: #{transformer_forward.15} parent=51 // pred_check
          %p401 = pneg %p134
        $region66: #{transformer_forward.15} parent=51 // pred_check_branch
          %403 = sbr.rel (%p401) target = $region68
        $region67: #{transformer_forward.15} parent=51 // pred_region
          %404 = dma.done [#allocation10], 16
        $region68: #{transformer_forward.15} parent=51 // pred_fallthru
          _
        // Predicated region
        $region69: #{transformer_forward.15} parent=51 // pred_check
          %p405 = pneg %p155
        $region70: #{transformer_forward.15} parent=51 // pred_check_branch
          %407 = sbr.rel (%p405) target = $region72
        $region71: #{transformer_forward.15} parent=51 // pred_region
          %408 = dma.done [#allocation10], 256
        $region72: #{transformer_forward.15} parent=51 // pred_fallthru
          _
        // Predicated region
        $region73: #{transformer_forward.15} parent=51 // pred_check
          %p409 = pneg %p176
        $region74: #{transformer_forward.15} parent=51 // pred_check_branch
          %411 = sbr.rel (%p409) target = $region76
        $region75: #{transformer_forward.15} parent=51 // pred_region
          %412 = dma.done [#allocation13], 16
        $region76: #{transformer_forward.15} parent=51 // pred_fallthru
          _
        // Predicated region
        $region77: #{transformer_forward.15} parent=51 // pred_check
          %p413 = pneg %p197
        $region78: #{transformer_forward.15} parent=51 // pred_check_branch
          %415 = sbr.rel (%p413) target = $region80
        $region79: #{transformer_forward.15} parent=51 // pred_region
          %416 = dma.done [#allocation13], 16
        $region80: #{transformer_forward.15} parent=51 // pred_fallthru
          _
        // Predicated region
        $region81: #{transformer_forward.15} parent=51 // pred_check
          %p417 = pneg %p218
        $region82: #{transformer_forward.15} parent=51 // pred_check_branch
          %419 = sbr.rel (%p417) target = $region84
        $region83: #{transformer_forward.15} parent=51 // pred_region
          %420 = dma.done [#allocation16], 16
        $region84: #{transformer_forward.15} parent=51 // pred_fallthru
          _
        %s421 = sand.u32 %s53, 1
        %s422 = scalar_lea.sflag [#allocation4], %s421
        %s423 = sand.u32 %s53, 1
        %s424 = smul.addr %s423, 4
        %s425 = scalar_lea.vmem [#allocation3], %s424
        %p426 = pneg %p66
        %p427 = pneg %p63
        %s428 = sand.u32 %s31, 1
        %s429 = scalar_lea.sflag [#allocation7], %s428
        %s430 = sand.u32 %s79, 1
        %s431 = smul.addr %s430, 4
        %s432 = scalar_lea.vmem [#allocation6], %s431
        %p433 = pneg %p92
        %p434 = pneg %p89
        %p435 = pneg %p113
        %p436 = pneg %p110
        %p437 = pneg %p134
        %p438 = pneg %p131
        %p439 = pneg %p155
        %p440 = pneg %p152
        %p441 = pneg %p176
        %p442 = pneg %p173
        %p443 = pneg %p197
        %p444 = pneg %p194
        %p445 = pneg %p218
        %p446 = pneg %p215
        %p447 = pneg %p246
        %p448 = pneg %p243
        %s449 = sand.u32 %s233, 1
        %s450 = scalar_lea.sflag [#allocation5], %s449
        %s451 = sand.u32 %s233, 1
        %s452 = smul.addr %s451, 4
        %s453 = scalar_lea.vmem [#allocation17], %s452
        %v455 = vld [vmem:[%s383] sm:$0xf]
        %v456 = vunpack.c.l.bf16 %v455
        %v457 = vld [vmem:[%s392] sm:$0xf]
        %v458 = vld [vmem:[#allocation8] sm:$0xf]
        %v459 = vld [vmem:[#allocation8 + $0x4] sm:$0xf]
        %v460 = vld [vmem:[#allocation8 + $0x8] sm:$0xf]
        %v461 = vld [vmem:[#allocation8 + $0xc] sm:$0xf]
        %v462 = vld [vmem:[#allocation9] sm:$0x1]
        %v464 = vlaneseq
        %v465 = vshrl.u32 %v464, 7
        %v466 = vsub.s32 0, %v465
        %v467 = vrot.slane %v462, %v466
        %v473 = vunpack.c.l.b16 %v458
        %v474 = vunpack.c.l.b16 %v459
        %v475 = vunpack.c.l.b16 %v460
        %v476 = vunpack.c.l.b16 %v461
        %v477 = vpack.c.b16 %v474, %v473
        %v478 = vpack.c.b16 %v476, %v475
        %vm481 = vcmask 261120
        %v483 = vsel %vm481, %v457, 0
        %485 = vmatprep.subr.bf16.mxu0 0
        %486 = vmatpush1.bf16.msra.mxu0 %v477
        %487 = vmatprep.subr.bf16.mxu0 0
        %488 = vmatpush1.bf16.msra.mxu0 %v478
        %489 = vmatprep.subr.bf16.mxu0 0
        %490 = vmatpush1.bf16.msra.mxu0 0
        %491 = vmatprep.subr.bf16.mxu0 0
        %492 = vmatpush1.bf16.msra.mxu0 0
        %493 = vmatprep.subr.bf16.mxu0 0
        %494 = vmatpush1.bf16.msra.mxu0 0
        %495 = vmatprep.subr.bf16.mxu0 0
        %496 = vmatpush1.bf16.msra.mxu0 0
        %497 = vmatprep.subr.bf16.mxu0 0
        %498 = vmatpush1.bf16.msra.mxu0 0
        %499 = vmatprep.subr.bf16.mxu0 0
        %500 = vmatpush1.bf16.msra.mxu0 0
        %501 = vmatprep.subr.bf16.mxu0 0
        %502 = vmatpush1.bf16.msra.mxu0 0
        %503 = vmatprep.subr.bf16.mxu0 0
        %504 = vmatpush1.bf16.msra.mxu0 0
        %505 = vmatprep.subr.bf16.mxu0 0
        %506 = vmatpush1.bf16.msra.mxu0 0
        %507 = vmatprep.subr.bf16.mxu0 0
        %508 = vmatpush1.bf16.msra.mxu0 0
        %509 = vmatprep.subr.bf16.mxu0 0
        %510 = vmatpush1.bf16.msra.mxu0 0
        %511 = vmatprep.subr.bf16.mxu0 0
        %512 = vmatpush1.bf16.msra.mxu0 0
        %513 = vmatprep.subr.bf16.mxu0 0
        %514 = vmatpush1.bf16.msra.mxu0 0
        %515 = vmatprep.subr.bf16.mxu0 0
        %516 = vmatpush1.bf16.msra.mxu0 0
        %517 = vmatprep.mubr.bf16.mxu0 0
        %518 = vmatmul.mubr.bf16.gmra.mrb[0].mxu0 %v483
        %v519 = vpop.f32.mrb[0].mxu0
        %v520 = vadd.f32 %v467, %v519
        %v521 = vpop.f32.mrb[0].mxu0
        %v522 = vpop.f32.mrb[0].mxu0
        %v523 = vpop.f32.mrb[0].mxu0
        %524 = vdwg.mxu0
        %v525 = vmul.f32 %v520, 0.35355338
        %v526 = vpack.c.bf16 %v525, %v525
        %v527 = vpack.c.bf16 %v520, %v520
        %s528 = smul.u32 %s36, 8
        %v529 = vlaneseq
        %v530 = vshrl.u32 %v529, 7
        %v531 = vstv %s528
        %v532 = vadd.s32 %v530, %v531
        %v533 = vlaneseq
        %v534 = vand.u32 %v533, 127
        %vm535 = vcmp.ge.s32.totalorder %v532, %v534
        %v536 = vsel %vm535, 0.0, -1e+09
        %538 = vrot.lane.b32.xlu0 %v527, 96
        %v539 = vpop.permute.xlu0 %538
        %vm540 = vcmask 64512
        %v542 = vsel %vm540, %v526, 0
        %v545 = vsel %vm540, %v539, 0
        %547 = vmatprep.subr.bf16.mxu0 0
        %548 = vmatpush1.bf16.xpose.msra.mxu0 %v545
        %549 = vmatprep.subr.bf16.mxu0 0
        %550 = vmatpush1.bf16.xpose.msra.mxu0 0
        %551 = vmatprep.subr.bf16.mxu0 0
        %552 = vmatpush1.bf16.xpose.msra.mxu0 0
        %553 = vmatprep.subr.bf16.mxu0 0
        %554 = vmatpush1.bf16.xpose.msra.mxu0 0
        %555 = vmatprep.subr.bf16.mxu0 0
        %556 = vmatpush1.bf16.xpose.msra.mxu0 0
        %557 = vmatprep.subr.bf16.mxu0 0
        %558 = vmatpush1.bf16.xpose.msra.mxu0 0
        %559 = vmatprep.subr.bf16.mxu0 0
        %560 = vmatpush1.bf16.xpose.msra.mxu0 0
        %561 = vmatprep.subr.bf16.mxu0 0
        %562 = vmatpush1.bf16.xpose.msra.mxu0 0
        %563 = vmatprep.subr.bf16.mxu0 0
        %564 = vmatpush1.bf16.xpose.msra.mxu0 0
        %565 = vmatprep.subr.bf16.mxu0 0
        %566 = vmatpush1.bf16.xpose.msra.mxu0 0
        %567 = vmatprep.subr.bf16.mxu0 0
        %568 = vmatpush1.bf16.xpose.msra.mxu0 0
        %569 = vmatprep.subr.bf16.mxu0 0
        %570 = vmatpush1.bf16.xpose.msra.mxu0 0
        %571 = vmatprep.subr.bf16.mxu0 0
        %572 = vmatpush1.bf16.xpose.msra.mxu0 0
        %573 = vmatprep.subr.bf16.mxu0 0
        %574 = vmatpush1.bf16.xpose.msra.mxu0 0
        %575 = vmatprep.subr.bf16.mxu0 0
        %576 = vmatpush1.bf16.xpose.msra.mxu0 0
        %577 = vmatprep.subr.bf16.mxu0 0
        %578 = vmatpush1.bf16.xpose.msra.mxu0 0
        %579 = vmatprep.mubr.bf16.mxu0 0
        %580 = vmatmul.mubr.bf16.gmra.mrb[0].mxu0 %v542
        %v581 = vpop.f32.mrb[0].mxu0
        %v582 = vadd.f32 %v536, %v581
        %v583 = vpop.f32.mrb[0].mxu0
        %v584 = vpop.f32.mrb[0].mxu0
        %v585 = vpop.f32.mrb[0].mxu0
        %586 = vdwg.mxu0
        %v587 = vsel %vm540, %v582, -inf
        %588 = vmax.xlane.f32.xlu0 %v587
        %v589 = vpop.xlane.xlu0 %588
        %v590 = vsub.f32 %v582, %v589
        %v591 = vmul.f32 %v590, 1.442695
        %v592 = vpow.pop %v591
        %v593 = vsel %vm540, %v592, 0.0
        %594 = vadd.xlane.f32.xlu0 %v593
        %v595 = vpop.xlane.xlu0 %594
        %v596 = vrcp.pop %v595
        %v597 = vmul.f32 %v592, %v596
        %v598 = vpack.c.bf16 %v597, %v597
        %599 = vrot.lane.b32.xlu0 %v527, 64
        %v600 = vpop.permute.xlu0 %599
        %v602 = vsel %vm540, %v598, 0
        %vm604 = vcmask 1043456
        %v606 = vsel %vm604, %v600, 0
        %608 = vmatprep.subr.bf16.mxu0 0
        %609 = vmatpush1.bf16.msra.mxu0 %v606
        %610 = vmatprep.subr.bf16.mxu0 0
        %611 = vmatpush1.bf16.msra.mxu0 0
        %612 = vmatprep.subr.bf16.mxu0 0
        %613 = vmatpush1.bf16.msra.mxu0 0
        %614 = vmatprep.subr.bf16.mxu0 0
        %615 = vmatpush1.bf16.msra.mxu0 0
        %616 = vmatprep.subr.bf16.mxu0 0
        %617 = vmatpush1.bf16.msra.mxu0 0
        %618 = vmatprep.subr.bf16.mxu0 0
        %619 = vmatpush1.bf16.msra.mxu0 0
        %620 = vmatprep.subr.bf16.mxu0 0
        %621 = vmatpush1.bf16.msra.mxu0 0
        %622 = vmatprep.subr.bf16.mxu0 0
        %623 = vmatpush1.bf16.msra.mxu0 0
        %624 = vmatprep.subr.bf16.mxu0 0
        %625 = vmatpush1.bf16.msra.mxu0 0
        %626 = vmatprep.subr.bf16.mxu0 0
        %627 = vmatpush1.bf16.msra.mxu0 0
        %628 = vmatprep.subr.bf16.mxu0 0
        %629 = vmatpush1.bf16.msra.mxu0 0
        %630 = vmatprep.subr.bf16.mxu0 0
        %631 = vmatpush1.bf16.msra.mxu0 0
        %632 = vmatprep.subr.bf16.mxu0 0
        %633 = vmatpush1.bf16.msra.mxu0 0
        %634 = vmatprep.subr.bf16.mxu0 0
        %635 = vmatpush1.bf16.msra.mxu0 0
        %636 = vmatprep.subr.bf16.mxu0 0
        %637 = vmatpush1.bf16.msra.mxu0 0
        %638 = vmatprep.subr.bf16.mxu0 0
        %639 = vmatpush1.bf16.msra.mxu0 0
        %640 = vmatprep.mubr.bf16.mxu0 0
        %641 = vmatmul.mubr.bf16.gmra.mrb[0].mxu0 %v602
        %v642 = vpop.f32.mrb[0].mxu0
        %v643 = vadd.f32 0.0, %v642
        %v644 = vpop.f32.mrb[0].mxu0
        %v645 = vpop.f32.mrb[0].mxu0
        %v646 = vpop.f32.mrb[0].mxu0
        %647 = vdwg.mxu0
        %648 = vst.msk [vmem:[#allocation2] sm:$0xff] %vm540, %v643
        %650 = vrot.lane.b32.xlu0 %v526, 120
        %v651 = vpop.permute.xlu0 %650
        %652 = vrot.lane.b32.xlu0 %v527, 88
        %v653 = vpop.permute.xlu0 %652
        %v655 = vsel %vm540, %v651, 0
        %v658 = vsel %vm540, %v653, 0
        %660 = vmatprep.subr.bf16.mxu0 0
        %661 = vmatpush1.bf16.xpose.msra.mxu0 %v658
        %662 = vmatprep.subr.bf16.mxu0 0
        %663 = vmatpush1.bf16.xpose.msra.mxu0 0
        %664 = vmatprep.subr.bf16.mxu0 0
        %665 = vmatpush1.bf16.xpose.msra.mxu0 0
        %666 = vmatprep.subr.bf16.mxu0 0
        %667 = vmatpush1.bf16.xpose.msra.mxu0 0
        %668 = vmatprep.subr.bf16.mxu0 0
        %669 = vmatpush1.bf16.xpose.msra.mxu0 0
        %670 = vmatprep.subr.bf16.mxu0 0
        %671 = vmatpush1.bf16.xpose.msra.mxu0 0
        %672 = vmatprep.subr.bf16.mxu0 0
        %673 = vmatpush1.bf16.xpose.msra.mxu0 0
        %674 = vmatprep.subr.bf16.mxu0 0
        %675 = vmatpush1.bf16.xpose.msra.mxu0 0
        %676 = vmatprep.subr.bf16.mxu0 0
        %677 = vmatpush1.bf16.xpose.msra.mxu0 0
        %678 = vmatprep.subr.bf16.mxu0 0
        %679 = vmatpush1.bf16.xpose.msra.mxu0 0
        %680 = vmatprep.subr.bf16.mxu0 0
        %681 = vmatpush1.bf16.xpose.msra.mxu0 0
        %682 = vmatprep.subr.bf16.mxu0 0
        %683 = vmatpush1.bf16.xpose.msra.mxu0 0
        %684 = vmatprep.subr.bf16.mxu0 0
        %685 = vmatpush1.bf16.xpose.msra.mxu0 0
        %686 = vmatprep.subr.bf16.mxu0 0
        %687 = vmatpush1.bf16.xpose.msra.mxu0 0
        %688 = vmatprep.subr.bf16.mxu0 0
        %689 = vmatpush1.bf16.xpose.msra.mxu0 0
        %690 = vmatprep.subr.bf16.mxu0 0
        %691 = vmatpush1.bf16.xpose.msra.mxu0 0
        %692 = vmatprep.mubr.bf16.mxu0 0
        %693 = vmatmul.mubr.bf16.gmra.mrb[0].mxu0 %v655
        %v694 = vpop.f32.mrb[0].mxu0
        %v695 = vadd.f32 %v536, %v694
        %v696 = vpop.f32.mrb[0].mxu0
        %v697 = vpop.f32.mrb[0].mxu0
        %v698 = vpop.f32.mrb[0].mxu0
        %699 = vdwg.mxu0
        %v700 = vsel %vm540, %v695, -inf
        %701 = vmax.xlane.f32.xlu0 %v700
        %v702 = vpop.xlane.xlu0 %701
        %v703 = vsub.f32 %v695, %v702
        %v704 = vmul.f32 %v703, 1.442695
        %v705 = vpow.pop %v704
        %v706 = vsel %vm540, %v705, 0.0
        %707 = vadd.xlane.f32.xlu0 %v706
        %v708 = vpop.xlane.xlu0 %707
        %v709 = vrcp.pop %v708
        %v710 = vmul.f32 %v705, %v709
        %v711 = vpack.c.bf16 %v710, %v710
        %712 = vrot.lane.b32.xlu0 %v527, 56
        %v713 = vpop.permute.xlu0 %712
        %v715 = vsel %vm540, %v711, 0
        %v718 = vsel %vm604, %v713, 0
        %720 = vmatprep.subr.bf16.mxu0 0
        %721 = vmatpush1.bf16.msra.mxu0 %v718
        %722 = vmatprep.subr.bf16.mxu0 0
        %723 = vmatpush1.bf16.msra.mxu0 0
        %724 = vmatprep.subr.bf16.mxu0 0
        %725 = vmatpush1.bf16.msra.mxu0 0
        %726 = vmatprep.subr.bf16.mxu0 0
        %727 = vmatpush1.bf16.msra.mxu0 0
        %728 = vmatprep.subr.bf16.mxu0 0
        %729 = vmatpush1.bf16.msra.mxu0 0
        %730 = vmatprep.subr.bf16.mxu0 0
        %731 = vmatpush1.bf16.msra.mxu0 0
        %732 = vmatprep.subr.bf16.mxu0 0
        %733 = vmatpush1.bf16.msra.mxu0 0
        %734 = vmatprep.subr.bf16.mxu0 0
        %735 = vmatpush1.bf16.msra.mxu0 0
        %736 = vmatprep.subr.bf16.mxu0 0
        %737 = vmatpush1.bf16.msra.mxu0 0
        %738 = vmatprep.subr.bf16.mxu0 0
        %739 = vmatpush1.bf16.msra.mxu0 0
        %740 = vmatprep.subr.bf16.mxu0 0
        %741 = vmatpush1.bf16.msra.mxu0 0
        %742 = vmatprep.subr.bf16.mxu0 0
        %743 = vmatpush1.bf16.msra.mxu0 0
        %744 = vmatprep.subr.bf16.mxu0 0
        %745 = vmatpush1.bf16.msra.mxu0 0
        %746 = vmatprep.subr.bf16.mxu0 0
        %747 = vmatpush1.bf16.msra.mxu0 0
        %748 = vmatprep.subr.bf16.mxu0 0
        %749 = vmatpush1.bf16.msra.mxu0 0
        %750 = vmatprep.subr.bf16.mxu0 0
        %751 = vmatpush1.bf16.msra.mxu0 0
        %752 = vmatprep.mubr.bf16.mxu0 0
        %753 = vmatmul.mubr.bf16.gmra.mrb[0].mxu0 %v715
        %v754 = vpop.f32.mrb[0].mxu0
        %v755 = vadd.f32 0.0, %v754
        %v756 = vpop.f32.mrb[0].mxu0
        %v757 = vpop.f32.mrb[0].mxu0
        %v758 = vpop.f32.mrb[0].mxu0
        %759 = vdwg.mxu0
        %761 = vrot.lane.b32.xlu0 %v755, 8
        %v762 = vpop.permute.xlu0 %761
        %vm764 = vcmask 130112
        %765 = vst.msk [vmem:[#allocation2] sm:$0xff] %vm764, %v762
        %766 = vrot.lane.b32.xlu0 %v526, 112
        %v767 = vpop.permute.xlu0 %766
        %768 = vrot.lane.b32.xlu0 %v527, 80
        %v769 = vpop.permute.xlu0 %768
        %v771 = vsel %vm540, %v767, 0
        %v774 = vsel %vm540, %v769, 0
        %776 = vmatprep.subr.bf16.mxu0 0
        %777 = vmatpush1.bf16.xpose.msra.mxu0 %v774
        %778 = vmatprep.subr.bf16.mxu0 0
        %779 = vmatpush1.bf16.xpose.msra.mxu0 0
        %780 = vmatprep.subr.bf16.mxu0 0
        %781 = vmatpush1.bf16.xpose.msra.mxu0 0
        %782 = vmatprep.subr.bf16.mxu0 0
        %783 = vmatpush1.bf16.xpose.msra.mxu0 0
        %784 = vmatprep.subr.bf16.mxu0 0
        %785 = vmatpush1.bf16.xpose.msra.mxu0 0
        %786 = vmatprep.subr.bf16.mxu0 0
        %787 = vmatpush1.bf16.xpose.msra.mxu0 0
        %788 = vmatprep.subr.bf16.mxu0 0
        %789 = vmatpush1.bf16.xpose.msra.mxu0 0
        %790 = vmatprep.subr.bf16.mxu0 0
        %791 = vmatpush1.bf16.xpose.msra.mxu0 0
        %792 = vmatprep.subr.bf16.mxu0 0
        %793 = vmatpush1.bf16.xpose.msra.mxu0 0
        %794 = vmatprep.subr.bf16.mxu0 0
        %795 = vmatpush1.bf16.xpose.msra.mxu0 0
        %796 = vmatprep.subr.bf16.mxu0 0
        %797 = vmatpush1.bf16.xpose.msra.mxu0 0
        %798 = vmatprep.subr.bf16.mxu0 0
        %799 = vmatpush1.bf16.xpose.msra.mxu0 0
        %800 = vmatprep.subr.bf16.mxu0 0
        %801 = vmatpush1.bf16.xpose.msra.mxu0 0
        %802 = vmatprep.subr.bf16.mxu0 0
        %803 = vmatpush1.bf16.xpose.msra.mxu0 0
        %804 = vmatprep.subr.bf16.mxu0 0
        %805 = vmatpush1.bf16.xpose.msra.mxu0 0
        %806 = vmatprep.subr.bf16.mxu0 0
        %807 = vmatpush1.bf16.xpose.msra.mxu0 0
        %808 = vmatprep.mubr.bf16.mxu0 0
        %809 = vmatmul.mubr.bf16.gmra.mrb[0].mxu0 %v771
        %v810 = vpop.f32.mrb[0].mxu0
        %v811 = vadd.f32 %v536, %v810
        %v812 = vpop.f32.mrb[0].mxu0
        %v813 = vpop.f32.mrb[0].mxu0
        %v814 = vpop.f32.mrb[0].mxu0
        %815 = vdwg.mxu0
        %v816 = vsel %vm540, %v811, -inf
        %817 = vmax.xlane.f32.xlu0 %v816
        %v818 = vpop.xlane.xlu0 %817
        %v819 = vsub.f32 %v811, %v818
        %v820 = vmul.f32 %v819, 1.442695
        %v821 = vpow.pop %v820
        %v822 = vsel %vm540, %v821, 0.0
        %823 = vadd.xlane.f32.xlu0 %v822
        %v824 = vpop.xlane.xlu0 %823
        %v825 = vrcp.pop %v824
        %v826 = vmul.f32 %v821, %v825
        %v827 = vpack.c.bf16 %v826, %v826
        %828 = vrot.lane.b32.xlu0 %v527, 48
        %v829 = vpop.permute.xlu0 %828
        %v831 = vsel %vm540, %v827, 0
        %v834 = vsel %vm604, %v829, 0
        %836 = vmatprep.subr.bf16.mxu0 0
        %837 = vmatpush1.bf16.msra.mxu0 %v834
        %838 = vmatprep.subr.bf16.mxu0 0
        %839 = vmatpush1.bf16.msra.mxu0 0
        %840 = vmatprep.subr.bf16.mxu0 0
        %841 = vmatpush1.bf16.msra.mxu0 0
        %842 = vmatprep.subr.bf16.mxu0 0
        %843 = vmatpush1.bf16.msra.mxu0 0
        %844 = vmatprep.subr.bf16.mxu0 0
        %845 = vmatpush1.bf16.msra.mxu0 0
        %846 = vmatprep.subr.bf16.mxu0 0
        %847 = vmatpush1.bf16.msra.mxu0 0
        %848 = vmatprep.subr.bf16.mxu0 0
        %849 = vmatpush1.bf16.msra.mxu0 0
        %850 = vmatprep.subr.bf16.mxu0 0
        %851 = vmatpush1.bf16.msra.mxu0 0
        %852 = vmatprep.subr.bf16.mxu0 0
        %853 = vmatpush1.bf16.msra.mxu0 0
        %854 = vmatprep.subr.bf16.mxu0 0
        %855 = vmatpush1.bf16.msra.mxu0 0
        %856 = vmatprep.subr.bf16.mxu0 0
        %857 = vmatpush1.bf16.msra.mxu0 0
        %858 = vmatprep.subr.bf16.mxu0 0
        %859 = vmatpush1.bf16.msra.mxu0 0
        %860 = vmatprep.subr.bf16.mxu0 0
        %861 = vmatpush1.bf16.msra.mxu0 0
        %862 = vmatprep.subr.bf16.mxu0 0
        %863 = vmatpush1.bf16.msra.mxu0 0
        %864 = vmatprep.subr.bf16.mxu0 0
        %865 = vmatpush1.bf16.msra.mxu0 0
        %866 = vmatprep.subr.bf16.mxu0 0
        %867 = vmatpush1.bf16.msra.mxu0 0
        %868 = vmatprep.mubr.bf16.mxu0 0
        %869 = vmatmul.mubr.bf16.gmra.mrb[0].mxu0 %v831
        %v870 = vpop.f32.mrb[0].mxu0
        %v871 = vadd.f32 0.0, %v870
        %v872 = vpop.f32.mrb[0].mxu0
        %v873 = vpop.f32.mrb[0].mxu0
        %v874 = vpop.f32.mrb[0].mxu0
        %875 = vdwg.mxu0
        %877 = vrot.lane.b32.xlu0 %v871, 16
        %v878 = vpop.permute.xlu0 %877
        %vm880 = vcmask 195712
        %881 = vst.msk [vmem:[#allocation2] sm:$0xff] %vm880, %v878
        %882 = vrot.lane.b32.xlu0 %v526, 104
        %v883 = vpop.permute.xlu0 %882
        %884 = vrot.lane.b32.xlu0 %v527, 72
        %v885 = vpop.permute.xlu0 %884
        %v887 = vsel %vm540, %v883, 0
        %v890 = vsel %vm540, %v885, 0
        %892 = vmatprep.subr.bf16.mxu0 0
        %893 = vmatpush1.bf16.xpose.msra.mxu0 %v890
        %894 = vmatprep.subr.bf16.mxu0 0
        %895 = vmatpush1.bf16.xpose.msra.mxu0 0
        %896 = vmatprep.subr.bf16.mxu0 0
        %897 = vmatpush1.bf16.xpose.msra.mxu0 0
        %898 = vmatprep.subr.bf16.mxu0 0
        %899 = vmatpush1.bf16.xpose.msra.mxu0 0
        %900 = vmatprep.subr.bf16.mxu0 0
        %901 = vmatpush1.bf16.xpose.msra.mxu0 0
        %902 = vmatprep.subr.bf16.mxu0 0
        %903 = vmatpush1.bf16.xpose.msra.mxu0 0
        %904 = vmatprep.subr.bf16.mxu0 0
        %905 = vmatpush1.bf16.xpose.msra.mxu0 0
        %906 = vmatprep.subr.bf16.mxu0 0
        %907 = vmatpush1.bf16.xpose.msra.mxu0 0
        %908 = vmatprep.subr.bf16.mxu0 0
        %909 = vmatpush1.bf16.xpose.msra.mxu0 0
        %910 = vmatprep.subr.bf16.mxu0 0
        %911 = vmatpush1.bf16.xpose.msra.mxu0 0
        %912 = vmatprep.subr.bf16.mxu0 0
        %913 = vmatpush1.bf16.xpose.msra.mxu0 0
        %914 = vmatprep.subr.bf16.mxu0 0
        %915 = vmatpush1.bf16.xpose.msra.mxu0 0
        %916 = vmatprep.subr.bf16.mxu0 0
        %917 = vmatpush1.bf16.xpose.msra.mxu0 0
        %918 = vmatprep.subr.bf16.mxu0 0
        %919 = vmatpush1.bf16.xpose.msra.mxu0 0
        %920 = vmatprep.subr.bf16.mxu0 0
        %921 = vmatpush1.bf16.xpose.msra.mxu0 0
        %922 = vmatprep.subr.bf16.mxu0 0
        %923 = vmatpush1.bf16.xpose.msra.mxu0 0
        %924 = vmatprep.mubr.bf16.mxu0 0
        %925 = vmatmul.mubr.bf16.gmra.mrb[0].mxu0 %v887
        %v926 = vpop.f32.mrb[0].mxu0
        %v927 = vadd.f32 %v536, %v926
        %v928 = vpop.f32.mrb[0].mxu0
        %v929 = vpop.f32.mrb[0].mxu0
        %v930 = vpop.f32.mrb[0].mxu0
        %931 = vdwg.mxu0
        %v932 = vsel %vm540, %v927, -inf
        %933 = vmax.xlane.f32.xlu0 %v932
        %v934 = vpop.xlane.xlu0 %933
        %v935 = vsub.f32 %v927, %v934
        %v936 = vmul.f32 %v935, 1.442695
        %v937 = vpow.pop %v936
        %v938 = vsel %vm540, %v937, 0.0
        %939 = vadd.xlane.f32.xlu0 %v938
        %v940 = vpop.xlane.xlu0 %939
        %v941 = vrcp.pop %v940
        %v942 = vmul.f32 %v937, %v941
        %v943 = vpack.c.bf16 %v942, %v942
        %944 = vrot.lane.b32.xlu0 %v527, 40
        %v945 = vpop.permute.xlu0 %944
        %v947 = vsel %vm540, %v943, 0
        %v950 = vsel %vm604, %v945, 0
        %952 = vmatprep.subr.bf16.mxu0 0
        %953 = vmatpush1.bf16.msra.mxu0 %v950
        %954 = vmatprep.subr.bf16.mxu0 0
        %955 = vmatpush1.bf16.msra.mxu0 0
        %956 = vmatprep.subr.bf16.mxu0 0
        %957 = vmatpush1.bf16.msra.mxu0 0
        %958 = vmatprep.subr.bf16.mxu0 0
        %959 = vmatpush1.bf16.msra.mxu0 0
        %960 = vmatprep.subr.bf16.mxu0 0
        %961 = vmatpush1.bf16.msra.mxu0 0
        %962 = vmatprep.subr.bf16.mxu0 0
        %963 = vmatpush1.bf16.msra.mxu0 0
        %964 = vmatprep.subr.bf16.mxu0 0
        %965 = vmatpush1.bf16.msra.mxu0 0
        %966 = vmatprep.subr.bf16.mxu0 0
        %967 = vmatpush1.bf16.msra.mxu0 0
        %968 = vmatprep.subr.bf16.mxu0 0
        %969 = vmatpush1.bf16.msra.mxu0 0
        %970 = vmatprep.subr.bf16.mxu0 0
        %971 = vmatpush1.bf16.msra.mxu0 0
        %972 = vmatprep.subr.bf16.mxu0 0
        %973 = vmatpush1.bf16.msra.mxu0 0
        %974 = vmatprep.subr.bf16.mxu0 0
        %975 = vmatpush1.bf16.msra.mxu0 0
        %976 = vmatprep.subr.bf16.mxu0 0
        %977 = vmatpush1.bf16.msra.mxu0 0
        %978 = vmatprep.subr.bf16.mxu0 0
        %979 = vmatpush1.bf16.msra.mxu0 0
        %980 = vmatprep.subr.bf16.mxu0 0
        %981 = vmatpush1.bf16.msra.mxu0 0
        %982 = vmatprep.subr.bf16.mxu0 0
        %983 = vmatpush1.bf16.msra.mxu0 0
        %984 = vmatprep.mubr.bf16.mxu0 0
        %985 = vmatmul.mubr.bf16.gmra.mrb[0].mxu0 %v947
        %v986 = vpop.f32.mrb[0].mxu0
        %v987 = vadd.f32 0.0, %v986
        %v988 = vpop.f32.mrb[0].mxu0
        %v989 = vpop.f32.mrb[0].mxu0
        %v990 = vpop.f32.mrb[0].mxu0
        %991 = vdwg.mxu0
        %993 = vrot.lane.b32.xlu0 %v987, 24
        %v994 = vpop.permute.xlu0 %993
        %vm996 = vcmask 261312
        %997 = vst.msk [vmem:[#allocation2] sm:$0xff] %vm996, %v994
        %v998 = vld [vmem:[#allocation2] sm:$0xff]
        %v999 = vpack.c.bf16 %v998, %v998
        %v1000 = vld [vmem:[#allocation11] sm:$0xf]
        %v1001 = vld [vmem:[#allocation11 + $0x4] sm:$0xf]
        %v1002 = vld [vmem:[#allocation11 + $0x8] sm:$0xf]
        %v1003 = vld [vmem:[#allocation11 + $0xc] sm:$0xf]
        %v1004 = vld [vmem:[#allocation12] sm:$0x1]
        %v1006 = vlaneseq
        %v1007 = vshrl.u32 %v1006, 7
        %v1008 = vsub.s32 0, %v1007
        %v1009 = vrot.slane %v1004, %v1008
        %v1015 = vunpack.c.l.b16 %v1000
        %v1016 = vunpack.c.l.b16 %v1001
        %v1017 = vunpack.c.l.b16 %v1002
        %v1018 = vunpack.c.l.b16 %v1003
        %v1019 = vpack.c.b16 %v1016, %v1015
        %v1020 = vpack.c.b16 %v1018, %v1017
        %v1024 = vsel %vm481, %v999, 0
        %1026 = vmatprep.subr.bf16.mxu0 0
        %1027 = vmatpush1.bf16.msra.mxu0 %v1019
        %1028 = vmatprep.subr.bf16.mxu0 0
        %1029 = vmatpush1.bf16.msra.mxu0 %v1020
        %1030 = vmatprep.subr.bf16.mxu0 0
        %1031 = vmatpush1.bf16.msra.mxu0 0
        %1032 = vmatprep.subr.bf16.mxu0 0
        %1033 = vmatpush1.bf16.msra.mxu0 0
        %1034 = vmatprep.subr.bf16.mxu0 0
        %1035 = vmatpush1.bf16.msra.mxu0 0
        %1036 = vmatprep.subr.bf16.mxu0 0
        %1037 = vmatpush1.bf16.msra.mxu0 0
        %1038 = vmatprep.subr.bf16.mxu0 0
        %1039 = vmatpush1.bf16.msra.mxu0 0
        %1040 = vmatprep.subr.bf16.mxu0 0
        %1041 = vmatpush1.bf16.msra.mxu0 0
        %1042 = vmatprep.subr.bf16.mxu0 0
        %1043 = vmatpush1.bf16.msra.mxu0 0
        %1044 = vmatprep.subr.bf16.mxu0 0
        %1045 = vmatpush1.bf16.msra.mxu0 0
        %1046 = vmatprep.subr.bf16.mxu0 0
        %1047 = vmatpush1.bf16.msra.mxu0 0
        %1048 = vmatprep.subr.bf16.mxu0 0
        %1049 = vmatpush1.bf16.msra.mxu0 0
        %1050 = vmatprep.subr.bf16.mxu0 0
        %1051 = vmatpush1.bf16.msra.mxu0 0
        %1052 = vmatprep.subr.bf16.mxu0 0
        %1053 = vmatpush1.bf16.msra.mxu0 0
        %1054 = vmatprep.subr.bf16.mxu0 0
        %1055 = vmatpush1.bf16.msra.mxu0 0
        %1056 = vmatprep.subr.bf16.mxu0 0
        %1057 = vmatpush1.bf16.msra.mxu0 0
        %1058 = vmatprep.mubr.bf16.mxu0 0
        %1059 = vmatmul.mubr.bf16.gmra.mrb[0].mxu0 %v1024
        %v1060 = vpop.f32.mrb[0].mxu0
        %v1061 = vadd.f32 %v1009, %v1060
        %v1062 = vpop.f32.mrb[0].mxu0
        %v1063 = vpop.f32.mrb[0].mxu0
        %v1064 = vpop.f32.mrb[0].mxu0
        %1065 = vdwg.mxu0
        %v1066 = vadd.f32 %v456, %v1061
        %v1067 = vsel %vm481, %v1066, 0.0
        %1068 = vadd.xlane.f32.xlu0 %v1067
        %v1069 = vpop.xlane.xlu0 %1068
        %v1070 = vrcp.pop 32.0
        %v1071 = vmul.f32 %v1069, %v1070
        %v1072 = vsub.f32 %v1066, %v1071
        %v1073 = vmul.f32 %v1072, %v1072
        %v1074 = vsel %vm481, %v1073, 0.0
        %1075 = vadd.xlane.f32.xlu0 %v1074
        %v1076 = vpop.xlane.xlu0 %1075
        %v1077 = vmul.f32 %v1076, %v1070
        %v1078 = vadd.f32 %v1077, 1e-05
        %v1079 = vrsqrt.pop %v1078
        %v1080 = vmul.f32 %v1072, %v1079
        %v1081 = vld [vmem:[#allocation14] sm:$0x1]
        %v1083 = vlaneseq
        %v1084 = vshrl.u32 %v1083, 7
        %v1085 = vsub.s32 0, %v1084
        %v1086 = vrot.slane %v1081, %v1085
        %v1088 = vmul.f32 %v1080, %v1086
        %v1089 = vld [vmem:[#allocation15] sm:$0x1]
        %v1091 = vlaneseq
        %v1092 = vshrl.u32 %v1091, 7
        %v1093 = vsub.s32 0, %v1092
        %v1094 = vrot.slane %v1089, %v1093
        %v1096 = vadd.f32 %v1088, %v1094
        %v1097 = vpack.c.bf16 %v1096, %v1096
        %vm1098 = vcmask 257024
        %1099 = vst.msk [vmem:[%s453] sm:$0xf] %vm1098, %v1097
        %s1100 = sand.u32 %s233, 1
        %s1101 = scalar_lea.sflag [#allocation5], %s1100
        %s1102 = sand.u32 %s233, 1
        %s1103 = smul.addr %s1102, 4
        %s1104 = scalar_lea.vmem [#allocation17], %s1103
        // Predicated region
        $region85: #{transformer_forward.15} parent=51 // pred_check
          %p1105 = pneg %p243
        $region86: #{transformer_forward.15} parent=51 // pred_check_branch
          %1107 = sbr.rel (%p1105) target = $region88
        $region87: #{transformer_forward.15} parent=51 // pred_region
          %s1109 = ssub.s32 64, 64
          %1110 = vsyncadd %s1101, %s1109
          %s1111 = sadd.s32 %s36, %s35
          %s1112 = smul.addr %s1111, 64
          %s1113 = scalar_lea.hbm %s8, %s1112
          %s1115 = sshll.u32 %s1104, 4
          %s1116 = int_to_ptr.vmem [resolvable:$true] %s1115
          %1118 = dma.vmem_to_hbm [thread:$0]  %s1116, 64, %s1113, %s1101
        $region88: #{transformer_forward.15} parent=51 // pred_fallthru
          _
      $region52: #{transformer_forward.15} parent=5 // pred_fallthru
        _
      %p1119 = scmp.le.s32.totalorder 2, %s26
      // Predicated region
      $region89: #{transformer_forward.15} parent=5 // pred_check
        %p1120 = pneg %p1119
      $region90: #{transformer_forward.15} parent=5 // pred_check_branch
        %1122 = sbr.rel (%p1120) target = $region92
      $region91: #{transformer_forward.15} parent=5 // pred_region
        %s1123 = ssub.s32 %s26, 2
        // Predicated region
        $region93: #{transformer_forward.15} parent=91 // pred_check
          %p1124 = pneg %p249
        $region94: #{transformer_forward.15} parent=91 // pred_check_branch
          %1126 = sbr.rel (%p1124) target = $region96
        $region95: #{transformer_forward.15} parent=91 // pred_region
          %s1127 = sand.u32 %s234, 1
          %s1128 = scalar_lea.sflag [#allocation5], %s1127
          %s1129 = sand.u32 %s234, 1
          %s1130 = smul.addr %s1129, 4
          %s1131 = scalar_lea.vmem [#allocation17], %s1130
          %1132 = dma.done %s1128, 64
        $region96: #{transformer_forward.15} parent=91 // pred_fallthru
          _
      $region92: #{transformer_forward.15} parent=5 // pred_fallthru
        _
    $region6: #{transformer_forward.15} parent=1 // loop_footer
      %s30 = sadd.s32 1, %s26
    $region7: #{transformer_forward.15} parent=1 // loop_footer_branch
      %25 = sbr.rel target = $region3
    $region8: #{transformer_forward.15} parent=1 // loop_exit
      _
    %1133 = vsyncpa [#allocation4], 1
    %s1134 = scalar_lea.sflag [#allocation4], 1
    %1135 = vsyncpa %s1134, 1
    %1136 = vsyncpa [#allocation7], 1
    %s1137 = scalar_lea.sflag [#allocation7], 1
    %1138 = vsyncpa %s1137, 1
    %1139 = vsyncpa [#allocation10], 1
    %1140 = vsyncpa [#allocation13], 1
    %1141 = vsyncpa [#allocation16], 1
    %1142 = vsyncpa [#allocation5], 1
    %s1143 = scalar_lea.sflag [#allocation5], 1
    %1144 = vsyncpa %s1143, 1

// kernel: transformer_forward.16
$region0: #{transformer_forward.16}
  #allocation0 [shape = 'u32[]', space=smem, size = 0x4, offset = 0x4, fixed_abs, tag = 'smem constant byte address 0x4 - core index']
  #allocation1 [shape = 'u32[144,128]{1,0:T(1,128)}', space=vmem, size = 0x12000, scoped, tag = 'internal scratch']
  #allocation2 [shape = 'f32[8,32]{1,0:T(8,128)}', space=vmem, size = 0x1000, scoped, tag = 'scratch operand']
  %s0 = inlined_call_operand.hbm [shape: bf16[2,8,32], index: 0, kind: input, shape index: {}]
  %s1 = inlined_call_operand.hbm [shape: bf16[2,8,32], index: 1, kind: input, shape index: {}]
  %s2 = inlined_call_operand.hbm [shape: f32[2,1,8], index: 2, kind: input, shape index: {}]
  %s3 = inlined_call_operand.hbm [shape: bf16[32,96], index: 3, kind: input, shape index: {}]
  %s4 = inlined_call_operand.hbm [shape: f32[1,96], index: 4, kind: input, shape index: {}]
  %s5 = inlined_call_operand.hbm [shape: bf16[32,32], index: 5, kind: input, shape index: {}]
  %s6 = inlined_call_operand.hbm [shape: f32[1,32], index: 6, kind: input, shape index: {}]
  %s7 = inlined_call_operand.hbm [shape: f32[1,32], index: 7, kind: input, shape index: {}]
  %s8 = inlined_call_operand.hbm [shape: f32[1,32], index: 8, kind: input, shape index: {}]
  %s9 = inlined_call_operand.hbm [shape: bf16[2,8,32], index: 9, kind: output, shape index: {}]
  %s10 = sld [smem:[#allocation0]]
  $region105: #{transformer_forward.16} parent=0
    _
  %s12 = ssub.s32 1, %s10
  %s13 = scalar_select 0, %s12, %s10
  $region1: #{transformer_forward.16} parent=0
    #allocation3 [shape = 'u8[4096]{0}', space=vmem, size = 0x1000, scoped, tag = 'input window, operand 0']
    #allocation4 [shape = 's32[2]{0}', space=sflag, size = 0x8, scoped, tag = 'scoped memory for transformer_forward.16']
    #allocation5 [shape = 's32[2]{0}', space=sflag, size = 0x8, scoped, tag = 'scoped memory for transformer_forward.16']
    #allocation6 [shape = 'u8[4096]{0}', space=vmem, size = 0x1000, scoped, tag = 'input window, operand 1']
    #allocation7 [shape = 's32[2]{0}', space=sflag, size = 0x8, scoped, tag = 'scoped memory for transformer_forward.16']
    #allocation8 [shape = 'u8[1024]{0}', space=vmem, size = 0x400, scoped, tag = 'input window, operand 2']
    #allocation9 [shape = 'u8[8192]{0}', space=vmem, size = 0x2000, scoped, tag = 'input window, operand 3, single buffered']
    #allocation10 [shape = 's32[1]{0}', space=sflag, size = 0x4, scoped, tag = 'scoped memory for transformer_forward.16']
    #allocation11 [shape = 'u8[512]{0}', space=vmem, size = 0x400, scoped, tag = 'input window, operand 4, single buffered']
    #allocation12 [shape = 'u8[8192]{0}', space=vmem, size = 0x2000, scoped, tag = 'input window, operand 5, single buffered']
    #allocation13 [shape = 's32[1]{0}', space=sflag, size = 0x4, scoped, tag = 'scoped memory for transformer_forward.16']
    #allocation14 [shape = 'u8[512]{0}', space=vmem, size = 0x400, scoped, tag = 'input window, operand 6, single buffered']
    #allocation15 [shape = 'u8[512]{0}', space=vmem, size = 0x400, scoped, tag = 'input window, operand 7, single buffered']
    #allocation16 [shape = 's32[1]{0}', space=sflag, size = 0x4, scoped, tag = 'scoped memory for transformer_forward.16']
    #allocation17 [shape = 'u8[512]{0}', space=vmem, size = 0x400, scoped, tag = 'input window, operand 8, single buffered']
    #allocation18 [shape = 'u8[4096]{0}', space=vmem, size = 0x1000, scoped, tag = 'output window, operand 0']
    %14 = vsyncpa [#allocation4], 0
    %s15 = scalar_lea.sflag [#allocation4], 1
    %16 = vsyncpa %s15, 0
    %17 = vsyncpa [#allocation7], 0
    %s18 = scalar_lea.sflag [#allocation7], 1
    %19 = vsyncpa %s18, 0
    %20 = vsyncpa [#allocation10], 0
    %21 = vsyncpa [#allocation13], 0
    %22 = vsyncpa [#allocation16], 0
    %23 = vsyncpa [#allocation5], 0
    %s24 = scalar_lea.sflag [#allocation5], 1
    %25 = vsyncpa %s24, 0
    loop: start=0, step=1, limit=4
    $region2: #{transformer_forward.16} parent=1 // loop_pre_header
      _
    $region3: #{transformer_forward.16} parent=1 // loop_header
      %s27 = sphi 0, %s31
      %p28 = scmp.ge.s32.totalorder %s27, 4
      %s34 = sphi 0, %s46
      %s35 = sphi 0, %s42
      %s36 = sphi 0, %s34
      %s37 = sphi 0, %s35
      %s38 = sphi 0, %s36
      %s39 = sphi 0, %s37
      %s51 = sphi 0, %s53
      %s54 = sphi 0, %s51
      %s55 = sphi 0, %s54
      %s71 = sphi 0, %s55
      %s77 = sphi 0, %s79
      %s80 = sphi 0, %s77
      %s81 = sphi 0, %s80
      %s97 = sphi 0, %s81
      %s103 = sphi 0, %s105
      %s106 = sphi 0, %s103
      %s107 = sphi 0, %s106
      %s123 = sphi 0, %s107
      %s127 = sphi 0, %s127
      %s129 = sphi 0, %s127
      %s130 = sphi 0, %s129
      %s144 = sphi 0, %s130
      %s148 = sphi 0, %s148
      %s150 = sphi 0, %s148
      %s151 = sphi 0, %s150
      %s165 = sphi 0, %s151
      %s169 = sphi 0, %s169
      %s171 = sphi 0, %s169
      %s172 = sphi 0, %s171
      %s186 = sphi 0, %s172
      %s190 = sphi 0, %s190
      %s192 = sphi 0, %s190
      %s193 = sphi 0, %s192
      %s207 = sphi 0, %s193
      %s211 = sphi 0, %s211
      %s213 = sphi 0, %s211
      %s214 = sphi 0, %s213
      %s228 = sphi 0, %s214
      %s232 = sphi 0, %s232
      %s234 = sphi 0, %s232
      %s235 = sphi 0, %s234
      %s249 = sphi 0, %s235
      %s257 = sphi 0, %s259
      %s260 = sphi 0, %s257
      %s261 = sphi 0, %s260
      %s277 = sphi 0, %s261
    $region4: #{transformer_forward.16} parent=1 // loop_header_branch
      %30 = sbr.rel (%p28) target = $region8
    $region5: #{transformer_forward.16} parent=1 // loop_body
      %s32 = ssub.s32 %s27, 1
      %s33 = ssub.s32 %s27, 2
      %s40 = sadd.s32 1, %s35
      %p41 = scmp.ge.s32.totalorder %s40, 1
      %s42 = scalar_select %p41, 0, %s40
      %s43 = sadd.s32 1, %s34
      %s44 = scalar_select %p41, %s43, %s34
      %p45 = scmp.ge.s32.totalorder %s44, 2
      %s46 = scalar_select %p45, 0, %s44
      %s47 = ssub.s32 %s34, %s46
      %s48 = ssub.s32 %s35, %s42
      %s49 = sor.u32 %s47, %s48
      %p50 = scmp.eq.s32.totalorder %s49, 0
      %s52 = sadd.s32 %s51, 1
      %s53 = scalar_select %p50, %s51, %s52
      %p56 = pneg %p50
      %p57 = scmp.eq.s32.totalorder %s27, 1
      %p58 = por %p56, %p57
      %p59 = scmp.ne.s32.totalorder %s51, %s54
      %p60 = scmp.eq.s32.totalorder %s27, 0
      %p61 = por %p59, %p60
      %p62 = scmp.ne.s32.totalorder %s51, %s54
      %p63 = scmp.eq.s32.totalorder %s32, 1
      %p64 = por %p62, %p63
      %p65 = scmp.ne.s32.totalorder %s54, %s55
      %p66 = scmp.eq.s32.totalorder %s32, 0
      %p67 = por %p65, %p66
      %p68 = scmp.ne.s32.totalorder %s54, %s55
      %p69 = scmp.eq.s32.totalorder %s33, 1
      %p70 = por %p68, %p69
      %p72 = scmp.ne.s32.totalorder %s55, %s71
      %p73 = scmp.eq.s32.totalorder %s33, 0
      %p74 = por %p72, %p73
      %s75 = ssub.s32 %s34, %s46
      %p76 = scmp.eq.s32.totalorder %s75, 0
      %s78 = sadd.s32 %s77, 1
      %s79 = scalar_select %p76, %s77, %s78
      %p82 = pneg %p76
      %p83 = scmp.eq.s32.totalorder %s27, 1
      %p84 = por %p82, %p83
      %p85 = scmp.ne.s32.totalorder %s77, %s80
      %p86 = scmp.eq.s32.totalorder %s27, 0
      %p87 = por %p85, %p86
      %p88 = scmp.ne.s32.totalorder %s77, %s80
      %p89 = scmp.eq.s32.totalorder %s32, 1
      %p90 = por %p88, %p89
      %p91 = scmp.ne.s32.totalorder %s80, %s81
      %p92 = scmp.eq.s32.totalorder %s32, 0
      %p93 = por %p91, %p92
      %p94 = scmp.ne.s32.totalorder %s80, %s81
      %p95 = scmp.eq.s32.totalorder %s33, 1
      %p96 = por %p94, %p95
      %p98 = scmp.ne.s32.totalorder %s81, %s97
      %p99 = scmp.eq.s32.totalorder %s33, 0
      %p100 = por %p98, %p99
      %s101 = ssub.s32 %s34, %s46
      %p102 = scmp.eq.s32.totalorder %s101, 0
      %s104 = sadd.s32 %s103, 1
      %s105 = scalar_select %p102, %s103, %s104
      %p108 = pneg %p102
      %p109 = scmp.eq.s32.totalorder %s27, 1
      %p110 = por %p108, %p109
      %p111 = scmp.ne.s32.totalorder %s103, %s106
      %p112 = scmp.eq.s32.totalorder %s27, 0
      %p113 = por %p111, %p112
      %p114 = scmp.ne.s32.totalorder %s103, %s106
      %p115 = scmp.eq.s32.totalorder %s32, 1
      %p116 = por %p114, %p115
      %p117 = scmp.ne.s32.totalorder %s106, %s107
      %p118 = scmp.eq.s32.totalorder %s32, 0
      %p119 = por %p117, %p118
      %p120 = scmp.ne.s32.totalorder %s106, %s107
      %p121 = scmp.eq.s32.totalorder %s33, 1
      %p122 = por %p120, %p121
      %p124 = scmp.ne.s32.totalorder %s107, %s123
      %p125 = scmp.eq.s32.totalorder %s33, 0
      %p126 = por %p124, %p125
      %s128 = sadd.s32 %s127, 1
      %p131 = scmp.eq.s32.totalorder %s27, 1
      %p132 = scmp.ne.s32.totalorder %s127, %s129
      %p133 = scmp.eq.s32.totalorder %s27, 0
      %p134 = por %p132, %p133
      %p135 = scmp.ne.s32.totalorder %s127, %s129
      %p136 = scmp.eq.s32.totalorder %s32, 1
      %p137 = por %p135, %p136
      %p138 = scmp.ne.s32.totalorder %s129, %s130
      %p139 = scmp.eq.s32.totalorder %s32, 0
      %p140 = por %p138, %p139
      %p141 = scmp.ne.s32.totalorder %s129, %s130
      %p142 = scmp.eq.s32.totalorder %s33, 1
      %p143 = por %p141, %p142
      %p145 = scmp.ne.s32.totalorder %s130, %s144
      %p146 = scmp.eq.s32.totalorder %s33, 0
      %p147 = por %p145, %p146
      %s149 = sadd.s32 %s148, 1
      %p152 = scmp.eq.s32.totalorder %s27, 1
      %p153 = scmp.ne.s32.totalorder %s148, %s150
      %p154 = scmp.eq.s32.totalorder %s27, 0
      %p155 = por %p153, %p154
      %p156 = scmp.ne.s32.totalorder %s148, %s150
      %p157 = scmp.eq.s32.totalorder %s32, 1
      %p158 = por %p156, %p157
      %p159 = scmp.ne.s32.totalorder %s150, %s151
      %p160 = scmp.eq.s32.totalorder %s32, 0
      %p161 = por %p159, %p160
      %p162 = scmp.ne.s32.totalorder %s150, %s151
      %p163 = scmp.eq.s32.totalorder %s33, 1
      %p164 = por %p162, %p163
      %p166 = scmp.ne.s32.totalorder %s151, %s165
      %p167 = scmp.eq.s32.totalorder %s33, 0
      %p168 = por %p166, %p167
      %s170 = sadd.s32 %s169, 1
      %p173 = scmp.eq.s32.totalorder %s27, 1
      %p174 = scmp.ne.s32.totalorder %s169, %s171
      %p175 = scmp.eq.s32.totalorder %s27, 0
      %p176 = por %p174, %p175
      %p177 = scmp.ne.s32.totalorder %s169, %s171
      %p178 = scmp.eq.s32.totalorder %s32, 1
      %p179 = por %p177, %p178
      %p180 = scmp.ne.s32.totalorder %s171, %s172
      %p181 = scmp.eq.s32.totalorder %s32, 0
      %p182 = por %p180, %p181
      %p183 = scmp.ne.s32.totalorder %s171, %s172
      %p184 = scmp.eq.s32.totalorder %s33, 1
      %p185 = por %p183, %p184
      %p187 = scmp.ne.s32.totalorder %s172, %s186
      %p188 = scmp.eq.s32.totalorder %s33, 0
      %p189 = por %p187, %p188
      %s191 = sadd.s32 %s190, 1
      %p194 = scmp.eq.s32.totalorder %s27, 1
      %p195 = scmp.ne.s32.totalorder %s190, %s192
      %p196 = scmp.eq.s32.totalorder %s27, 0
      %p197 = por %p195, %p196
      %p198 = scmp.ne.s32.totalorder %s190, %s192
      %p199 = scmp.eq.s32.totalorder %s32, 1
      %p200 = por %p198, %p199
      %p201 = scmp.ne.s32.totalorder %s192, %s193
      %p202 = scmp.eq.s32.totalorder %s32, 0
      %p203 = por %p201, %p202
      %p204 = scmp.ne.s32.totalorder %s192, %s193
      %p205 = scmp.eq.s32.totalorder %s33, 1
      %p206 = por %p204, %p205
      %p208 = scmp.ne.s32.totalorder %s193, %s207
      %p209 = scmp.eq.s32.totalorder %s33, 0
      %p210 = por %p208, %p209
      %s212 = sadd.s32 %s211, 1
      %p215 = scmp.eq.s32.totalorder %s27, 1
      %p216 = scmp.ne.s32.totalorder %s211, %s213
      %p217 = scmp.eq.s32.totalorder %s27, 0
      %p218 = por %p216, %p217
      %p219 = scmp.ne.s32.totalorder %s211, %s213
      %p220 = scmp.eq.s32.totalorder %s32, 1
      %p221 = por %p219, %p220
      %p222 = scmp.ne.s32.totalorder %s213, %s214
      %p223 = scmp.eq.s32.totalorder %s32, 0
      %p224 = por %p222, %p223
      %p225 = scmp.ne.s32.totalorder %s213, %s214
      %p226 = scmp.eq.s32.totalorder %s33, 1
      %p227 = por %p225, %p226
      %p229 = scmp.ne.s32.totalorder %s214, %s228
      %p230 = scmp.eq.s32.totalorder %s33, 0
      %p231 = por %p229, %p230
      %s233 = sadd.s32 %s232, 1
      %p236 = scmp.eq.s32.totalorder %s27, 1
      %p237 = scmp.ne.s32.totalorder %s232, %s234
      %p238 = scmp.eq.s32.totalorder %s27, 0
      %p239 = por %p237, %p238
      %p240 = scmp.ne.s32.totalorder %s232, %s234
      %p241 = scmp.eq.s32.totalorder %s32, 1
      %p242 = por %p240, %p241
      %p243 = scmp.ne.s32.totalorder %s234, %s235
      %p244 = scmp.eq.s32.totalorder %s32, 0
      %p245 = por %p243, %p244
      %p246 = scmp.ne.s32.totalorder %s234, %s235
      %p247 = scmp.eq.s32.totalorder %s33, 1
      %p248 = por %p246, %p247
      %p250 = scmp.ne.s32.totalorder %s235, %s249
      %p251 = scmp.eq.s32.totalorder %s33, 0
      %p252 = por %p250, %p251
      %s253 = ssub.s32 %s34, %s46
      %s254 = ssub.s32 %s35, %s42
      %s255 = sor.u32 %s253, %s254
      %p256 = scmp.eq.s32.totalorder %s255, 0
      %s258 = sadd.s32 %s257, 1
      %s259 = scalar_select %p256, %s257, %s258
      %p262 = pneg %p256
      %p263 = scmp.eq.s32.totalorder %s27, 1
      %p264 = por %p262, %p263
      %p265 = scmp.ne.s32.totalorder %s257, %s260
      %p266 = scmp.eq.s32.totalorder %s27, 0
      %p267 = por %p265, %p266
      %p268 = scmp.ne.s32.totalorder %s257, %s260
      %p269 = scmp.eq.s32.totalorder %s32, 1
      %p270 = por %p268, %p269
      %p271 = scmp.ne.s32.totalorder %s260, %s261
      %p272 = scmp.eq.s32.totalorder %s32, 0
      %p273 = por %p271, %p272
      %p274 = scmp.ne.s32.totalorder %s260, %s261
      %p275 = scmp.eq.s32.totalorder %s33, 1
      %p276 = por %p274, %p275
      %p278 = scmp.ne.s32.totalorder %s261, %s277
      %p279 = scmp.eq.s32.totalorder %s33, 0
      %p280 = por %p278, %p279
      %p281 = scmp.le.s32.totalorder 1, %s27
      %p282 = scmp.lt.s32.totalorder %s27, 3
      %p283 = pnand %p281, %p282
      %p284 = pneg %p283
      // Predicated region
      $region9: #{transformer_forward.16} parent=5 // pred_check
        _
      $region10: #{transformer_forward.16} parent=5 // pred_check_branch
        %286 = sbr.rel (%p283) target = $region12
      $region11: #{transformer_forward.16} parent=5 // pred_region
        %s287 = ssub.s32 %s27, 1
        // Predicated region
        $region13: #{transformer_forward.16} parent=11 // pred_check
          %p288 = pneg %p140
        $region14: #{transformer_forward.16} parent=11 // pred_check_branch
          %290 = sbr.rel (%p288) target = $region16
        $region15: #{transformer_forward.16} parent=11 // pred_region
          %s292 = ssub.s32 256, 256
          %293 = vsyncadd [#allocation10], %s292
          %s294 = sshll.u32 [#allocation9], 4
          %s295 = int_to_ptr.vmem [resolvable:$true] %s294
          %300 = dma.hbm_to_vmem [thread:$0]  %s3, 256, %s295, [#allocation10], 64, 64, 4
        $region16: #{transformer_forward.16} parent=11 // pred_fallthru
          _
        // Predicated region
        $region17: #{transformer_forward.16} parent=11 // pred_check
          %p301 = pneg %p161
        $region18: #{transformer_forward.16} parent=11 // pred_check_branch
          %303 = sbr.rel (%p301) target = $region20
        $region19: #{transformer_forward.16} parent=11 // pred_region
          %s305 = ssub.s32 16, 16
          %306 = vsyncadd [#allocation10], %s305
          %s308 = sshll.u32 [#allocation11], 4
          %s309 = int_to_ptr.vmem [resolvable:$true] %s308
          %311 = dma.hbm_to_vmem [thread:$0]  %s4, 16, %s309, [#allocation10]
        $region20: #{transformer_forward.16} parent=11 // pred_fallthru
          _
        // Predicated region
        $region21: #{transformer_forward.16} parent=11 // pred_check
          %p312 = pneg %p182
        $region22: #{transformer_forward.16} parent=11 // pred_check_branch
          %314 = sbr.rel (%p312) target = $region24
        $region23: #{transformer_forward.16} parent=11 // pred_region
          %s316 = ssub.s32 256, 256
          %317 = vsyncadd [#allocation13], %s316
          %s318 = sshll.u32 [#allocation12], 4
          %s319 = int_to_ptr.vmem [resolvable:$true] %s318
          %324 = dma.hbm_to_vmem [thread:$0]  %s5, 256, %s319, [#allocation13], 64, 64, 4
        $region24: #{transformer_forward.16} parent=11 // pred_fallthru
          _
        // Predicated region
        $region25: #{transformer_forward.16} parent=11 // pred_check
          %p325 = pneg %p203
        $region26: #{transformer_forward.16} parent=11 // pred_check_branch
          %327 = sbr.rel (%p325) target = $region28
        $region27: #{transformer_forward.16} parent=11 // pred_region
          %s329 = ssub.s32 16, 16
          %330 = vsyncadd [#allocation13], %s329
          %s332 = sshll.u32 [#allocation14], 4
          %s333 = int_to_ptr.vmem [resolvable:$true] %s332
          %335 = dma.hbm_to_vmem [thread:$0]  %s6, 16, %s333, [#allocation13]
        $region28: #{transformer_forward.16} parent=11 // pred_fallthru
          _
        // Predicated region
        $region29: #{transformer_forward.16} parent=11 // pred_check
          %p336 = pneg %p224
        $region30: #{transformer_forward.16} parent=11 // pred_check_branch
          %338 = sbr.rel (%p336) target = $region32
        $region31: #{transformer_forward.16} parent=11 // pred_region
          %s340 = ssub.s32 16, 16
          %341 = vsyncadd [#allocation16], %s340
          %s343 = sshll.u32 [#allocation15], 4
          %s344 = int_to_ptr.vmem [resolvable:$true] %s343
          %346 = dma.hbm_to_vmem [thread:$0]  %s7, 16, %s344, [#allocation16]
        $region32: #{transformer_forward.16} parent=11 // pred_fallthru
          _
        // Predicated region
        $region33: #{transformer_forward.16} parent=11 // pred_check
          %p347 = pneg %p245
        $region34: #{transformer_forward.16} parent=11 // pred_check_branch
          %349 = sbr.rel (%p347) target = $region36
        $region35: #{transformer_forward.16} parent=11 // pred_region
          %s351 = ssub.s32 16, 16
          %352 = vsyncadd [#allocation16], %s351
          %s354 = sshll.u32 [#allocation17], 4
          %s355 = int_to_ptr.vmem [resolvable:$true] %s354
          %357 = dma.hbm_to_vmem [thread:$0]  %s8, 16, %s355, [#allocation16]
        $region36: #{transformer_forward.16} parent=11 // pred_fallthru
          _
      $region12: #{transformer_forward.16} parent=5 // pred_fallthru
        _
      %p358 = scmp.lt.s32.totalorder %s27, 2
      // Predicated region
      $region37: #{transformer_forward.16} parent=5 // pred_check
        %p359 = pneg %p358
      $region38: #{transformer_forward.16} parent=5 // pred_check_branch
        %361 = sbr.rel (%p359) target = $region40
      $region39: #{transformer_forward.16} parent=5 // pred_region
        // Predicated region
        $region41: #{transformer_forward.16} parent=39 // pred_check
          %p362 = pneg %p61
        $region42: #{transformer_forward.16} parent=39 // pred_check_branch
          %364 = sbr.rel (%p362) target = $region44
        $region43: #{transformer_forward.16} parent=39 // pred_region
          %s365 = sand.u32 %s51, 1
          %s366 = scalar_lea.sflag [#allocation4], %s365
          %s367 = sand.u32 %s51, 1
          %s368 = smul.addr %s367, 4
          %s369 = scalar_lea.vmem [#allocation3], %s368
          %s371 = ssub.s32 64, 64
          %372 = vsyncadd %s366, %s371
          %s373 = sadd.s32 %s35, %s34
          %s374 = smul.addr %s373, 64
          %s375 = scalar_lea.hbm %s0, %s374
          %s377 = sshll.u32 %s369, 4
          %s378 = int_to_ptr.vmem [resolvable:$true] %s377
          %380 = dma.hbm_to_vmem [thread:$0]  %s375, 64, %s378, %s366
        $region44: #{transformer_forward.16} parent=39 // pred_fallthru
          _
        // Predicated region
        $region45: #{transformer_forward.16} parent=39 // pred_check
          %p381 = pneg %p87
        $region46: #{transformer_forward.16} parent=39 // pred_check_branch
          %383 = sbr.rel (%p381) target = $region48
        $region47: #{transformer_forward.16} parent=39 // pred_region
          %s384 = sand.u32 %s27, 1
          %s385 = scalar_lea.sflag [#allocation7], %s384
          %s386 = sand.u32 %s77, 1
          %s387 = smul.addr %s386, 4
          %s388 = scalar_lea.vmem [#allocation6], %s387
          %s390 = ssub.s32 64, 64
          %391 = vsyncadd %s385, %s390
          %s392 = smul.addr %s34, 64
          %s393 = scalar_lea.hbm %s1, %s392
          %s395 = sshll.u32 %s388, 4
          %s396 = int_to_ptr.vmem [resolvable:$true] %s395
          %398 = dma.hbm_to_vmem [thread:$0]  %s393, 64, %s396, %s385
        $region48: #{transformer_forward.16} parent=39 // pred_fallthru
          _
        // Predicated region
        $region49: #{transformer_forward.16} parent=39 // pred_check
          %p399 = pneg %p113
        $region50: #{transformer_forward.16} parent=39 // pred_check_branch
          %401 = sbr.rel (%p399) target = $region52
        $region51: #{transformer_forward.16} parent=39 // pred_region
          %s402 = sand.u32 %s27, 1
          %s403 = scalar_lea.sflag [#allocation7], %s402
          %s404 = sand.u32 %s103, 1
          %s405 = scalar_lea.vmem [#allocation8], %s404
          %s407 = ssub.s32 16, 16
          %408 = vsyncadd %s403, %s407
          %s409 = smul.addr %s34, 16
          %s410 = scalar_lea.hbm %s2, %s409
          %s412 = sshll.u32 %s405, 4
          %s413 = int_to_ptr.vmem [resolvable:$true] %s412
          %415 = dma.hbm_to_vmem [thread:$0]  %s410, 16, %s413, %s403
        $region52: #{transformer_forward.16} parent=39 // pred_fallthru
          _
      $region40: #{transformer_forward.16} parent=5 // pred_fallthru
        _
      %p416 = scmp.le.s32.totalorder 1, %s27
      %p417 = scmp.lt.s32.totalorder %s27, 3
      %p418 = pnand %p416, %p417
      %p419 = pneg %p418
      // Predicated region
      $region53: #{transformer_forward.16} parent=5 // pred_check
        _
      $region54: #{transformer_forward.16} parent=5 // pred_check_branch
        %421 = sbr.rel (%p418) target = $region56
      $region55: #{transformer_forward.16} parent=5 // pred_region
        %s422 = ssub.s32 %s27, 1
        %s423 = sand.u32 %s54, 1
        %s424 = scalar_lea.sflag [#allocation4], %s423
        %s425 = sand.u32 %s54, 1
        %s426 = smul.addr %s425, 4
        %s427 = scalar_lea.vmem [#allocation3], %s426
        // Predicated region
        $region57: #{transformer_forward.16} parent=55 // pred_check
          %p428 = pneg %p67
        $region58: #{transformer_forward.16} parent=55 // pred_check_branch
          %430 = sbr.rel (%p428) target = $region60
        $region59: #{transformer_forward.16} parent=55 // pred_region
          %431 = dma.done %s424, 64
        $region60: #{transformer_forward.16} parent=55 // pred_fallthru
          _
        %s432 = sand.u32 %s32, 1
        %s433 = scalar_lea.sflag [#allocation7], %s432
        %s434 = sand.u32 %s80, 1
        %s435 = smul.addr %s434, 4
        %s436 = scalar_lea.vmem [#allocation6], %s435
        // Predicated region
        $region61: #{transformer_forward.16} parent=55 // pred_check
          %p437 = pneg %p93
        $region62: #{transformer_forward.16} parent=55 // pred_check_branch
          %439 = sbr.rel (%p437) target = $region64
        $region63: #{transformer_forward.16} parent=55 // pred_region
          %440 = dma.done %s433, 64
        $region64: #{transformer_forward.16} parent=55 // pred_fallthru
          _
        %s441 = sand.u32 %s32, 1
        %s442 = scalar_lea.sflag [#allocation7], %s441
        %s443 = sand.u32 %s106, 1
        %s444 = scalar_lea.vmem [#allocation8], %s443
        // Predicated region
        $region65: #{transformer_forward.16} parent=55 // pred_check
          %p445 = pneg %p119
        $region66: #{transformer_forward.16} parent=55 // pred_check_branch
          %447 = sbr.rel (%p445) target = $region68
        $region67: #{transformer_forward.16} parent=55 // pred_region
          %448 = dma.done %s442, 16
        $region68: #{transformer_forward.16} parent=55 // pred_fallthru
          _
        // Predicated region
        $region69: #{transformer_forward.16} parent=55 // pred_check
          %p449 = pneg %p140
        $region70: #{transformer_forward.16} parent=55 // pred_check_branch
          %451 = sbr.rel (%p449) target = $region72
        $region71: #{transformer_forward.16} parent=55 // pred_region
          %452 = dma.done [#allocation10], 256
        $region72: #{transformer_forward.16} parent=55 // pred_fallthru
          _
        // Predicated region
        $region73: #{transformer_forward.16} parent=55 // pred_check
          %p453 = pneg %p161
        $region74: #{transformer_forward.16} parent=55 // pred_check_branch
          %455 = sbr.rel (%p453) target = $region76
        $region75: #{transformer_forward.16} parent=55 // pred_region
          %456 = dma.done [#allocation10], 16
        $region76: #{transformer_forward.16} parent=55 // pred_fallthru
          _
        // Predicated region
        $region77: #{transformer_forward.16} parent=55 // pred_check
          %p457 = pneg %p182
        $region78: #{transformer_forward.16} parent=55 // pred_check_branch
          %459 = sbr.rel (%p457) target = $region80
        $region79: #{transformer_forward.16} parent=55 // pred_region
          %460 = dma.done [#allocation13], 256
        $region80: #{transformer_forward.16} parent=55 // pred_fallthru
          _
        // Predicated region
        $region81: #{transformer_forward.16} parent=55 // pred_check
          %p461 = pneg %p203
        $region82: #{transformer_forward.16} parent=55 // pred_check_branch
          %463 = sbr.rel (%p461) target = $region84
        $region83: #{transformer_forward.16} parent=55 // pred_region
          %464 = dma.done [#allocation13], 16
        $region84: #{transformer_forward.16} parent=55 // pred_fallthru
          _
        // Predicated region
        $region85: #{transformer_forward.16} parent=55 // pred_check
          %p465 = pneg %p224
        $region86: #{transformer_forward.16} parent=55 // pred_check_branch
          %467 = sbr.rel (%p465) target = $region88
        $region87: #{transformer_forward.16} parent=55 // pred_region
          %468 = dma.done [#allocation16], 16
        $region88: #{transformer_forward.16} parent=55 // pred_fallthru
          _
        // Predicated region
        $region89: #{transformer_forward.16} parent=55 // pred_check
          %p469 = pneg %p245
        $region90: #{transformer_forward.16} parent=55 // pred_check_branch
          %471 = sbr.rel (%p469) target = $region92
        $region91: #{transformer_forward.16} parent=55 // pred_region
          %472 = dma.done [#allocation16], 16
        $region92: #{transformer_forward.16} parent=55 // pred_fallthru
          _
        %s473 = sand.u32 %s54, 1
        %s474 = scalar_lea.sflag [#allocation4], %s473
        %s475 = sand.u32 %s54, 1
        %s476 = smul.addr %s475, 4
        %s477 = scalar_lea.vmem [#allocation3], %s476
        %p478 = pneg %p67
        %p479 = pneg %p64
        %s480 = sand.u32 %s32, 1
        %s481 = scalar_lea.sflag [#allocation7], %s480
        %s482 = sand.u32 %s80, 1
        %s483 = smul.addr %s482, 4
        %s484 = scalar_lea.vmem [#allocation6], %s483
        %p485 = pneg %p93
        %p486 = pneg %p90
        %s487 = sand.u32 %s32, 1
        %s488 = scalar_lea.sflag [#allocation7], %s487
        %s489 = sand.u32 %s106, 1
        %s490 = scalar_lea.vmem [#allocation8], %s489
        %p491 = pneg %p119
        %p492 = pneg %p116
        %p493 = pneg %p140
        %p494 = pneg %p137
        %p495 = pneg %p161
        %p496 = pneg %p158
        %p497 = pneg %p182
        %p498 = pneg %p179
        %p499 = pneg %p203
        %p500 = pneg %p200
        %p501 = pneg %p224
        %p502 = pneg %p221
        %p503 = pneg %p245
        %p504 = pneg %p242
        %p505 = pneg %p273
        %p506 = pneg %p270
        %s507 = sand.u32 %s260, 1
        %s508 = scalar_lea.sflag [#allocation5], %s507
        %s509 = sand.u32 %s260, 1
        %s510 = smul.addr %s509, 4
        %s511 = scalar_lea.vmem [#allocation18], %s510
        %v513 = vld [vmem:[%s427] sm:$0xf]
        %v514 = vunpack.c.l.bf16 %v513
        %v515 = vld [vmem:[%s436] sm:$0xf]
        %v516 = vld [vmem:[#allocation9] sm:$0xf]
        %v517 = vld [vmem:[#allocation9 + $0x4] sm:$0xf]
        %v518 = vld [vmem:[#allocation9 + $0x8] sm:$0xf]
        %v519 = vld [vmem:[#allocation9 + $0xc] sm:$0xf]
        %v520 = vld [vmem:[#allocation11] sm:$0x1]
        %v522 = vlaneseq
        %v523 = vshrl.u32 %v522, 7
        %v524 = vsub.s32 0, %v523
        %v525 = vrot.slane %v520, %v524
        %v531 = vunpack.c.l.b16 %v516
        %v532 = vunpack.c.l.b16 %v517
        %v533 = vunpack.c.l.b16 %v518
        %v534 = vunpack.c.l.b16 %v519
        %v535 = vpack.c.b16 %v532, %v531
        %v536 = vpack.c.b16 %v534, %v533
        %vm539 = vcmask 261120
        %v541 = vsel %vm539, %v513, 0
        %543 = vmatprep.subr.bf16.mxu0 0
        %544 = vmatpush1.bf16.msra.mxu0 %v535
        %545 = vmatprep.subr.bf16.mxu0 0
        %546 = vmatpush1.bf16.msra.mxu0 %v536
        %547 = vmatprep.subr.bf16.mxu0 0
        %548 = vmatpush1.bf16.msra.mxu0 0
        %549 = vmatprep.subr.bf16.mxu0 0
        %550 = vmatpush1.bf16.msra.mxu0 0
        %551 = vmatprep.subr.bf16.mxu0 0
        %552 = vmatpush1.bf16.msra.mxu0 0
        %553 = vmatprep.subr.bf16.mxu0 0
        %554 = vmatpush1.bf16.msra.mxu0 0
        %555 = vmatprep.subr.bf16.mxu0 0
        %556 = vmatpush1.bf16.msra.mxu0 0
        %557 = vmatprep.subr.bf16.mxu0 0
        %558 = vmatpush1.bf16.msra.mxu0 0
        %559 = vmatprep.subr.bf16.mxu0 0
        %560 = vmatpush1.bf16.msra.mxu0 0
        %561 = vmatprep.subr.bf16.mxu0 0
        %562 = vmatpush1.bf16.msra.mxu0 0
        %563 = vmatprep.subr.bf16.mxu0 0
        %564 = vmatpush1.bf16.msra.mxu0 0
        %565 = vmatprep.subr.bf16.mxu0 0
        %566 = vmatpush1.bf16.msra.mxu0 0
        %567 = vmatprep.subr.bf16.mxu0 0
        %568 = vmatpush1.bf16.msra.mxu0 0
        %569 = vmatprep.subr.bf16.mxu0 0
        %570 = vmatpush1.bf16.msra.mxu0 0
        %571 = vmatprep.subr.bf16.mxu0 0
        %572 = vmatpush1.bf16.msra.mxu0 0
        %573 = vmatprep.subr.bf16.mxu0 0
        %574 = vmatpush1.bf16.msra.mxu0 0
        %575 = vmatprep.mubr.bf16.mxu0 0
        %576 = vmatmul.mubr.bf16.gmra.mrb[0].mxu0 %v541
        %v577 = vpop.f32.mrb[0].mxu0
        %v578 = vadd.f32 %v525, %v577
        %v579 = vpop.f32.mrb[0].mxu0
        %v580 = vpop.f32.mrb[0].mxu0
        %v581 = vpop.f32.mrb[0].mxu0
        %582 = vdwg.mxu0
        %583 = vrot.lane.b32.xlu0 %v535, 96
        %v584 = vpop.permute.xlu0 %583
        %585 = vrot.lane.b32.xlu0 %v536, 96
        %v586 = vpop.permute.xlu0 %585
        %589 = vrot.lane.b32.xlu0 %v525, 96
        %v590 = vpop.permute.xlu0 %589
        %v593 = vsel %vm539, %v515, 0
        %595 = vmatprep.subr.bf16.mxu0 0
        %596 = vmatpush1.bf16.msra.mxu0 %v584
        %597 = vmatprep.subr.bf16.mxu0 0
        %598 = vmatpush1.bf16.msra.mxu0 %v586
        %599 = vmatprep.subr.bf16.mxu0 0
        %600 = vmatpush1.bf16.msra.mxu0 0
        %601 = vmatprep.subr.bf16.mxu0 0
        %602 = vmatpush1.bf16.msra.mxu0 0
        %603 = vmatprep.subr.bf16.mxu0 0
        %604 = vmatpush1.bf16.msra.mxu0 0
        %605 = vmatprep.subr.bf16.mxu0 0
        %606 = vmatpush1.bf16.msra.mxu0 0
        %607 = vmatprep.subr.bf16.mxu0 0
        %608 = vmatpush1.bf16.msra.mxu0 0
        %609 = vmatprep.subr.bf16.mxu0 0
        %610 = vmatpush1.bf16.msra.mxu0 0
        %611 = vmatprep.subr.bf16.mxu0 0
        %612 = vmatpush1.bf16.msra.mxu0 0
        %613 = vmatprep.subr.bf16.mxu0 0
        %614 = vmatpush1.bf16.msra.mxu0 0
        %615 = vmatprep.subr.bf16.mxu0 0
        %616 = vmatpush1.bf16.msra.mxu0 0
        %617 = vmatprep.subr.bf16.mxu0 0
        %618 = vmatpush1.bf16.msra.mxu0 0
        %619 = vmatprep.subr.bf16.mxu0 0
        %620 = vmatpush1.bf16.msra.mxu0 0
        %621 = vmatprep.subr.bf16.mxu0 0
        %622 = vmatpush1.bf16.msra.mxu0 0
        %623 = vmatprep.subr.bf16.mxu0 0
        %624 = vmatpush1.bf16.msra.mxu0 0
        %625 = vmatprep.subr.bf16.mxu0 0
        %626 = vmatpush1.bf16.msra.mxu0 0
        %627 = vmatprep.mubr.bf16.mxu0 0
        %628 = vmatmul.mubr.bf16.gmra.mrb[0].mxu0 %v593
        %v629 = vpop.f32.mrb[0].mxu0
        %v630 = vadd.f32 %v590, %v629
        %v631 = vpop.f32.mrb[0].mxu0
        %v632 = vpop.f32.mrb[0].mxu0
        %v633 = vpop.f32.mrb[0].mxu0
        %634 = vdwg.mxu0
        %v635 = vmul.f32 %v578, 0.35355338
        %v636 = vpack.c.bf16 %v635, %v635
        %v637 = vpack.c.bf16 %v630, %v630
        %v638 = vld [vmem:[%s444] sm:$0x1]
        %v640 = vlaneseq
        %v641 = vshrl.u32 %v640, 7
        %v642 = vsub.s32 0, %v641
        %v643 = vrot.slane %v638, %v642
        %vm645 = vcmask 64512
        %v647 = vsel %vm645, %v636, 0
        %v650 = vsel %vm645, %v637, 0
        %652 = vmatprep.subr.bf16.mxu0 0
        %653 = vmatpush1.bf16.xpose.msra.mxu0 %v650
        %654 = vmatprep.subr.bf16.mxu0 0
        %655 = vmatpush1.bf16.xpose.msra.mxu0 0
        %656 = vmatprep.subr.bf16.mxu0 0
        %657 = vmatpush1.bf16.xpose.msra.mxu0 0
        %658 = vmatprep.subr.bf16.mxu0 0
        %659 = vmatpush1.bf16.xpose.msra.mxu0 0
        %660 = vmatprep.subr.bf16.mxu0 0
        %661 = vmatpush1.bf16.xpose.msra.mxu0 0
        %662 = vmatprep.subr.bf16.mxu0 0
        %663 = vmatpush1.bf16.xpose.msra.mxu0 0
        %664 = vmatprep.subr.bf16.mxu0 0
        %665 = vmatpush1.bf16.xpose.msra.mxu0 0
        %666 = vmatprep.subr.bf16.mxu0 0
        %667 = vmatpush1.bf16.xpose.msra.mxu0 0
        %668 = vmatprep.subr.bf16.mxu0 0
        %669 = vmatpush1.bf16.xpose.msra.mxu0 0
        %670 = vmatprep.subr.bf16.mxu0 0
        %671 = vmatpush1.bf16.xpose.msra.mxu0 0
        %672 = vmatprep.subr.bf16.mxu0 0
        %673 = vmatpush1.bf16.xpose.msra.mxu0 0
        %674 = vmatprep.subr.bf16.mxu0 0
        %675 = vmatpush1.bf16.xpose.msra.mxu0 0
        %676 = vmatprep.subr.bf16.mxu0 0
        %677 = vmatpush1.bf16.xpose.msra.mxu0 0
        %678 = vmatprep.subr.bf16.mxu0 0
        %679 = vmatpush1.bf16.xpose.msra.mxu0 0
        %680 = vmatprep.subr.bf16.mxu0 0
        %681 = vmatpush1.bf16.xpose.msra.mxu0 0
        %682 = vmatprep.subr.bf16.mxu0 0
        %683 = vmatpush1.bf16.xpose.msra.mxu0 0
        %684 = vmatprep.mubr.bf16.mxu0 0
        %685 = vmatmul.mubr.bf16.gmra.mrb[0].mxu0 %v647
        %v686 = vpop.f32.mrb[0].mxu0
        %v687 = vadd.f32 %v643, %v686
        %v688 = vpop.f32.mrb[0].mxu0
        %v689 = vpop.f32.mrb[0].mxu0
        %v690 = vpop.f32.mrb[0].mxu0
        %691 = vdwg.mxu0
        %v692 = vsel %vm645, %v687, -inf
        %693 = vmax.xlane.f32.xlu0 %v692
        %v694 = vpop.xlane.xlu0 %693
        %v695 = vsub.f32 %v687, %v694
        %v696 = vmul.f32 %v695, 1.442695
        %v697 = vpow.pop %v696
        %v698 = vsel %vm645, %v697, 0.0
        %699 = vadd.xlane.f32.xlu0 %v698
        %v700 = vpop.xlane.xlu0 %699
        %v701 = vrcp.pop %v700
        %v702 = vmul.f32 %v697, %v701
        %v703 = vpack.c.bf16 %v702, %v702
        %705 = vrot.lane.b32.xlu0 %v637, 96
        %v706 = vpop.permute.xlu0 %705
        %v708 = vsel %vm645, %v703, 0
        %vm710 = vcmask 1043456
        %v712 = vsel %vm710, %v706, 0
        %714 = vmatprep.subr.bf16.mxu0 0
        %715 = vmatpush1.bf16.msra.mxu0 %v712
        %716 = vmatprep.subr.bf16.mxu0 0
        %717 = vmatpush1.bf16.msra.mxu0 0
        %718 = vmatprep.subr.bf16.mxu0 0
        %719 = vmatpush1.bf16.msra.mxu0 0
        %720 = vmatprep.subr.bf16.mxu0 0
        %721 = vmatpush1.bf16.msra.mxu0 0
        %722 = vmatprep.subr.bf16.mxu0 0
        %723 = vmatpush1.bf16.msra.mxu0 0
        %724 = vmatprep.subr.bf16.mxu0 0
        %725 = vmatpush1.bf16.msra.mxu0 0
        %726 = vmatprep.subr.bf16.mxu0 0
        %727 = vmatpush1.bf16.msra.mxu0 0
        %728 = vmatprep.subr.bf16.mxu0 0
        %729 = vmatpush1.bf16.msra.mxu0 0
        %730 = vmatprep.subr.bf16.mxu0 0
        %731 = vmatpush1.bf16.msra.mxu0 0
        %732 = vmatprep.subr.bf16.mxu0 0
        %733 = vmatpush1.bf16.msra.mxu0 0
        %734 = vmatprep.subr.bf16.mxu0 0
        %735 = vmatpush1.bf16.msra.mxu0 0
        %736 = vmatprep.subr.bf16.mxu0 0
        %737 = vmatpush1.bf16.msra.mxu0 0
        %738 = vmatprep.subr.bf16.mxu0 0
        %739 = vmatpush1.bf16.msra.mxu0 0
        %740 = vmatprep.subr.bf16.mxu0 0
        %741 = vmatpush1.bf16.msra.mxu0 0
        %742 = vmatprep.subr.bf16.mxu0 0
        %743 = vmatpush1.bf16.msra.mxu0 0
        %744 = vmatprep.subr.bf16.mxu0 0
        %745 = vmatpush1.bf16.msra.mxu0 0
        %746 = vmatprep.mubr.bf16.mxu0 0
        %747 = vmatmul.mubr.bf16.gmra.mrb[0].mxu0 %v708
        %v748 = vpop.f32.mrb[0].mxu0
        %v749 = vadd.f32 0.0, %v748
        %v750 = vpop.f32.mrb[0].mxu0
        %v751 = vpop.f32.mrb[0].mxu0
        %v752 = vpop.f32.mrb[0].mxu0
        %753 = vdwg.mxu0
        %754 = vst.msk [vmem:[#allocation2] sm:$0xff] %vm645, %v749
        %756 = vrot.lane.b32.xlu0 %v636, 120
        %v757 = vpop.permute.xlu0 %756
        %758 = vrot.lane.b32.xlu0 %v637, 120
        %v759 = vpop.permute.xlu0 %758
        %v761 = vsel %vm645, %v757, 0
        %v764 = vsel %vm645, %v759, 0
        %766 = vmatprep.subr.bf16.mxu0 0
        %767 = vmatpush1.bf16.xpose.msra.mxu0 %v764
        %768 = vmatprep.subr.bf16.mxu0 0
        %769 = vmatpush1.bf16.xpose.msra.mxu0 0
        %770 = vmatprep.subr.bf16.mxu0 0
        %771 = vmatpush1.bf16.xpose.msra.mxu0 0
        %772 = vmatprep.subr.bf16.mxu0 0
        %773 = vmatpush1.bf16.xpose.msra.mxu0 0
        %774 = vmatprep.subr.bf16.mxu0 0
        %775 = vmatpush1.bf16.xpose.msra.mxu0 0
        %776 = vmatprep.subr.bf16.mxu0 0
        %777 = vmatpush1.bf16.xpose.msra.mxu0 0
        %778 = vmatprep.subr.bf16.mxu0 0
        %779 = vmatpush1.bf16.xpose.msra.mxu0 0
        %780 = vmatprep.subr.bf16.mxu0 0
        %781 = vmatpush1.bf16.xpose.msra.mxu0 0
        %782 = vmatprep.subr.bf16.mxu0 0
        %783 = vmatpush1.bf16.xpose.msra.mxu0 0
        %784 = vmatprep.subr.bf16.mxu0 0
        %785 = vmatpush1.bf16.xpose.msra.mxu0 0
        %786 = vmatprep.subr.bf16.mxu0 0
        %787 = vmatpush1.bf16.xpose.msra.mxu0 0
        %788 = vmatprep.subr.bf16.mxu0 0
        %789 = vmatpush1.bf16.xpose.msra.mxu0 0
        %790 = vmatprep.subr.bf16.mxu0 0
        %791 = vmatpush1.bf16.xpose.msra.mxu0 0
        %792 = vmatprep.subr.bf16.mxu0 0
        %793 = vmatpush1.bf16.xpose.msra.mxu0 0
        %794 = vmatprep.subr.bf16.mxu0 0
        %795 = vmatpush1.bf16.xpose.msra.mxu0 0
        %796 = vmatprep.subr.bf16.mxu0 0
        %797 = vmatpush1.bf16.xpose.msra.mxu0 0
        %798 = vmatprep.mubr.bf16.mxu0 0
        %799 = vmatmul.mubr.bf16.gmra.mrb[0].mxu0 %v761
        %v800 = vpop.f32.mrb[0].mxu0
        %v801 = vadd.f32 %v643, %v800
        %v802 = vpop.f32.mrb[0].mxu0
        %v803 = vpop.f32.mrb[0].mxu0
        %v804 = vpop.f32.mrb[0].mxu0
        %805 = vdwg.mxu0
        %v806 = vsel %vm645, %v801, -inf
        %807 = vmax.xlane.f32.xlu0 %v806
        %v808 = vpop.xlane.xlu0 %807
        %v809 = vsub.f32 %v801, %v808
        %v810 = vmul.f32 %v809, 1.442695
        %v811 = vpow.pop %v810
        %v812 = vsel %vm645, %v811, 0.0
        %813 = vadd.xlane.f32.xlu0 %v812
        %v814 = vpop.xlane.xlu0 %813
        %v815 = vrcp.pop %v814
        %v816 = vmul.f32 %v811, %v815
        %v817 = vpack.c.bf16 %v816, %v816
        %818 = vrot.lane.b32.xlu0 %v637, 88
        %v819 = vpop.permute.xlu0 %818
        %v821 = vsel %vm645, %v817, 0
        %v824 = vsel %vm710, %v819, 0
        %826 = vmatprep.subr.bf16.mxu0 0
        %827 = vmatpush1.bf16.msra.mxu0 %v824
        %828 = vmatprep.subr.bf16.mxu0 0
        %829 = vmatpush1.bf16.msra.mxu0 0
        %830 = vmatprep.subr.bf16.mxu0 0
        %831 = vmatpush1.bf16.msra.mxu0 0
        %832 = vmatprep.subr.bf16.mxu0 0
        %833 = vmatpush1.bf16.msra.mxu0 0
        %834 = vmatprep.subr.bf16.mxu0 0
        %835 = vmatpush1.bf16.msra.mxu0 0
        %836 = vmatprep.subr.bf16.mxu0 0
        %837 = vmatpush1.bf16.msra.mxu0 0
        %838 = vmatprep.subr.bf16.mxu0 0
        %839 = vmatpush1.bf16.msra.mxu0 0
        %840 = vmatprep.subr.bf16.mxu0 0
        %841 = vmatpush1.bf16.msra.mxu0 0
        %842 = vmatprep.subr.bf16.mxu0 0
        %843 = vmatpush1.bf16.msra.mxu0 0
        %844 = vmatprep.subr.bf16.mxu0 0
        %845 = vmatpush1.bf16.msra.mxu0 0
        %846 = vmatprep.subr.bf16.mxu0 0
        %847 = vmatpush1.bf16.msra.mxu0 0
        %848 = vmatprep.subr.bf16.mxu0 0
        %849 = vmatpush1.bf16.msra.mxu0 0
        %850 = vmatprep.subr.bf16.mxu0 0
        %851 = vmatpush1.bf16.msra.mxu0 0
        %852 = vmatprep.subr.bf16.mxu0 0
        %853 = vmatpush1.bf16.msra.mxu0 0
        %854 = vmatprep.subr.bf16.mxu0 0
        %855 = vmatpush1.bf16.msra.mxu0 0
        %856 = vmatprep.subr.bf16.mxu0 0
        %857 = vmatpush1.bf16.msra.mxu0 0
        %858 = vmatprep.mubr.bf16.mxu0 0
        %859 = vmatmul.mubr.bf16.gmra.mrb[0].mxu0 %v821
        %v860 = vpop.f32.mrb[0].mxu0
        %v861 = vadd.f32 0.0, %v860
        %v862 = vpop.f32.mrb[0].mxu0
        %v863 = vpop.f32.mrb[0].mxu0
        %v864 = vpop.f32.mrb[0].mxu0
        %865 = vdwg.mxu0
        %867 = vrot.lane.b32.xlu0 %v861, 8
        %v868 = vpop.permute.xlu0 %867
        %vm870 = vcmask 130112
        %871 = vst.msk [vmem:[#allocation2] sm:$0xff] %vm870, %v868
        %872 = vrot.lane.b32.xlu0 %v636, 112
        %v873 = vpop.permute.xlu0 %872
        %874 = vrot.lane.b32.xlu0 %v637, 112
        %v875 = vpop.permute.xlu0 %874
        %v877 = vsel %vm645, %v873, 0
        %v880 = vsel %vm645, %v875, 0
        %882 = vmatprep.subr.bf16.mxu0 0
        %883 = vmatpush1.bf16.xpose.msra.mxu0 %v880
        %884 = vmatprep.subr.bf16.mxu0 0
        %885 = vmatpush1.bf16.xpose.msra.mxu0 0
        %886 = vmatprep.subr.bf16.mxu0 0
        %887 = vmatpush1.bf16.xpose.msra.mxu0 0
        %888 = vmatprep.subr.bf16.mxu0 0
        %889 = vmatpush1.bf16.xpose.msra.mxu0 0
        %890 = vmatprep.subr.bf16.mxu0 0
        %891 = vmatpush1.bf16.xpose.msra.mxu0 0
        %892 = vmatprep.subr.bf16.mxu0 0
        %893 = vmatpush1.bf16.xpose.msra.mxu0 0
        %894 = vmatprep.subr.bf16.mxu0 0
        %895 = vmatpush1.bf16.xpose.msra.mxu0 0
        %896 = vmatprep.subr.bf16.mxu0 0
        %897 = vmatpush1.bf16.xpose.msra.mxu0 0
        %898 = vmatprep.subr.bf16.mxu0 0
        %899 = vmatpush1.bf16.xpose.msra.mxu0 0
        %900 = vmatprep.subr.bf16.mxu0 0
        %901 = vmatpush1.bf16.xpose.msra.mxu0 0
        %902 = vmatprep.subr.bf16.mxu0 0
        %903 = vmatpush1.bf16.xpose.msra.mxu0 0
        %904 = vmatprep.subr.bf16.mxu0 0
        %905 = vmatpush1.bf16.xpose.msra.mxu0 0
        %906 = vmatprep.subr.bf16.mxu0 0
        %907 = vmatpush1.bf16.xpose.msra.mxu0 0
        %908 = vmatprep.subr.bf16.mxu0 0
        %909 = vmatpush1.bf16.xpose.msra.mxu0 0
        %910 = vmatprep.subr.bf16.mxu0 0
        %911 = vmatpush1.bf16.xpose.msra.mxu0 0
        %912 = vmatprep.subr.bf16.mxu0 0
        %913 = vmatpush1.bf16.xpose.msra.mxu0 0
        %914 = vmatprep.mubr.bf16.mxu0 0
        %915 = vmatmul.mubr.bf16.gmra.mrb[0].mxu0 %v877
        %v916 = vpop.f32.mrb[0].mxu0
        %v917 = vadd.f32 %v643, %v916
        %v918 = vpop.f32.mrb[0].mxu0
        %v919 = vpop.f32.mrb[0].mxu0
        %v920 = vpop.f32.mrb[0].mxu0
        %921 = vdwg.mxu0
        %v922 = vsel %vm645, %v917, -inf
        %923 = vmax.xlane.f32.xlu0 %v922
        %v924 = vpop.xlane.xlu0 %923
        %v925 = vsub.f32 %v917, %v924
        %v926 = vmul.f32 %v925, 1.442695
        %v927 = vpow.pop %v926
        %v928 = vsel %vm645, %v927, 0.0
        %929 = vadd.xlane.f32.xlu0 %v928
        %v930 = vpop.xlane.xlu0 %929
        %v931 = vrcp.pop %v930
        %v932 = vmul.f32 %v927, %v931
        %v933 = vpack.c.bf16 %v932, %v932
        %934 = vrot.lane.b32.xlu0 %v637, 80
        %v935 = vpop.permute.xlu0 %934
        %v937 = vsel %vm645, %v933, 0
        %v940 = vsel %vm710, %v935, 0
        %942 = vmatprep.subr.bf16.mxu0 0
        %943 = vmatpush1.bf16.msra.mxu0 %v940
        %944 = vmatprep.subr.bf16.mxu0 0
        %945 = vmatpush1.bf16.msra.mxu0 0
        %946 = vmatprep.subr.bf16.mxu0 0
        %947 = vmatpush1.bf16.msra.mxu0 0
        %948 = vmatprep.subr.bf16.mxu0 0
        %949 = vmatpush1.bf16.msra.mxu0 0
        %950 = vmatprep.subr.bf16.mxu0 0
        %951 = vmatpush1.bf16.msra.mxu0 0
        %952 = vmatprep.subr.bf16.mxu0 0
        %953 = vmatpush1.bf16.msra.mxu0 0
        %954 = vmatprep.subr.bf16.mxu0 0
        %955 = vmatpush1.bf16.msra.mxu0 0
        %956 = vmatprep.subr.bf16.mxu0 0
        %957 = vmatpush1.bf16.msra.mxu0 0
        %958 = vmatprep.subr.bf16.mxu0 0
        %959 = vmatpush1.bf16.msra.mxu0 0
        %960 = vmatprep.subr.bf16.mxu0 0
        %961 = vmatpush1.bf16.msra.mxu0 0
        %962 = vmatprep.subr.bf16.mxu0 0
        %963 = vmatpush1.bf16.msra.mxu0 0
        %964 = vmatprep.subr.bf16.mxu0 0
        %965 = vmatpush1.bf16.msra.mxu0 0
        %966 = vmatprep.subr.bf16.mxu0 0
        %967 = vmatpush1.bf16.msra.mxu0 0
        %968 = vmatprep.subr.bf16.mxu0 0
        %969 = vmatpush1.bf16.msra.mxu0 0
        %970 = vmatprep.subr.bf16.mxu0 0
        %971 = vmatpush1.bf16.msra.mxu0 0
        %972 = vmatprep.subr.bf16.mxu0 0
        %973 = vmatpush1.bf16.msra.mxu0 0
        %974 = vmatprep.mubr.bf16.mxu0 0
        %975 = vmatmul.mubr.bf16.gmra.mrb[0].mxu0 %v937
        %v976 = vpop.f32.mrb[0].mxu0
        %v977 = vadd.f32 0.0, %v976
        %v978 = vpop.f32.mrb[0].mxu0
        %v979 = vpop.f32.mrb[0].mxu0
        %v980 = vpop.f32.mrb[0].mxu0
        %981 = vdwg.mxu0
        %983 = vrot.lane.b32.xlu0 %v977, 16
        %v984 = vpop.permute.xlu0 %983
        %vm986 = vcmask 195712
        %987 = vst.msk [vmem:[#allocation2] sm:$0xff] %vm986, %v984
        %988 = vrot.lane.b32.xlu0 %v636, 104
        %v989 = vpop.permute.xlu0 %988
        %990 = vrot.lane.b32.xlu0 %v637, 104
        %v991 = vpop.permute.xlu0 %990
        %v993 = vsel %vm645, %v989, 0
        %v996 = vsel %vm645, %v991, 0
        %998 = vmatprep.subr.bf16.mxu0 0
        %999 = vmatpush1.bf16.xpose.msra.mxu0 %v996
        %1000 = vmatprep.subr.bf16.mxu0 0
        %1001 = vmatpush1.bf16.xpose.msra.mxu0 0
        %1002 = vmatprep.subr.bf16.mxu0 0
        %1003 = vmatpush1.bf16.xpose.msra.mxu0 0
        %1004 = vmatprep.subr.bf16.mxu0 0
        %1005 = vmatpush1.bf16.xpose.msra.mxu0 0
        %1006 = vmatprep.subr.bf16.mxu0 0
        %1007 = vmatpush1.bf16.xpose.msra.mxu0 0
        %1008 = vmatprep.subr.bf16.mxu0 0
        %1009 = vmatpush1.bf16.xpose.msra.mxu0 0
        %1010 = vmatprep.subr.bf16.mxu0 0
        %1011 = vmatpush1.bf16.xpose.msra.mxu0 0
        %1012 = vmatprep.subr.bf16.mxu0 0
        %1013 = vmatpush1.bf16.xpose.msra.mxu0 0
        %1014 = vmatprep.subr.bf16.mxu0 0
        %1015 = vmatpush1.bf16.xpose.msra.mxu0 0
        %1016 = vmatprep.subr.bf16.mxu0 0
        %1017 = vmatpush1.bf16.xpose.msra.mxu0 0
        %1018 = vmatprep.subr.bf16.mxu0 0
        %1019 = vmatpush1.bf16.xpose.msra.mxu0 0
        %1020 = vmatprep.subr.bf16.mxu0 0
        %1021 = vmatpush1.bf16.xpose.msra.mxu0 0
        %1022 = vmatprep.subr.bf16.mxu0 0
        %1023 = vmatpush1.bf16.xpose.msra.mxu0 0
        %1024 = vmatprep.subr.bf16.mxu0 0
        %1025 = vmatpush1.bf16.xpose.msra.mxu0 0
        %1026 = vmatprep.subr.bf16.mxu0 0
        %1027 = vmatpush1.bf16.xpose.msra.mxu0 0
        %1028 = vmatprep.subr.bf16.mxu0 0
        %1029 = vmatpush1.bf16.xpose.msra.mxu0 0
        %1030 = vmatprep.mubr.bf16.mxu0 0
        %1031 = vmatmul.mubr.bf16.gmra.mrb[0].mxu0 %v993
        %v1032 = vpop.f32.mrb[0].mxu0
        %v1033 = vadd.f32 %v643, %v1032
        %v1034 = vpop.f32.mrb[0].mxu0
        %v1035 = vpop.f32.mrb[0].mxu0
        %v1036 = vpop.f32.mrb[0].mxu0
        %1037 = vdwg.mxu0
        %v1038 = vsel %vm645, %v1033, -inf
        %1039 = vmax.xlane.f32.xlu0 %v1038
        %v1040 = vpop.xlane.xlu0 %1039
        %v1041 = vsub.f32 %v1033, %v1040
        %v1042 = vmul.f32 %v1041, 1.442695
        %v1043 = vpow.pop %v1042
        %v1044 = vsel %vm645, %v1043, 0.0
        %1045 = vadd.xlane.f32.xlu0 %v1044
        %v1046 = vpop.xlane.xlu0 %1045
        %v1047 = vrcp.pop %v1046
        %v1048 = vmul.f32 %v1043, %v1047
        %v1049 = vpack.c.bf16 %v1048, %v1048
        %1050 = vrot.lane.b32.xlu0 %v637, 72
        %v1051 = vpop.permute.xlu0 %1050
        %v1053 = vsel %vm645, %v1049, 0
        %v1056 = vsel %vm710, %v1051, 0
        %1058 = vmatprep.subr.bf16.mxu0 0
        %1059 = vmatpush1.bf16.msra.mxu0 %v1056
        %1060 = vmatprep.subr.bf16.mxu0 0
        %1061 = vmatpush1.bf16.msra.mxu0 0
        %1062 = vmatprep.subr.bf16.mxu0 0
        %1063 = vmatpush1.bf16.msra.mxu0 0
        %1064 = vmatprep.subr.bf16.mxu0 0
        %1065 = vmatpush1.bf16.msra.mxu0 0
        %1066 = vmatprep.subr.bf16.mxu0 0
        %1067 = vmatpush1.bf16.msra.mxu0 0
        %1068 = vmatprep.subr.bf16.mxu0 0
        %1069 = vmatpush1.bf16.msra.mxu0 0
        %1070 = vmatprep.subr.bf16.mxu0 0
        %1071 = vmatpush1.bf16.msra.mxu0 0
        %1072 = vmatprep.subr.bf16.mxu0 0
        %1073 = vmatpush1.bf16.msra.mxu0 0
        %1074 = vmatprep.subr.bf16.mxu0 0
        %1075 = vmatpush1.bf16.msra.mxu0 0
        %1076 = vmatprep.subr.bf16.mxu0 0
        %1077 = vmatpush1.bf16.msra.mxu0 0
        %1078 = vmatprep.subr.bf16.mxu0 0
        %1079 = vmatpush1.bf16.msra.mxu0 0
        %1080 = vmatprep.subr.bf16.mxu0 0
        %1081 = vmatpush1.bf16.msra.mxu0 0
        %1082 = vmatprep.subr.bf16.mxu0 0
        %1083 = vmatpush1.bf16.msra.mxu0 0
        %1084 = vmatprep.subr.bf16.mxu0 0
        %1085 = vmatpush1.bf16.msra.mxu0 0
        %1086 = vmatprep.subr.bf16.mxu0 0
        %1087 = vmatpush1.bf16.msra.mxu0 0
        %1088 = vmatprep.subr.bf16.mxu0 0
        %1089 = vmatpush1.bf16.msra.mxu0 0
        %1090 = vmatprep.mubr.bf16.mxu0 0
        %1091 = vmatmul.mubr.bf16.gmra.mrb[0].mxu0 %v1053
        %v1092 = vpop.f32.mrb[0].mxu0
        %v1093 = vadd.f32 0.0, %v1092
        %v1094 = vpop.f32.mrb[0].mxu0
        %v1095 = vpop.f32.mrb[0].mxu0
        %v1096 = vpop.f32.mrb[0].mxu0
        %1097 = vdwg.mxu0
        %1099 = vrot.lane.b32.xlu0 %v1093, 24
        %v1100 = vpop.permute.xlu0 %1099
        %vm1102 = vcmask 261312
        %1103 = vst.msk [vmem:[#allocation2] sm:$0xff] %vm1102, %v1100
        %v1104 = vld [vmem:[#allocation2] sm:$0xff]
        %v1105 = vpack.c.bf16 %v1104, %v1104
        %v1106 = vld [vmem:[#allocation12] sm:$0xf]
        %v1107 = vld [vmem:[#allocation12 + $0x4] sm:$0xf]
        %v1108 = vld [vmem:[#allocation12 + $0x8] sm:$0xf]
        %v1109 = vld [vmem:[#allocation12 + $0xc] sm:$0xf]
        %v1110 = vld [vmem:[#allocation14] sm:$0x1]
        %v1112 = vlaneseq
        %v1113 = vshrl.u32 %v1112, 7
        %v1114 = vsub.s32 0, %v1113
        %v1115 = vrot.slane %v1110, %v1114
        %v1121 = vunpack.c.l.b16 %v1106
        %v1122 = vunpack.c.l.b16 %v1107
        %v1123 = vunpack.c.l.b16 %v1108
        %v1124 = vunpack.c.l.b16 %v1109
        %v1125 = vpack.c.b16 %v1122, %v1121
        %v1126 = vpack.c.b16 %v1124, %v1123
        %v1130 = vsel %vm539, %v1105, 0
        %1132 = vmatprep.subr.bf16.mxu0 0
        %1133 = vmatpush1.bf16.msra.mxu0 %v1125
        %1134 = vmatprep.subr.bf16.mxu0 0
        %1135 = vmatpush1.bf16.msra.mxu0 %v1126
        %1136 = vmatprep.subr.bf16.mxu0 0
        %1137 = vmatpush1.bf16.msra.mxu0 0
        %1138 = vmatprep.subr.bf16.mxu0 0
        %1139 = vmatpush1.bf16.msra.mxu0 0
        %1140 = vmatprep.subr.bf16.mxu0 0
        %1141 = vmatpush1.bf16.msra.mxu0 0
        %1142 = vmatprep.subr.bf16.mxu0 0
        %1143 = vmatpush1.bf16.msra.mxu0 0
        %1144 = vmatprep.subr.bf16.mxu0 0
        %1145 = vmatpush1.bf16.msra.mxu0 0
        %1146 = vmatprep.subr.bf16.mxu0 0
        %1147 = vmatpush1.bf16.msra.mxu0 0
        %1148 = vmatprep.subr.bf16.mxu0 0
        %1149 = vmatpush1.bf16.msra.mxu0 0
        %1150 = vmatprep.subr.bf16.mxu0 0
        %1151 = vmatpush1.bf16.msra.mxu0 0
        %1152 = vmatprep.subr.bf16.mxu0 0
        %1153 = vmatpush1.bf16.msra.mxu0 0
        %1154 = vmatprep.subr.bf16.mxu0 0
        %1155 = vmatpush1.bf16.msra.mxu0 0
        %1156 = vmatprep.subr.bf16.mxu0 0
        %1157 = vmatpush1.bf16.msra.mxu0 0
        %1158 = vmatprep.subr.bf16.mxu0 0
        %1159 = vmatpush1.bf16.msra.mxu0 0
        %1160 = vmatprep.subr.bf16.mxu0 0
        %1161 = vmatpush1.bf16.msra.mxu0 0
        %1162 = vmatprep.subr.bf16.mxu0 0
        %1163 = vmatpush1.bf16.msra.mxu0 0
        %1164 = vmatprep.mubr.bf16.mxu0 0
        %1165 = vmatmul.mubr.bf16.gmra.mrb[0].mxu0 %v1130
        %v1166 = vpop.f32.mrb[0].mxu0
        %v1167 = vadd.f32 %v1115, %v1166
        %v1168 = vpop.f32.mrb[0].mxu0
        %v1169 = vpop.f32.mrb[0].mxu0
        %v1170 = vpop.f32.mrb[0].mxu0
        %1171 = vdwg.mxu0
        %v1172 = vadd.f32 %v514, %v1167
        %v1173 = vsel %vm539, %v1172, 0.0
        %1174 = vadd.xlane.f32.xlu0 %v1173
        %v1175 = vpop.xlane.xlu0 %1174
        %v1176 = vrcp.pop 32.0
        %v1177 = vmul.f32 %v1175, %v1176
        %v1178 = vsub.f32 %v1172, %v1177
        %v1179 = vmul.f32 %v1178, %v1178
        %v1180 = vsel %vm539, %v1179, 0.0
        %1181 = vadd.xlane.f32.xlu0 %v1180
        %v1182 = vpop.xlane.xlu0 %1181
        %v1183 = vmul.f32 %v1182, %v1176
        %v1184 = vadd.f32 %v1183, 1e-05
        %v1185 = vrsqrt.pop %v1184
        %v1186 = vmul.f32 %v1178, %v1185
        %v1187 = vld [vmem:[#allocation15] sm:$0x1]
        %v1189 = vlaneseq
        %v1190 = vshrl.u32 %v1189, 7
        %v1191 = vsub.s32 0, %v1190
        %v1192 = vrot.slane %v1187, %v1191
        %v1194 = vmul.f32 %v1186, %v1192
        %v1195 = vld [vmem:[#allocation17] sm:$0x1]
        %v1197 = vlaneseq
        %v1198 = vshrl.u32 %v1197, 7
        %v1199 = vsub.s32 0, %v1198
        %v1200 = vrot.slane %v1195, %v1199
        %v1202 = vadd.f32 %v1194, %v1200
        %v1203 = vpack.c.bf16 %v1202, %v1202
        %vm1204 = vcmask 257024
        %1205 = vst.msk [vmem:[%s511] sm:$0xf] %vm1204, %v1203
        %s1206 = sand.u32 %s260, 1
        %s1207 = scalar_lea.sflag [#allocation5], %s1206
        %s1208 = sand.u32 %s260, 1
        %s1209 = smul.addr %s1208, 4
        %s1210 = scalar_lea.vmem [#allocation18], %s1209
        // Predicated region
        $region93: #{transformer_forward.16} parent=55 // pred_check
          %p1211 = pneg %p270
        $region94: #{transformer_forward.16} parent=55 // pred_check_branch
          %1213 = sbr.rel (%p1211) target = $region96
        $region95: #{transformer_forward.16} parent=55 // pred_region
          %s1215 = ssub.s32 64, 64
          %1216 = vsyncadd %s1207, %s1215
          %s1217 = sadd.s32 %s37, %s36
          %s1218 = smul.addr %s1217, 64
          %s1219 = scalar_lea.hbm %s9, %s1218
          %s1221 = sshll.u32 %s1210, 4
          %s1222 = int_to_ptr.vmem [resolvable:$true] %s1221
          %1224 = dma.vmem_to_hbm [thread:$0]  %s1222, 64, %s1219, %s1207
        $region96: #{transformer_forward.16} parent=55 // pred_fallthru
          _
      $region56: #{transformer_forward.16} parent=5 // pred_fallthru
        _
      %p1225 = scmp.le.s32.totalorder 2, %s27
      // Predicated region
      $region97: #{transformer_forward.16} parent=5 // pred_check
        %p1226 = pneg %p1225
      $region98: #{transformer_forward.16} parent=5 // pred_check_branch
        %1228 = sbr.rel (%p1226) target = $region100
      $region99: #{transformer_forward.16} parent=5 // pred_region
        %s1229 = ssub.s32 %s27, 2
        // Predicated region
        $region101: #{transformer_forward.16} parent=99 // pred_check
          %p1230 = pneg %p276
        $region102: #{transformer_forward.16} parent=99 // pred_check_branch
          %1232 = sbr.rel (%p1230) target = $region104
        $region103: #{transformer_forward.16} parent=99 // pred_region
          %s1233 = sand.u32 %s261, 1
          %s1234 = scalar_lea.sflag [#allocation5], %s1233
          %s1235 = sand.u32 %s261, 1
          %s1236 = smul.addr %s1235, 4
          %s1237 = scalar_lea.vmem [#allocation18], %s1236
          %1238 = dma.done %s1234, 64
        $region104: #{transformer_forward.16} parent=99 // pred_fallthru
          _
      $region100: #{transformer_forward.16} parent=5 // pred_fallthru
        _
    $region6: #{transformer_forward.16} parent=1 // loop_footer
      %s31 = sadd.s32 1, %s27
    $region7: #{transformer_forward.16} parent=1 // loop_footer_branch
      %26 = sbr.rel target = $region3
    $region8: #{transformer_forward.16} parent=1 // loop_exit
      _
    %1239 = vsyncpa [#allocation4], 1
    %s1240 = scalar_lea.sflag [#allocation4], 1
    %1241 = vsyncpa %s1240, 1
    %1242 = vsyncpa [#allocation7], 1
    %s1243 = scalar_lea.sflag [#allocation7], 1
    %1244 = vsyncpa %s1243, 1
    %1245 = vsyncpa [#allocation10], 1
    %1246 = vsyncpa [#allocation13], 1
    %1247 = vsyncpa [#allocation16], 1
    %1248 = vsyncpa [#allocation5], 1
    %s1249 = scalar_lea.sflag [#allocation5], 1
    %1250 = vsyncpa %s1249, 1

// kernel: transformer_forward.21
$region0: #{transformer_forward.21}
  #allocation0 [shape = 'u32[]', space=smem, size = 0x4, offset = 0x4, fixed_abs, tag = 'smem constant byte address 0x4 - core index']
  #allocation1 [shape = 'u32[144,128]{1,0:T(1,128)}', space=vmem, size = 0x12000, scoped, tag = 'internal scratch']
  %s0 = inlined_call_operand.hbm [shape: bf16[16,32], index: 0, kind: input, shape index: {}]
  %s1 = inlined_call_operand.hbm [shape: bf16[32,32], index: 1, kind: input, shape index: {}]
  %s2 = inlined_call_operand.hbm [shape: f32[1,32], index: 2, kind: input, shape index: {}]
  %s3 = inlined_call_operand.hbm [shape: f32[16,32], index: 3, kind: output, shape index: {}]
  %s4 = sld [smem:[#allocation0]]
  $region34: #{transformer_forward.21} parent=0
    _
  %s6 = ssub.s32 1, %s4
  %s7 = scalar_select 0, %s6, %s4
  $region1: #{transformer_forward.21} parent=0
    #allocation2 [shape = 'u8[4096]{0}', space=vmem, size = 0x1000, scoped, tag = 'input window, operand 0, single buffered']
    #allocation3 [shape = 's32[1]{0}', space=sflag, size = 0x4, scoped, tag = 'scoped memory for transformer_forward.21']
    #allocation4 [shape = 's32[1]{0}', space=sflag, size = 0x4, scoped, tag = 'scoped memory for transformer_forward.21']
    #allocation5 [shape = 'u8[8192]{0}', space=vmem, size = 0x2000, scoped, tag = 'input window, operand 1, single buffered']
    #allocation6 [shape = 's32[1]{0}', space=sflag, size = 0x4, scoped, tag = 'scoped memory for transformer_forward.21']
    #allocation7 [shape = 'u8[512]{0}', space=vmem, size = 0x400, scoped, tag = 'input window, operand 2, single buffered']
    #allocation8 [shape = 'u8[8192]{0}', space=vmem, size = 0x2000, scoped, tag = 'output window, operand 0, single buffered']
    %8 = vsyncpa [#allocation3], 0
    %9 = vsyncpa [#allocation6], 0
    %10 = vsyncpa [#allocation4], 0
    // Predicated region
    $region2: #{transformer_forward.21} parent=1 // pred_check
      _
    $region3: #{transformer_forward.21} parent=1 // pred_check_branch
      %12 = sbr.rel (0) target = $region5
    $region4: #{transformer_forward.21} parent=1 // pred_region
      %s14 = ssub.s32 128, 128
      %15 = vsyncadd [#allocation3], %s14
      %s16 = sshll.u32 [#allocation2], 4
      %s17 = int_to_ptr.vmem [resolvable:$true] %s16
      %22 = dma.hbm_to_vmem [thread:$0]  %s0, 128, %s17, [#allocation3], 64, 64, 4
    $region5: #{transformer_forward.21} parent=1 // pred_fallthru
      _
    // Predicated region
    $region6: #{transformer_forward.21} parent=1 // pred_check
      _
    $region7: #{transformer_forward.21} parent=1 // pred_check_branch
      %24 = sbr.rel (0) target = $region9
    $region8: #{transformer_forward.21} parent=1 // pred_region
      %s26 = ssub.s32 256, 256
      %27 = vsyncadd [#allocation6], %s26
      %s28 = sshll.u32 [#allocation5], 4
      %s29 = int_to_ptr.vmem [resolvable:$true] %s28
      %34 = dma.hbm_to_vmem [thread:$0]  %s1, 256, %s29, [#allocation6], 64, 64, 4
    $region9: #{transformer_forward.21} parent=1 // pred_fallthru
      _
    // Predicated region
    $region10: #{transformer_forward.21} parent=1 // pred_check
      _
    $region11: #{transformer_forward.21} parent=1 // pred_check_branch
      %36 = sbr.rel (0) target = $region13
    $region12: #{transformer_forward.21} parent=1 // pred_region
      %s38 = ssub.s32 16, 16
      %39 = vsyncadd [#allocation6], %s38
      %s41 = sshll.u32 [#allocation7], 4
      %s42 = int_to_ptr.vmem [resolvable:$true] %s41
      %44 = dma.hbm_to_vmem [thread:$0]  %s2, 16, %s42, [#allocation6]
    $region13: #{transformer_forward.21} parent=1 // pred_fallthru
      _
    // Predicated region
    $region14: #{transformer_forward.21} parent=1 // pred_check
      _
    $region15: #{transformer_forward.21} parent=1 // pred_check_branch
      %46 = sbr.rel (0) target = $region17
    $region16: #{transformer_forward.21} parent=1 // pred_region
      %47 = dma.done [#allocation3], 128
    $region17: #{transformer_forward.21} parent=1 // pred_fallthru
      _
    // Predicated region
    $region18: #{transformer_forward.21} parent=1 // pred_check
      _
    $region19: #{transformer_forward.21} parent=1 // pred_check_branch
      %49 = sbr.rel (0) target = $region21
    $region20: #{transformer_forward.21} parent=1 // pred_region
      %50 = dma.done [#allocation6], 256
    $region21: #{transformer_forward.21} parent=1 // pred_fallthru
      _
    // Predicated region
    $region22: #{transformer_forward.21} parent=1 // pred_check
      _
    $region23: #{transformer_forward.21} parent=1 // pred_check_branch
      %52 = sbr.rel (0) target = $region25
    $region24: #{transformer_forward.21} parent=1 // pred_region
      %53 = dma.done [#allocation6], 16
    $region25: #{transformer_forward.21} parent=1 // pred_fallthru
      _
    %v55 = vld [vmem:[#allocation2] sm:$0xf]
    %v56 = vld [vmem:[#allocation2 + $0x4] sm:$0xf]
    %v57 = vld [vmem:[#allocation5] sm:$0xf]
    %v58 = vld [vmem:[#allocation5 + $0x4] sm:$0xf]
    %v59 = vld [vmem:[#allocation5 + $0x8] sm:$0xf]
    %v60 = vld [vmem:[#allocation5 + $0xc] sm:$0xf]
    %v61 = vld [vmem:[#allocation7] sm:$0x1]
    %v63 = vlaneseq
    %v64 = vshrl.u32 %v63, 7
    %v65 = vsub.s32 0, %v64
    %v66 = vrot.slane %v61, %v65
    %v70 = vunpack.c.l.b16 %v55
    %v71 = vunpack.c.l.b16 %v56
    %v72 = vpack.c.b16 %v71, %v70
    %v77 = vunpack.c.l.b16 %v57
    %v78 = vunpack.c.l.b16 %v58
    %v79 = vunpack.c.l.b16 %v59
    %v80 = vunpack.c.l.b16 %v60
    %v81 = vpack.c.b16 %v78, %v77
    %v82 = vpack.c.b16 %v80, %v79
    %vm85 = vcmask 261120
    %v87 = vsel %vm85, %v72, 0
    %89 = vmatprep.subr.bf16.mxu0 0
    %90 = vmatpush1.bf16.msra.mxu0 %v81
    %91 = vmatprep.subr.bf16.mxu0 0
    %92 = vmatpush1.bf16.msra.mxu0 %v82
    %93 = vmatprep.subr.bf16.mxu0 0
    %94 = vmatpush1.bf16.msra.mxu0 0
    %95 = vmatprep.subr.bf16.mxu0 0
    %96 = vmatpush1.bf16.msra.mxu0 0
    %97 = vmatprep.subr.bf16.mxu0 0
    %98 = vmatpush1.bf16.msra.mxu0 0
    %99 = vmatprep.subr.bf16.mxu0 0
    %100 = vmatpush1.bf16.msra.mxu0 0
    %101 = vmatprep.subr.bf16.mxu0 0
    %102 = vmatpush1.bf16.msra.mxu0 0
    %103 = vmatprep.subr.bf16.mxu0 0
    %104 = vmatpush1.bf16.msra.mxu0 0
    %105 = vmatprep.subr.bf16.mxu0 0
    %106 = vmatpush1.bf16.msra.mxu0 0
    %107 = vmatprep.subr.bf16.mxu0 0
    %108 = vmatpush1.bf16.msra.mxu0 0
    %109 = vmatprep.subr.bf16.mxu0 0
    %110 = vmatpush1.bf16.msra.mxu0 0
    %111 = vmatprep.subr.bf16.mxu0 0
    %112 = vmatpush1.bf16.msra.mxu0 0
    %113 = vmatprep.subr.bf16.mxu0 0
    %114 = vmatpush1.bf16.msra.mxu0 0
    %115 = vmatprep.subr.bf16.mxu0 0
    %116 = vmatpush1.bf16.msra.mxu0 0
    %117 = vmatprep.subr.bf16.mxu0 0
    %118 = vmatpush1.bf16.msra.mxu0 0
    %119 = vmatprep.subr.bf16.mxu0 0
    %120 = vmatpush1.bf16.msra.mxu0 0
    %121 = vmatprep.mubr.bf16.mxu0 0
    %122 = vmatmul.mubr.bf16.gmra.mrb[0].mxu0 %v87
    %v123 = vpop.f32.mrb[0].mxu0
    %v124 = vadd.f32 %v66, %v123
    %v125 = vpop.f32.mrb[0].mxu0
    %v126 = vpop.f32.mrb[0].mxu0
    %v127 = vadd.f32 %v66, %v126
    %v128 = vpop.f32.mrb[0].mxu0
    %129 = vdwg.mxu0
    %130 = vst.msk [vmem:[#allocation8] sm:$0xff] %vm85, %v124
    %131 = vst.msk [vmem:[#allocation8 + $0x8] sm:$0xff] %vm85, %v127
    // Predicated region
    $region26: #{transformer_forward.21} parent=1 // pred_check
      _
    $region27: #{transformer_forward.21} parent=1 // pred_check_branch
      %133 = sbr.rel (0) target = $region29
    $region28: #{transformer_forward.21} parent=1 // pred_region
      %s135 = ssub.s32 256, 256
      %136 = vsyncadd [#allocation4], %s135
      %s137 = sshll.u32 [#allocation8], 4
      %s138 = int_to_ptr.vmem [resolvable:$true] %s137
      %143 = dma.vmem_to_hbm [thread:$0]  %s138, 256, %s3, [#allocation4], 128, 128, 8
    $region29: #{transformer_forward.21} parent=1 // pred_fallthru
      _
    // Predicated region
    $region30: #{transformer_forward.21} parent=1 // pred_check
      _
    $region31: #{transformer_forward.21} parent=1 // pred_check_branch
      %145 = sbr.rel (0) target = $region33
    $region32: #{transformer_forward.21} parent=1 // pred_region
      %146 = dma.done [#allocation4], 256
    $region33: #{transformer_forward.21} parent=1 // pred_fallthru
      _
    %147 = vsyncpa [#allocation3], 1
    %148 = vsyncpa [#allocation6], 1
    %149 = vsyncpa [#allocation4], 1

</llo_original>
